<compile_context>
chip_gen: v7x
topology: tpu7x:2x2x1
jax: 0.10.0
libtpu: 0.0.40
codegen_flags: <defaults>
</compile_context>

<pallas_src>
import functools

import jax
import jax.numpy as jnp
from jax.experimental import pallas as pl
from jax.experimental.pallas import tpu as pltpu


def _tfblock_kernel(H, W, Cin, C,
                    col1_ref, w1_ref, w2_ref, w34_ref, bn_ref, mask_ref,
                    misc_ref, out_ref, pool_ref):
    """Per-batch-element TFBlock forward.

    Ref shapes (per grid step):
      col1_ref : (1, H*W, 9*Cin)  conv1 im2col slab (built in the wrapper),
                                  columns ordered (dy, dx, cin)
      w1_ref   : (9*Cin, C)       conv1 weights, rows ordered (dy, dx, cin)
      w2_ref   : (9*C, C)         conv2 weights, rows ordered (dy, dx, c)
      w34_ref  : (C, 2)           conv3 | conv4 (1x1 -> 1 ch) weights
      bn_ref   : (8, C)           [bn1_s, bn1_b, bn2_s, bn2_b,
                                   a1*bna_s, a2*bnb_s, a1*bna_b + a2*bnb_b, 0]
      mask_ref : (H*W, 9)         border-validity mask per conv2 tap
      misc_ref : (5,)  SMEM       [bnx_s, bnx_b, bny_s, bny_b, softmax(alpha)[0]]
      out_ref  : (1, (H//2)*(W//2), C)
      pool_ref : ((H//2)*W, C) f32 scratch (even-row selection staging)
    """
    f32 = jnp.float32
    leaky = lambda v: jnp.maximum(v, 0.2 * v)          # LeakyReLU(0.2)
    HW = H * W
    H2, W2 = H // 2, W // 2
    cdt = w1_ref.dtype                                 # matmul operand dtype

    # ---- conv1 (3x3, pad=1) -> LeakyReLU -> bn1 ---------------------------
    # Single (HW, 9*Cin) @ (9*Cin, C) MXU matmul on the wrapper-built slab.
    h1 = jnp.dot(col1_ref[0], w1_ref[...], preferred_element_type=f32)   # (HW, C)
    x1 = leaky(h1) * bn_ref[0:1, :] + bn_ref[1:2, :]                     # (HW, C) f32

    # ---- conv2 (3x3, pad=1) -> LeakyReLU -> bn2 ---------------------------
    # Tap (dy, dx) at output row r = h*W + w needs x1[(h+dy-1)*W + (w+dx-1)],
    # i.e. a cyclic sublane roll of the flat x1 by (1-dy)*W + (1-dx); every
    # wrapped / cross-row element is exactly an out-of-range (zero-pad) source
    # and is killed by the precomputed validity mask.
    acc = jnp.zeros((HW, C), f32)
    for dy in range(3):
        for dx in range(3):
            t = dy * 3 + dx
            shift = ((1 - dy) * W + (1 - dx)) % HW
            v = x1 if shift == 0 else pltpu.roll(x1, shift=shift, axis=0)
            if not (dy == 1 and dx == 1):                 # center tap needs no mask
                v = v * mask_ref[:, t:t + 1]
            acc = acc + jnp.dot(v.astype(cdt), w2_ref[t * C:(t + 1) * C, :],
                                preferred_element_type=f32)
    x2 = leaky(acc) * bn_ref[2:3, :] + bn_ref[3:4, :]                    # (HW, C) f32

    # ---- conv3 & conv4 fused into one (HW, C) @ (C, 2) matmul -------------
    yz = leaky(jnp.dot(x2, w34_ref[...], preferred_element_type=f32))    # (HW, 2)
    yz3 = yz.reshape(H, W, 2)
    # bnx/bny are single-channel affines applied before the global means, so
    # they commute with the mean; sigmoid is applied after the pool.
    m_h = jnp.mean(yz3, axis=0, keepdims=True)                           # (1, W, 2)
    m_w = jnp.mean(yz3, axis=1, keepdims=True)                           # (H, 1, 2)
    gy = jax.nn.sigmoid(misc_ref[0] * m_h[:, :, 0:1] + misc_ref[1])      # (1, W, 1)
    gz = jax.nn.sigmoid(misc_ref[2] * m_w[:, :, 1:2] + misc_ref[3])      # (H, 1, 1)

    # ---- fused gate / bna / bnb / softmax(alpha) tail ----------------------
    # mixed = leaky(x2*(a0 + (a1*bna_s)*gy + (a2*bnb_s)*gz) + (a1*bna_b + a2*bnb_b))
    x23 = x2.reshape(H, W, C)
    s1 = bn_ref[4:5, :].reshape(1, 1, C)
    s2 = bn_ref[5:6, :].reshape(1, 1, C)
    bsum = bn_ref[6:7, :].reshape(1, 1, C)
    gating = misc_ref[4] + s1 * gy + s2 * gz                             # (H, W, C)
    mixed = leaky(x23 * gating + bsum)

    # ---- 2x2 average pool --------------------------------------------------
    # H direction: leading-dim split + add.
    quad = mixed.reshape(H2, 2, W, C)
    rowsum = quad[:, 0, :, :] + quad[:, 1, :, :]                         # (H2, W, C)
    flat = rowsum.reshape(H2 * W, C)
    # W direction: one sublane roll + add; valid 2x2 sums sit at even rows.
    pairs = flat + pltpu.roll(flat, shift=H2 * W - 1, axis=0)
    pool_ref[...] = 0.25 * pairs
    pooled = pool_ref[pl.ds(0, H2 * W2, stride=2), :]                    # (H2*W2, C)
    out_ref[0] = pooled.astype(out_ref.dtype)


def _fold_bn(gamma, beta, mean, var, eps=1e-5):
    scale = gamma / jnp.sqrt(var + eps)
    return scale, beta - mean * scale


def tfblock_forward(x_nchw, params, *, compute_dtype=jnp.bfloat16):
    """TFBlock.forward with pool_size=(2, 2), pool_type='avg'."""
    B, Cin, H, W = x_nchw.shape
    C = params["w2_t"].shape[-1]
    assert H % 2 == 0 and W % 8 == 0, "kernel needs H even and W a multiple of 8"
    HW = H * W
    H2, W2 = H // 2, W // 2

    # NCHW -> NHWC; conv1 im2col in XLA (9x a tiny input of HBM traffic,
    # removes all Cin=4 masked-store slab fills from the kernel).
    x_nhwc = jnp.transpose(x_nchw, (0, 2, 3, 1)).astype(compute_dtype)
    xpad = jnp.pad(x_nhwc, ((0, 0), (1, 1), (1, 1), (0, 0)))
    col1 = jnp.concatenate(
        [xpad[:, dy:dy + H, dx:dx + W, :] for dy in range(3) for dx in range(3)],
        axis=-1).reshape(B, HW, 9 * Cin)

    # Fold inference-mode BatchNorms to per-channel scale/bias.
    bn1_s, bn1_b = _fold_bn(*params["bn1"])
    bn2_s, bn2_b = _fold_bn(*params["bn2"])
    bna_s, bna_b = _fold_bn(*params["bna"])
    bnb_s, bnb_b = _fold_bn(*params["bnb"])
    bnx_s, bnx_b = _fold_bn(*params["bnx"])
    bny_s, bny_b = _fold_bn(*params["bny"])

    so_alpha = jax.nn.softmax(params["alpha"])
    a0, a1, a2 = so_alpha[0], so_alpha[1], so_alpha[2]
    s1 = a1 * bna_s                        # fused tail coefficients (per channel)
    s2 = a2 * bnb_s
    bsum = a1 * bna_b + a2 * bnb_b
    bn_pack = jnp.stack([bn1_s, bn1_b, bn2_s, bn2_b, s1, s2, bsum,
                         jnp.zeros_like(bn1_s)]).astype(jnp.float32)     # (8, C)

    misc = jnp.stack([bnx_s[0], bnx_b[0], bny_s[0], bny_b[0], a0]
                     ).astype(jnp.float32)                               # (5,)

    # Border-validity masks for the 9 conv2 taps (rows ordered (h, w)).
    r = jnp.arange(HW)
    hh, ww = r // W, r % W
    mask_cols = []
    for dy in range(3):
        for dx in range(3):
            ok = ((hh + dy >= 1) & (hh + dy <= H) &
                  (ww + dx >= 1) & (ww + dx <= W))
            mask_cols.append(ok.astype(jnp.float32))
    masks = jnp.stack(mask_cols, axis=1)                                 # (HW, 9)

    # Conv weights in matmul-friendly layouts.
    w1_2d = params["w1_t"].reshape(9 * Cin, C).astype(compute_dtype)     # rows (dy,dx,cin)
    w2_2d = params["w2_t"].reshape(9 * C, C).astype(compute_dtype)       # rows (dy,dx,c)
    w34 = jnp.stack([params["w3_v"][0], params["w4_v"][0]],
                    axis=1).astype(jnp.float32)                          # (C, 2)

    kernel = functools.partial(_tfblock_kernel, H, W, Cin, C)
    out_flat = pl.pallas_call(
        kernel,
        out_shape=jax.ShapeDtypeStruct((B, H2 * W2, C), jnp.float32),
        grid_spec=pltpu.PrefetchScalarGridSpec(
            num_scalar_prefetch=0,
            grid=(B,),
            in_specs=[
                pl.BlockSpec((1, HW, 9 * Cin), lambda b: (b, 0, 0)),
                pl.BlockSpec((9 * Cin, C), lambda b: (0, 0)),
                pl.BlockSpec((9 * C, C), lambda b: (0, 0)),
                pl.BlockSpec((C, 2), lambda b: (0, 0)),
                pl.BlockSpec((8, C), lambda b: (0, 0)),
                pl.BlockSpec((HW, 9), lambda b: (0, 0)),
                pl.BlockSpec(memory_space=pltpu.MemorySpace.SMEM),
            ],
            out_specs=pl.BlockSpec((1, H2 * W2, C), lambda b: (b, 0, 0)),
            scratch_shapes=[
                pltpu.VMEM((H2 * W, C), jnp.float32),   # pool even-row staging
            ],
        ),
        compiler_params=pltpu.CompilerParams(
            dimension_semantics=("parallel",)),   # batch steps are independent
    )(col1, w1_2d, w2_2d, w34, bn_pack, masks, misc)

    # (B, H2*W2, C) -> NCHW (small output; see TODO about lane-dense output).
    out_nhwc = out_flat.reshape(B, H2, W2, C)
    return jnp.transpose(out_nhwc, (0, 3, 1, 2))


def _init_params(key, Cin, C):
    ks = jax.random.split(key, 16)

    def bn_params(k, n):
        k1, k2, k3, k4 = jax.random.split(k, 4)
        gamma = jax.random.uniform(k1, (n,), jnp.float32, 0.5, 1.5)
        beta = 0.1 * jax.random.normal(k2, (n,), jnp.float32)
        mean = 0.1 * jax.random.normal(k3, (n,), jnp.float32)
        var = jax.random.uniform(k4, (n,), jnp.float32, 0.5, 1.5)
        return (gamma, beta, mean, var)

    # PyTorch conv weight layouts, converted to kernel layout.
    w1 = 0.2 * jax.random.normal(ks[0], (C, Cin, 3, 3), jnp.float32)
    w2 = 0.2 * jax.random.normal(ks[1], (C, C, 3, 3), jnp.float32)
    w3 = 0.2 * jax.random.normal(ks[2], (1, C, 1, 1), jnp.float32)
    w4 = 0.2 * jax.random.normal(ks[3], (1, C, 1, 1), jnp.float32)

    return {
        "w1_t": jnp.transpose(w1, (2, 3, 1, 0)),        # (3, 3, Cin, C)
        "w2_t": jnp.transpose(w2, (2, 3, 1, 0)),        # (3, 3, C, C)
        "w3_v": w3[:, :, 0, 0],                          # (1, C)
        "w4_v": w4[:, :, 0, 0],                          # (1, C)
        "bn1": bn_params(ks[4], C),
        "bn2": bn_params(ks[5], C),
        "bna": bn_params(ks[6], C),
        "bnb": bn_params(ks[7], C),
        "bnx": bn_params(ks[8], 1),
        "bny": bn_params(ks[9], 1),
        "alpha": jnp.array([0.1, 0.1, 0.1], jnp.float32),
    }


if __name__ == "__main__":
    key = jax.random.PRNGKey(0)
    kx, kp = jax.random.split(key)

    # Small synthetic shapes consistent with the module's forward pass
    # (out_channels=64 is the smallest configuration the module defines).
    B, Cin, C, H, W = 2, 4, 64, 16, 16
    x = jax.random.normal(kx, (B, Cin, H, W), jnp.float32)   # NCHW like PyTorch
    params = _init_params(kp, Cin, C)

    out = jax.jit(tfblock_forward)(x, params)
    jax.block_until_ready(out)
    assert out.shape == (B, C, H // 2, W // 2)
    print("KERNEL_OK")
</pallas_src>

<mosaic_0001>
module attributes {stable_mosaic.version = 11 : i64} {
  func.func @_tfblock_kernel(%arg0: i32, %arg1: memref<1x256x36xbf16, #tpu.memory_space<vmem>>, %arg2: memref<36x64xbf16, #tpu.memory_space<vmem>>, %arg3: memref<576x64xbf16, #tpu.memory_space<vmem>>, %arg4: memref<64x2xf32, #tpu.memory_space<vmem>>, %arg5: memref<8x64xf32, #tpu.memory_space<vmem>>, %arg6: memref<256x9xf32, #tpu.memory_space<vmem>>, %arg7: memref<5xf32, #tpu.memory_space<smem>>, %arg8: memref<1x64x64xf32, #tpu.memory_space<vmem>>, %arg9: memref<128x64xf32, #tpu.memory_space<vmem>>) attributes {dimension_semantics = [#tpu.dimension_semantics<parallel>], iteration_bounds = array<i64: 2>, scalar_prefetch = 0 : i64, scratch_operands = 1 : i64, tpu.core_type = #tpu.core_type<tc>, window_params = [{transform_indices = @transform_0, window_bounds = array<i64: 1, 256, 36>}, {pipeline_mode = #tpu.pipeline_mode<synchronous>, transform_indices = @transform_1, window_bounds = array<i64: 36, 64>}, {pipeline_mode = #tpu.pipeline_mode<synchronous>, transform_indices = @transform_2, window_bounds = array<i64: 576, 64>}, {pipeline_mode = #tpu.pipeline_mode<synchronous>, transform_indices = @transform_3, window_bounds = array<i64: 64, 2>}, {pipeline_mode = #tpu.pipeline_mode<synchronous>, transform_indices = @transform_4, window_bounds = array<i64: 8, 64>}, {pipeline_mode = #tpu.pipeline_mode<synchronous>, transform_indices = @transform_5, window_bounds = array<i64: 256, 9>}, {transform_indices = @transform_6, window_bounds = array<i64: 5>}, {transform_indices = @transform_7, window_bounds = array<i64: 1, 64, 64>}]} {
    %c0 = arith.constant 0 : index
    %c0_0 = arith.constant 0 : index
    %c0_1 = arith.constant 0 : index
    %0 = vector.load %arg1[%c0, %c0_0, %c0_1] : memref<1x256x36xbf16, #tpu.memory_space<vmem>>, vector<1x256x36xbf16>
    %1 = vector.shape_cast %0 : vector<1x256x36xbf16> to vector<256x36xbf16>
    %c0_2 = arith.constant 0 : index
    %c0_3 = arith.constant 0 : index
    %2 = vector.load %arg2[%c0_2, %c0_3] : memref<36x64xbf16, #tpu.memory_space<vmem>>, vector<36x64xbf16>
    %cst = arith.constant dense<0.000000e+00> : vector<256x64xf32>
    %3 = tpu.matmul %1, %2, %cst {dimension_numbers = #tpu.dot_dimension_numbers<[1], [0], [0], [1], [0, 0, 1, 1], [], []>} : vector<256x36xbf16>, vector<36x64xbf16>, vector<256x64xf32> -> vector<256x64xf32>
    %cst_4 = arith.constant 2.000000e-01 : f32
    %4 = vector.broadcast %cst_4 : f32 to vector<256x64xf32>
    %5 = arith.mulf %4, %3 : vector<256x64xf32>
    %6 = arith.maximumf %3, %5 : vector<256x64xf32>
    %c0_5 = arith.constant 0 : index
    %c0_6 = arith.constant 0 : index
    %7 = vector.load %arg5[%c0_5, %c0_6] : memref<8x64xf32, #tpu.memory_space<vmem>>, vector<1x64xf32>
    %8 = vector.broadcast %7 : vector<1x64xf32> to vector<256x64xf32>
    %9 = arith.mulf %6, %8 : vector<256x64xf32>
    %c1 = arith.constant 1 : index
    %c0_7 = arith.constant 0 : index
    %10 = vector.load %arg5[%c1, %c0_7] : memref<8x64xf32, #tpu.memory_space<vmem>>, vector<1x64xf32>
    %11 = vector.broadcast %10 : vector<1x64xf32> to vector<256x64xf32>
    %12 = arith.addf %9, %11 : vector<256x64xf32>
    %cst_8 = arith.constant 0.000000e+00 : f32
    %13 = vector.broadcast %cst_8 : f32 to vector<256x64xf32>
    %c17_i32 = arith.constant 17 : i32
    %14 = tpu.dynamic_rotate %12 by %c17_i32 dim 0 : vector<256x64xf32>, i32 -> vector<256x64xf32>
    %c0_9 = arith.constant 0 : index
    %c0_10 = arith.constant 0 : index
    %15 = vector.load %arg6[%c0_9, %c0_10] : memref<256x9xf32, #tpu.memory_space<vmem>>, vector<256x1xf32>
    %16 = vector.broadcast %15 : vector<256x1xf32> to vector<256x64xf32>
    %17 = arith.mulf %14, %16 : vector<256x64xf32>
    %18 = arith.truncf %17 : vector<256x64xf32> to vector<256x64xbf16>
    %c0_11 = arith.constant 0 : index
    %c0_12 = arith.constant 0 : index
    %19 = vector.load %arg3[%c0_11, %c0_12] : memref<576x64xbf16, #tpu.memory_space<vmem>>, vector<64x64xbf16>
    %cst_13 = arith.constant dense<0.000000e+00> : vector<256x64xf32>
    %20 = tpu.matmul %18, %19, %cst_13 {dimension_numbers = #tpu.dot_dimension_numbers<[1], [0], [0], [1], [0, 0, 1, 1], [], []>} : vector<256x64xbf16>, vector<64x64xbf16>, vector<256x64xf32> -> vector<256x64xf32>
    %21 = arith.addf %13, %20 : vector<256x64xf32>
    %c16_i32 = arith.constant 16 : i32
    %22 = tpu.dynamic_rotate %12 by %c16_i32 dim 0 : vector<256x64xf32>, i32 -> vector<256x64xf32>
    %c0_14 = arith.constant 0 : index
    %c1_15 = arith.constant 1 : index
    %23 = vector.load %arg6[%c0_14, %c1_15] : memref<256x9xf32, #tpu.memory_space<vmem>>, vector<256x1xf32>
    %24 = vector.broadcast %23 : vector<256x1xf32> to vector<256x64xf32>
    %25 = arith.mulf %22, %24 : vector<256x64xf32>
    %26 = arith.truncf %25 : vector<256x64xf32> to vector<256x64xbf16>
    %c64 = arith.constant 64 : index
    %c0_16 = arith.constant 0 : index
    %27 = vector.load %arg3[%c64, %c0_16] : memref<576x64xbf16, #tpu.memory_space<vmem>>, vector<64x64xbf16>
    %cst_17 = arith.constant dense<0.000000e+00> : vector<256x64xf32>
    %28 = tpu.matmul %26, %27, %cst_17 {dimension_numbers = #tpu.dot_dimension_numbers<[1], [0], [0], [1], [0, 0, 1, 1], [], []>} : vector<256x64xbf16>, vector<64x64xbf16>, vector<256x64xf32> -> vector<256x64xf32>
    %29 = arith.addf %21, %28 : vector<256x64xf32>
    %c15_i32 = arith.constant 15 : i32
    %30 = tpu.dynamic_rotate %12 by %c15_i32 dim 0 : vector<256x64xf32>, i32 -> vector<256x64xf32>
    %c0_18 = arith.constant 0 : index
    %c2 = arith.constant 2 : index
    %31 = vector.load %arg6[%c0_18, %c2] : memref<256x9xf32, #tpu.memory_space<vmem>>, vector<256x1xf32>
    %32 = vector.broadcast %31 : vector<256x1xf32> to vector<256x64xf32>
    %33 = arith.mulf %30, %32 : vector<256x64xf32>
    %34 = arith.truncf %33 : vector<256x64xf32> to vector<256x64xbf16>
    %c128 = arith.constant 128 : index
    %c0_19 = arith.constant 0 : index
    %35 = vector.load %arg3[%c128, %c0_19] : memref<576x64xbf16, #tpu.memory_space<vmem>>, vector<64x64xbf16>
    %cst_20 = arith.constant dense<0.000000e+00> : vector<256x64xf32>
    %36 = tpu.matmul %34, %35, %cst_20 {dimension_numbers = #tpu.dot_dimension_numbers<[1], [0], [0], [1], [0, 0, 1, 1], [], []>} : vector<256x64xbf16>, vector<64x64xbf16>, vector<256x64xf32> -> vector<256x64xf32>
    %37 = arith.addf %29, %36 : vector<256x64xf32>
    %c1_i32 = arith.constant 1 : i32
    %38 = tpu.dynamic_rotate %12 by %c1_i32 dim 0 : vector<256x64xf32>, i32 -> vector<256x64xf32>
    %c0_21 = arith.constant 0 : index
    %c3 = arith.constant 3 : index
    %39 = vector.load %arg6[%c0_21, %c3] : memref<256x9xf32, #tpu.memory_space<vmem>>, vector<256x1xf32>
    %40 = vector.broadcast %39 : vector<256x1xf32> to vector<256x64xf32>
    %41 = arith.mulf %38, %40 : vector<256x64xf32>
    %42 = arith.truncf %41 : vector<256x64xf32> to vector<256x64xbf16>
    %c192 = arith.constant 192 : index
    %c0_22 = arith.constant 0 : index
    %43 = vector.load %arg3[%c192, %c0_22] : memref<576x64xbf16, #tpu.memory_space<vmem>>, vector<64x64xbf16>
    %cst_23 = arith.constant dense<0.000000e+00> : vector<256x64xf32>
    %44 = tpu.matmul %42, %43, %cst_23 {dimension_numbers = #tpu.dot_dimension_numbers<[1], [0], [0], [1], [0, 0, 1, 1], [], []>} : vector<256x64xbf16>, vector<64x64xbf16>, vector<256x64xf32> -> vector<256x64xf32>
    %45 = arith.addf %37, %44 : vector<256x64xf32>
    %46 = arith.truncf %12 : vector<256x64xf32> to vector<256x64xbf16>
    %c256 = arith.constant 256 : index
    %c0_24 = arith.constant 0 : index
    %47 = vector.load %arg3[%c256, %c0_24] : memref<576x64xbf16, #tpu.memory_space<vmem>>, vector<64x64xbf16>
    %cst_25 = arith.constant dense<0.000000e+00> : vector<256x64xf32>
    %48 = tpu.matmul %46, %47, %cst_25 {dimension_numbers = #tpu.dot_dimension_numbers<[1], [0], [0], [1], [0, 0, 1, 1], [], []>} : vector<256x64xbf16>, vector<64x64xbf16>, vector<256x64xf32> -> vector<256x64xf32>
    %49 = arith.addf %45, %48 : vector<256x64xf32>
    %c255_i32 = arith.constant 255 : i32
    %50 = tpu.dynamic_rotate %12 by %c255_i32 dim 0 : vector<256x64xf32>, i32 -> vector<256x64xf32>
    %c0_26 = arith.constant 0 : index
    %c5 = arith.constant 5 : index
    %51 = vector.load %arg6[%c0_26, %c5] : memref<256x9xf32, #tpu.memory_space<vmem>>, vector<256x1xf32>
    %52 = vector.broadcast %51 : vector<256x1xf32> to vector<256x64xf32>
    %53 = arith.mulf %50, %52 : vector<256x64xf32>
    %54 = arith.truncf %53 : vector<256x64xf32> to vector<256x64xbf16>
    %c320 = arith.constant 320 : index
    %c0_27 = arith.constant 0 : index
    %55 = vector.load %arg3[%c320, %c0_27] : memref<576x64xbf16, #tpu.memory_space<vmem>>, vector<64x64xbf16>
    %cst_28 = arith.constant dense<0.000000e+00> : vector<256x64xf32>
    %56 = tpu.matmul %54, %55, %cst_28 {dimension_numbers = #tpu.dot_dimension_numbers<[1], [0], [0], [1], [0, 0, 1, 1], [], []>} : vector<256x64xbf16>, vector<64x64xbf16>, vector<256x64xf32> -> vector<256x64xf32>
    %57 = arith.addf %49, %56 : vector<256x64xf32>
    %c241_i32 = arith.constant 241 : i32
    %58 = tpu.dynamic_rotate %12 by %c241_i32 dim 0 : vector<256x64xf32>, i32 -> vector<256x64xf32>
    %c0_29 = arith.constant 0 : index
    %c6 = arith.constant 6 : index
    %59 = vector.load %arg6[%c0_29, %c6] : memref<256x9xf32, #tpu.memory_space<vmem>>, vector<256x1xf32>
    %60 = vector.broadcast %59 : vector<256x1xf32> to vector<256x64xf32>
    %61 = arith.mulf %58, %60 : vector<256x64xf32>
    %62 = arith.truncf %61 : vector<256x64xf32> to vector<256x64xbf16>
    %c384 = arith.constant 384 : index
    %c0_30 = arith.constant 0 : index
    %63 = vector.load %arg3[%c384, %c0_30] : memref<576x64xbf16, #tpu.memory_space<vmem>>, vector<64x64xbf16>
    %cst_31 = arith.constant dense<0.000000e+00> : vector<256x64xf32>
    %64 = tpu.matmul %62, %63, %cst_31 {dimension_numbers = #tpu.dot_dimension_numbers<[1], [0], [0], [1], [0, 0, 1, 1], [], []>} : vector<256x64xbf16>, vector<64x64xbf16>, vector<256x64xf32> -> vector<256x64xf32>
    %65 = arith.addf %57, %64 : vector<256x64xf32>
    %c240_i32 = arith.constant 240 : i32
    %66 = tpu.dynamic_rotate %12 by %c240_i32 dim 0 : vector<256x64xf32>, i32 -> vector<256x64xf32>
    %c0_32 = arith.constant 0 : index
    %c7 = arith.constant 7 : index
    %67 = vector.load %arg6[%c0_32, %c7] : memref<256x9xf32, #tpu.memory_space<vmem>>, vector<256x1xf32>
    %68 = vector.broadcast %67 : vector<256x1xf32> to vector<256x64xf32>
    %69 = arith.mulf %66, %68 : vector<256x64xf32>
    %70 = arith.truncf %69 : vector<256x64xf32> to vector<256x64xbf16>
    %c448 = arith.constant 448 : index
    %c0_33 = arith.constant 0 : index
    %71 = vector.load %arg3[%c448, %c0_33] : memref<576x64xbf16, #tpu.memory_space<vmem>>, vector<64x64xbf16>
    %cst_34 = arith.constant dense<0.000000e+00> : vector<256x64xf32>
    %72 = tpu.matmul %70, %71, %cst_34 {dimension_numbers = #tpu.dot_dimension_numbers<[1], [0], [0], [1], [0, 0, 1, 1], [], []>} : vector<256x64xbf16>, vector<64x64xbf16>, vector<256x64xf32> -> vector<256x64xf32>
    %73 = arith.addf %65, %72 : vector<256x64xf32>
    %c239_i32 = arith.constant 239 : i32
    %74 = tpu.dynamic_rotate %12 by %c239_i32 dim 0 : vector<256x64xf32>, i32 -> vector<256x64xf32>
    %c0_35 = arith.constant 0 : index
    %c8 = arith.constant 8 : index
    %75 = vector.load %arg6[%c0_35, %c8] : memref<256x9xf32, #tpu.memory_space<vmem>>, vector<256x1xf32>
    %76 = vector.broadcast %75 : vector<256x1xf32> to vector<256x64xf32>
    %77 = arith.mulf %74, %76 : vector<256x64xf32>
    %78 = arith.truncf %77 : vector<256x64xf32> to vector<256x64xbf16>
    %c512 = arith.constant 512 : index
    %c0_36 = arith.constant 0 : index
    %79 = vector.load %arg3[%c512, %c0_36] : memref<576x64xbf16, #tpu.memory_space<vmem>>, vector<64x64xbf16>
    %cst_37 = arith.constant dense<0.000000e+00> : vector<256x64xf32>
    %80 = tpu.matmul %78, %79, %cst_37 {dimension_numbers = #tpu.dot_dimension_numbers<[1], [0], [0], [1], [0, 0, 1, 1], [], []>} : vector<256x64xbf16>, vector<64x64xbf16>, vector<256x64xf32> -> vector<256x64xf32>
    %81 = arith.addf %73, %80 : vector<256x64xf32>
    %cst_38 = arith.constant 2.000000e-01 : f32
    %82 = vector.broadcast %cst_38 : f32 to vector<256x64xf32>
    %83 = arith.mulf %82, %81 : vector<256x64xf32>
    %84 = arith.maximumf %81, %83 : vector<256x64xf32>
    %c2_39 = arith.constant 2 : index
    %c0_40 = arith.constant 0 : index
    %85 = vector.load %arg5[%c2_39, %c0_40] : memref<8x64xf32, #tpu.memory_space<vmem>>, vector<1x64xf32>
    %86 = vector.broadcast %85 : vector<1x64xf32> to vector<256x64xf32>
    %87 = arith.mulf %84, %86 : vector<256x64xf32>
    %c3_41 = arith.constant 3 : index
    %c0_42 = arith.constant 0 : index
    %88 = vector.load %arg5[%c3_41, %c0_42] : memref<8x64xf32, #tpu.memory_space<vmem>>, vector<1x64xf32>
    %89 = vector.broadcast %88 : vector<1x64xf32> to vector<256x64xf32>
    %90 = arith.addf %87, %89 : vector<256x64xf32>
    %c0_43 = arith.constant 0 : index
    %c0_44 = arith.constant 0 : index
    %91 = vector.load %arg4[%c0_43, %c0_44] : memref<64x2xf32, #tpu.memory_space<vmem>>, vector<64x2xf32>
    %cst_45 = arith.constant dense<0.000000e+00> : vector<256x2xf32>
    %92 = tpu.matmul %90, %91, %cst_45 {dimension_numbers = #tpu.dot_dimension_numbers<[1], [0], [0], [1], [0, 0, 1, 1], [], []>} : vector<256x64xf32>, vector<64x2xf32>, vector<256x2xf32> -> vector<256x2xf32>
    %cst_46 = arith.constant 2.000000e-01 : f32
    %93 = vector.broadcast %cst_46 : f32 to vector<256x2xf32>
    %94 = arith.mulf %93, %92 : vector<256x2xf32>
    %95 = arith.maximumf %92, %94 : vector<256x2xf32>
    %96 = vector.shape_cast %95 : vector<256x2xf32> to vector<16x16x2xf32>
    %cst_47 = arith.constant dense<0.000000e+00> : vector<16x2xf32>
    %97 = vector.multi_reduction <add>, %96, %cst_47 [0] : vector<16x16x2xf32> to vector<16x2xf32>
    %98 = vector.shape_cast %97 : vector<16x2xf32> to vector<1x16x2xf32>
    %cst_48 = arith.constant 1.600000e+01 : f32
    %99 = vector.broadcast %cst_48 : f32 to vector<1x16x2xf32>
    %100 = arith.divf %98, %99 : vector<1x16x2xf32>
    %cst_49 = arith.constant dense<0.000000e+00> : vector<16x2xf32>
    %101 = vector.multi_reduction <add>, %96, %cst_49 [1] : vector<16x16x2xf32> to vector<16x2xf32>
    %102 = vector.shape_cast %101 : vector<16x2xf32> to vector<16x1x2xf32>
    %cst_50 = arith.constant 1.600000e+01 : f32
    %103 = vector.broadcast %cst_50 : f32 to vector<16x1x2xf32>
    %104 = arith.divf %102, %103 : vector<16x1x2xf32>
    %c0_51 = arith.constant 0 : index
    %105 = memref.load %arg7[%c0_51] : memref<5xf32, #tpu.memory_space<smem>>
    %106 = vector.extract_strided_slice %100 {offsets = [0, 0, 0], sizes = [1, 16, 1], strides = [1, 1, 1]} : vector<1x16x2xf32> to vector<1x16x1xf32>
    %107 = vector.broadcast %105 : f32 to vector<1x16x1xf32>
    %108 = arith.mulf %107, %106 : vector<1x16x1xf32>
    %c1_52 = arith.constant 1 : index
    %109 = memref.load %arg7[%c1_52] : memref<5xf32, #tpu.memory_space<smem>>
    %110 = vector.broadcast %109 : f32 to vector<1x16x1xf32>
    %111 = arith.addf %108, %110 : vector<1x16x1xf32>
    %112 = arith.negf %111 : vector<1x16x1xf32>
    %113 = math.exp %112 : vector<1x16x1xf32>
    %cst_53 = arith.constant 1.000000e+00 : f32
    %114 = vector.broadcast %cst_53 : f32 to vector<1x16x1xf32>
    %115 = arith.addf %114, %113 : vector<1x16x1xf32>
    %116 = arith.divf %114, %115 : vector<1x16x1xf32>
    %c2_54 = arith.constant 2 : index
    %117 = memref.load %arg7[%c2_54] : memref<5xf32, #tpu.memory_space<smem>>
    %118 = vector.extract_strided_slice %104 {offsets = [0, 0, 1], sizes = [16, 1, 1], strides = [1, 1, 1]} : vector<16x1x2xf32> to vector<16x1x1xf32>
    %119 = vector.broadcast %117 : f32 to vector<16x1x1xf32>
    %120 = arith.mulf %119, %118 : vector<16x1x1xf32>
    %c3_55 = arith.constant 3 : index
    %121 = memref.load %arg7[%c3_55] : memref<5xf32, #tpu.memory_space<smem>>
    %122 = vector.broadcast %121 : f32 to vector<16x1x1xf32>
    %123 = arith.addf %120, %122 : vector<16x1x1xf32>
    %124 = arith.negf %123 : vector<16x1x1xf32>
    %125 = math.exp %124 : vector<16x1x1xf32>
    %cst_56 = arith.constant 1.000000e+00 : f32
    %126 = vector.broadcast %cst_56 : f32 to vector<16x1x1xf32>
    %127 = arith.addf %126, %125 : vector<16x1x1xf32>
    %128 = arith.divf %126, %127 : vector<16x1x1xf32>
    %129 = vector.shape_cast %90 : vector<256x64xf32> to vector<16x16x64xf32>
    %c4 = arith.constant 4 : index
    %c0_57 = arith.constant 0 : index
    %130 = vector.load %arg5[%c4, %c0_57] : memref<8x64xf32, #tpu.memory_space<vmem>>, vector<1x64xf32>
    %131 = vector.shape_cast %130 : vector<1x64xf32> to vector<1x1x64xf32>
    %c5_58 = arith.constant 5 : index
    %c0_59 = arith.constant 0 : index
    %132 = vector.load %arg5[%c5_58, %c0_59] : memref<8x64xf32, #tpu.memory_space<vmem>>, vector<1x64xf32>
    %133 = vector.shape_cast %132 : vector<1x64xf32> to vector<1x1x64xf32>
    %c6_60 = arith.constant 6 : index
    %c0_61 = arith.constant 0 : index
    %134 = vector.load %arg5[%c6_60, %c0_61] : memref<8x64xf32, #tpu.memory_space<vmem>>, vector<1x64xf32>
    %135 = vector.shape_cast %134 : vector<1x64xf32> to vector<1x1x64xf32>
    %c4_62 = arith.constant 4 : index
    %136 = memref.load %arg7[%c4_62] : memref<5xf32, #tpu.memory_space<smem>>
    %137 = vector.broadcast %131 : vector<1x1x64xf32> to vector<1x16x64xf32>
    %138 = vector.broadcast %116 : vector<1x16x1xf32> to vector<1x16x64xf32>
    %139 = arith.mulf %137, %138 : vector<1x16x64xf32>
    %140 = vector.broadcast %136 : f32 to vector<1x16x64xf32>
    %141 = arith.addf %140, %139 : vector<1x16x64xf32>
    %142 = vector.broadcast %133 : vector<1x1x64xf32> to vector<16x1x64xf32>
    %143 = vector.broadcast %128 : vector<16x1x1xf32> to vector<16x1x64xf32>
    %144 = arith.mulf %142, %143 : vector<16x1x64xf32>
    %145 = vector.broadcast %141 : vector<1x16x64xf32> to vector<16x16x64xf32>
    %146 = vector.broadcast %144 : vector<16x1x64xf32> to vector<16x16x64xf32>
    %147 = arith.addf %145, %146 : vector<16x16x64xf32>
    %148 = arith.mulf %129, %147 : vector<16x16x64xf32>
    %149 = vector.broadcast %135 : vector<1x1x64xf32> to vector<16x16x64xf32>
    %150 = arith.addf %148, %149 : vector<16x16x64xf32>
    %cst_63 = arith.constant 2.000000e-01 : f32
    %151 = vector.broadcast %cst_63 : f32 to vector<16x16x64xf32>
    %152 = arith.mulf %151, %150 : vector<16x16x64xf32>
    %153 = arith.maximumf %150, %152 : vector<16x16x64xf32>
    %154 = vector.shape_cast %153 : vector<16x16x64xf32> to vector<8x2x16x64xf32>
    %155 = vector.extract_strided_slice %154 {offsets = [0, 0, 0, 0], sizes = [8, 1, 16, 64], strides = [1, 1, 1, 1]} : vector<8x2x16x64xf32> to vector<8x1x16x64xf32>
    %156 = vector.shape_cast %155 : vector<8x1x16x64xf32> to vector<8x16x64xf32>
    %157 = vector.extract_strided_slice %154 {offsets = [0, 1, 0, 0], sizes = [8, 1, 16, 64], strides = [1, 1, 1, 1]} : vector<8x2x16x64xf32> to vector<8x1x16x64xf32>
    %158 = vector.shape_cast %157 : vector<8x1x16x64xf32> to vector<8x16x64xf32>
    %159 = arith.addf %156, %158 : vector<8x16x64xf32>
    %160 = vector.shape_cast %159 : vector<8x16x64xf32> to vector<128x64xf32>
    %c127_i32 = arith.constant 127 : i32
    %161 = tpu.dynamic_rotate %160 by %c127_i32 dim 0 : vector<128x64xf32>, i32 -> vector<128x64xf32>
    %162 = arith.addf %160, %161 : vector<128x64xf32>
    %cst_64 = arith.constant 2.500000e-01 : f32
    %163 = vector.broadcast %cst_64 : f32 to vector<128x64xf32>
    %164 = arith.mulf %163, %162 : vector<128x64xf32>
    %c0_65 = arith.constant 0 : index
    %c0_66 = arith.constant 0 : index
    %165 = vector.load %arg9[%c0_65, %c0_66] : memref<128x64xf32, #tpu.memory_space<vmem>>, vector<128x64xf32>
    tpu.vector_store %arg9[%c0_65, %c0_66], %164 {strides = array<i32>} : memref<128x64xf32, #tpu.memory_space<vmem>>, vector<128x64xf32>,
    %c0_67 = arith.constant 0 : index
    %c0_68 = arith.constant 0 : index
    %166 = tpu.strided_load %arg9[%c0_67, %c0_68] {strides = array<i32: 2, 1>} : memref<128x64xf32, #tpu.memory_space<vmem>>, vector<64x64xf32>
    %c0_69 = arith.constant 0 : index
    %c0_70 = arith.constant 0 : index
    %c0_71 = arith.constant 0 : index
    %167 = vector.load %arg8[%c0_69, %c0_70, %c0_71] : memref<1x64x64xf32, #tpu.memory_space<vmem>>, vector<1x64x64xf32>
    %168 = vector.shape_cast %167 : vector<1x64x64xf32> to vector<64x64xf32>
    %169 = vector.shape_cast %166 : vector<64x64xf32> to vector<1x64x64xf32>
    tpu.vector_store %arg8[%c0_69, %c0_70, %c0_71], %169 {strides = array<i32>} : memref<1x64x64xf32, #tpu.memory_space<vmem>>, vector<1x64x64xf32>,
    return
  }
  func.func @transform_0(%arg0: i32) -> (i32, i32, i32) {
    %c0_i32 = arith.constant 0 : i32
    %c0_i32_0 = arith.constant 0 : i32
    %c0_i32_1 = arith.constant 0 : i32
    return %arg0, %c0_i32, %c0_i32_0 : i32, i32, i32
  }
  func.func @transform_1(%arg0: i32) -> (i32, i32) {
    %c0_i32 = arith.constant 0 : i32
    %c0_i32_0 = arith.constant 0 : i32
    %c0_i32_1 = arith.constant 0 : i32
    return %c0_i32, %c0_i32_0 : i32, i32
  }
  func.func @transform_2(%arg0: i32) -> (i32, i32) {
    %c0_i32 = arith.constant 0 : i32
    %c0_i32_0 = arith.constant 0 : i32
    %c0_i32_1 = arith.constant 0 : i32
    return %c0_i32, %c0_i32_0 : i32, i32
  }
  func.func @transform_3(%arg0: i32) -> (i32, i32) {
    %c0_i32 = arith.constant 0 : i32
    %c0_i32_0 = arith.constant 0 : i32
    %c0_i32_1 = arith.constant 0 : i32
    return %c0_i32, %c0_i32_0 : i32, i32
  }
  func.func @transform_4(%arg0: i32) -> (i32, i32) {
    %c0_i32 = arith.constant 0 : i32
    %c0_i32_0 = arith.constant 0 : i32
    %c0_i32_1 = arith.constant 0 : i32
    return %c0_i32, %c0_i32_0 : i32, i32
  }
  func.func @transform_5(%arg0: i32) -> (i32, i32) {
    %c0_i32 = arith.constant 0 : i32
    %c0_i32_0 = arith.constant 0 : i32
    %c0_i32_1 = arith.constant 0 : i32
    return %c0_i32, %c0_i32_0 : i32, i32
  }
  func.func @transform_6(%arg0: i32) -> i32 {
    %c0_i32 = arith.constant 0 : i32
    %c0_i32_0 = arith.constant 0 : i32
    return %c0_i32 : i32
  }
  func.func @transform_7(%arg0: i32) -> (i32, i32, i32) {
    %c0_i32 = arith.constant 0 : i32
    %c0_i32_0 = arith.constant 0 : i32
    %c0_i32_1 = arith.constant 0 : i32
    return %arg0, %c0_i32, %c0_i32_0 : i32, i32, i32
  }
}

</mosaic_0001>

<llo_original>
// kernel: tfblock_forward.1
$region0: #{tfblock_forward.1}
  #allocation0 [shape = 'u32[]', space=smem, size = 0x4, offset = 0x4, fixed_abs, tag = 'smem constant byte address 0x4 - core index']
  #allocation1 [shape = 'u32[144,128]{1,0:T(1,128)}', space=vmem, size = 0x12000, scoped, tag = 'internal scratch']
  #allocation2 [shape = 'f32[128,64]{1,0:T(8,128)}', space=vmem, size = 0x10000, scoped, tag = 'scratch operand']
  %s0 = inlined_call_operand.vmem [shape: bf16[2,256,36], index: 0, kind: input, shape index: {}]
  %s1 = inlined_call_operand.vmem [shape: bf16[36,64], index: 1, kind: input, shape index: {}]
  %s2 = inlined_call_operand.vmem [shape: bf16[576,64], index: 2, kind: input, shape index: {}]
  %s3 = inlined_call_operand.vmem [shape: f32[64,2], index: 3, kind: input, shape index: {}]
  %s4 = inlined_call_operand.vmem [shape: f32[8,64], index: 4, kind: input, shape index: {}]
  %s5 = inlined_call_operand.vmem [shape: f32[256,9], index: 5, kind: input, shape index: {}]
  %s6 = inlined_call_operand.vmem [shape: f32[5], index: 6, kind: input, shape index: {}]
  %s7 = inlined_call_operand.hbm [shape: f32[2,64,64], index: 7, kind: output, shape index: {}]
  %s8 = sld [smem:[#allocation0]]
  $region65: #{tfblock_forward.1} parent=0
    _
  %s10 = ssub.s32 1, %s8
  %s11 = scalar_select 0, %s10, %s8
  $region1: #{tfblock_forward.1} parent=0
    #allocation3 [shape = 'u8[512]{0}', space=smem, size = 0x200, scoped, tag = 'input window, operand 6, single buffered']
    #allocation4 [shape = 's32[2]{0}', space=sflag, size = 0x8, scoped, tag = 'scoped memory for tfblock_forward.1']
    #allocation5 [shape = 's32[2]{0}', space=sflag, size = 0x8, scoped, tag = 'scoped memory for tfblock_forward.1']
    #allocation6 [shape = 'u8[65536]{0}', space=vmem, size = 0x10000, scoped, tag = 'output window, operand 0']
    %12 = vsyncpa [#allocation5], 0
    %13 = vsyncpa [#allocation4], 0
    %s14 = scalar_lea.sflag [#allocation4], 1
    %15 = vsyncpa %s14, 0
    loop: start=0, step=1, limit=4
    $region2: #{tfblock_forward.1} parent=1 // loop_pre_header
      _
    $region3: #{tfblock_forward.1} parent=1 // loop_header
      %s17 = sphi 0, %s21
      %p18 = scmp.ge.s32.totalorder %s17, 4
      %s27 = sphi 0, %s29
      %s30 = sphi 0, %s27
      %s31 = sphi 0, %s30
      %s47 = sphi 0, %s31
      %s51 = sphi 0, %s51
      %s53 = sphi 0, %s51
      %s54 = sphi 0, %s53
      %s68 = sphi 0, %s54
      %s72 = sphi 0, %s72
      %s74 = sphi 0, %s72
      %s75 = sphi 0, %s74
      %s89 = sphi 0, %s75
      %s93 = sphi 0, %s93
      %s95 = sphi 0, %s93
      %s96 = sphi 0, %s95
      %s110 = sphi 0, %s96
      %s114 = sphi 0, %s114
      %s116 = sphi 0, %s114
      %s117 = sphi 0, %s116
      %s131 = sphi 0, %s117
      %s135 = sphi 0, %s135
      %s137 = sphi 0, %s135
      %s138 = sphi 0, %s137
      %s152 = sphi 0, %s138
      %s156 = sphi 0, %s156
      %s158 = sphi 0, %s156
      %s159 = sphi 0, %s158
      %s173 = sphi 0, %s159
      %s179 = sphi 0, %s181
      %s182 = sphi 0, %s179
      %s183 = sphi 0, %s182
      %s199 = sphi 0, %s183
    $region4: #{tfblock_forward.1} parent=1 // loop_header_branch
      %20 = sbr.rel (%p18) target = $region8
    $region5: #{tfblock_forward.1} parent=1 // loop_body
      %s22 = ssub.s32 %s17, 1
      %s23 = ssub.s32 %s17, 2
      %s24 = sadd.s32 %s17, 1
      %s25 = ssub.s32 %s17, %s24
      %p26 = scmp.eq.s32.totalorder %s25, 0
      %s28 = sadd.s32 %s27, 1
      %s29 = scalar_select %p26, %s27, %s28
      %p32 = pneg %p26
      %p33 = scmp.eq.s32.totalorder %s17, 1
      %p34 = por %p32, %p33
      %p35 = scmp.ne.s32.totalorder %s27, %s30
      %p36 = scmp.eq.s32.totalorder %s17, 0
      %p37 = por %p35, %p36
      %p38 = scmp.ne.s32.totalorder %s27, %s30
      %p39 = scmp.eq.s32.totalorder %s22, 1
      %p40 = por %p38, %p39
      %p41 = scmp.ne.s32.totalorder %s30, %s31
      %p42 = scmp.eq.s32.totalorder %s22, 0
      %p43 = por %p41, %p42
      %p44 = scmp.ne.s32.totalorder %s30, %s31
      %p45 = scmp.eq.s32.totalorder %s23, 1
      %p46 = por %p44, %p45
      %p48 = scmp.ne.s32.totalorder %s31, %s47
      %p49 = scmp.eq.s32.totalorder %s23, 0
      %p50 = por %p48, %p49
      %s52 = sadd.s32 %s51, 1
      %p55 = scmp.eq.s32.totalorder %s17, 1
      %p56 = scmp.ne.s32.totalorder %s51, %s53
      %p57 = scmp.eq.s32.totalorder %s17, 0
      %p58 = por %p56, %p57
      %p59 = scmp.ne.s32.totalorder %s51, %s53
      %p60 = scmp.eq.s32.totalorder %s22, 1
      %p61 = por %p59, %p60
      %p62 = scmp.ne.s32.totalorder %s53, %s54
      %p63 = scmp.eq.s32.totalorder %s22, 0
      %p64 = por %p62, %p63
      %p65 = scmp.ne.s32.totalorder %s53, %s54
      %p66 = scmp.eq.s32.totalorder %s23, 1
      %p67 = por %p65, %p66
      %p69 = scmp.ne.s32.totalorder %s54, %s68
      %p70 = scmp.eq.s32.totalorder %s23, 0
      %p71 = por %p69, %p70
      %s73 = sadd.s32 %s72, 1
      %p76 = scmp.eq.s32.totalorder %s17, 1
      %p77 = scmp.ne.s32.totalorder %s72, %s74
      %p78 = scmp.eq.s32.totalorder %s17, 0
      %p79 = por %p77, %p78
      %p80 = scmp.ne.s32.totalorder %s72, %s74
      %p81 = scmp.eq.s32.totalorder %s22, 1
      %p82 = por %p80, %p81
      %p83 = scmp.ne.s32.totalorder %s74, %s75
      %p84 = scmp.eq.s32.totalorder %s22, 0
      %p85 = por %p83, %p84
      %p86 = scmp.ne.s32.totalorder %s74, %s75
      %p87 = scmp.eq.s32.totalorder %s23, 1
      %p88 = por %p86, %p87
      %p90 = scmp.ne.s32.totalorder %s75, %s89
      %p91 = scmp.eq.s32.totalorder %s23, 0
      %p92 = por %p90, %p91
      %s94 = sadd.s32 %s93, 1
      %p97 = scmp.eq.s32.totalorder %s17, 1
      %p98 = scmp.ne.s32.totalorder %s93, %s95
      %p99 = scmp.eq.s32.totalorder %s17, 0
      %p100 = por %p98, %p99
      %p101 = scmp.ne.s32.totalorder %s93, %s95
      %p102 = scmp.eq.s32.totalorder %s22, 1
      %p103 = por %p101, %p102
      %p104 = scmp.ne.s32.totalorder %s95, %s96
      %p105 = scmp.eq.s32.totalorder %s22, 0
      %p106 = por %p104, %p105
      %p107 = scmp.ne.s32.totalorder %s95, %s96
      %p108 = scmp.eq.s32.totalorder %s23, 1
      %p109 = por %p107, %p108
      %p111 = scmp.ne.s32.totalorder %s96, %s110
      %p112 = scmp.eq.s32.totalorder %s23, 0
      %p113 = por %p111, %p112
      %s115 = sadd.s32 %s114, 1
      %p118 = scmp.eq.s32.totalorder %s17, 1
      %p119 = scmp.ne.s32.totalorder %s114, %s116
      %p120 = scmp.eq.s32.totalorder %s17, 0
      %p121 = por %p119, %p120
      %p122 = scmp.ne.s32.totalorder %s114, %s116
      %p123 = scmp.eq.s32.totalorder %s22, 1
      %p124 = por %p122, %p123
      %p125 = scmp.ne.s32.totalorder %s116, %s117
      %p126 = scmp.eq.s32.totalorder %s22, 0
      %p127 = por %p125, %p126
      %p128 = scmp.ne.s32.totalorder %s116, %s117
      %p129 = scmp.eq.s32.totalorder %s23, 1
      %p130 = por %p128, %p129
      %p132 = scmp.ne.s32.totalorder %s117, %s131
      %p133 = scmp.eq.s32.totalorder %s23, 0
      %p134 = por %p132, %p133
      %s136 = sadd.s32 %s135, 1
      %p139 = scmp.eq.s32.totalorder %s17, 1
      %p140 = scmp.ne.s32.totalorder %s135, %s137
      %p141 = scmp.eq.s32.totalorder %s17, 0
      %p142 = por %p140, %p141
      %p143 = scmp.ne.s32.totalorder %s135, %s137
      %p144 = scmp.eq.s32.totalorder %s22, 1
      %p145 = por %p143, %p144
      %p146 = scmp.ne.s32.totalorder %s137, %s138
      %p147 = scmp.eq.s32.totalorder %s22, 0
      %p148 = por %p146, %p147
      %p149 = scmp.ne.s32.totalorder %s137, %s138
      %p150 = scmp.eq.s32.totalorder %s23, 1
      %p151 = por %p149, %p150
      %p153 = scmp.ne.s32.totalorder %s138, %s152
      %p154 = scmp.eq.s32.totalorder %s23, 0
      %p155 = por %p153, %p154
      %s157 = sadd.s32 %s156, 1
      %p160 = scmp.eq.s32.totalorder %s17, 1
      %p161 = scmp.ne.s32.totalorder %s156, %s158
      %p162 = scmp.eq.s32.totalorder %s17, 0
      %p163 = por %p161, %p162
      %p164 = scmp.ne.s32.totalorder %s156, %s158
      %p165 = scmp.eq.s32.totalorder %s22, 1
      %p166 = por %p164, %p165
      %p167 = scmp.ne.s32.totalorder %s158, %s159
      %p168 = scmp.eq.s32.totalorder %s22, 0
      %p169 = por %p167, %p168
      %p170 = scmp.ne.s32.totalorder %s158, %s159
      %p171 = scmp.eq.s32.totalorder %s23, 1
      %p172 = por %p170, %p171
      %p174 = scmp.ne.s32.totalorder %s159, %s173
      %p175 = scmp.eq.s32.totalorder %s23, 0
      %p176 = por %p174, %p175
      %s177 = ssub.s32 %s17, %s24
      %p178 = scmp.eq.s32.totalorder %s177, 0
      %s180 = sadd.s32 %s179, 1
      %s181 = scalar_select %p178, %s179, %s180
      %p184 = pneg %p178
      %p185 = scmp.eq.s32.totalorder %s17, 1
      %p186 = por %p184, %p185
      %p187 = scmp.ne.s32.totalorder %s179, %s182
      %p188 = scmp.eq.s32.totalorder %s17, 0
      %p189 = por %p187, %p188
      %p190 = scmp.ne.s32.totalorder %s179, %s182
      %p191 = scmp.eq.s32.totalorder %s22, 1
      %p192 = por %p190, %p191
      %p193 = scmp.ne.s32.totalorder %s182, %s183
      %p194 = scmp.eq.s32.totalorder %s22, 0
      %p195 = por %p193, %p194
      %p196 = scmp.ne.s32.totalorder %s182, %s183
      %p197 = scmp.eq.s32.totalorder %s23, 1
      %p198 = por %p196, %p197
      %p200 = scmp.ne.s32.totalorder %s183, %s199
      %p201 = scmp.eq.s32.totalorder %s23, 0
      %p202 = por %p200, %p201
      %p203 = scmp.le.s32.totalorder 1, %s17
      %p204 = scmp.lt.s32.totalorder %s17, 3
      %p205 = pnand %p203, %p204
      %p206 = pneg %p205
      // Predicated region
      $region9: #{tfblock_forward.1} parent=5 // pred_check
        _
      $region10: #{tfblock_forward.1} parent=5 // pred_check_branch
        %208 = sbr.rel (%p205) target = $region12
      $region11: #{tfblock_forward.1} parent=5 // pred_region
        %s209 = ssub.s32 %s17, 1
        // Predicated region
        $region13: #{tfblock_forward.1} parent=11 // pred_check
          %p210 = pneg %p64
        $region14: #{tfblock_forward.1} parent=11 // pred_check_branch
          %212 = sbr.rel (%p210) target = $region16
        $region15: #{tfblock_forward.1} parent=11 // pred_region
          _
        $region16: #{tfblock_forward.1} parent=11 // pred_fallthru
          _
        // Predicated region
        $region17: #{tfblock_forward.1} parent=11 // pred_check
          %p213 = pneg %p85
        $region18: #{tfblock_forward.1} parent=11 // pred_check_branch
          %215 = sbr.rel (%p213) target = $region20
        $region19: #{tfblock_forward.1} parent=11 // pred_region
          _
        $region20: #{tfblock_forward.1} parent=11 // pred_fallthru
          _
        // Predicated region
        $region21: #{tfblock_forward.1} parent=11 // pred_check
          %p216 = pneg %p106
        $region22: #{tfblock_forward.1} parent=11 // pred_check_branch
          %218 = sbr.rel (%p216) target = $region24
        $region23: #{tfblock_forward.1} parent=11 // pred_region
          _
        $region24: #{tfblock_forward.1} parent=11 // pred_fallthru
          _
        // Predicated region
        $region25: #{tfblock_forward.1} parent=11 // pred_check
          %p219 = pneg %p127
        $region26: #{tfblock_forward.1} parent=11 // pred_check_branch
          %221 = sbr.rel (%p219) target = $region28
        $region27: #{tfblock_forward.1} parent=11 // pred_region
          _
        $region28: #{tfblock_forward.1} parent=11 // pred_fallthru
          _
        // Predicated region
        $region29: #{tfblock_forward.1} parent=11 // pred_check
          %p222 = pneg %p148
        $region30: #{tfblock_forward.1} parent=11 // pred_check_branch
          %224 = sbr.rel (%p222) target = $region32
        $region31: #{tfblock_forward.1} parent=11 // pred_region
          _
        $region32: #{tfblock_forward.1} parent=11 // pred_fallthru
          _
        // Predicated region
        $region33: #{tfblock_forward.1} parent=11 // pred_check
          %p225 = pneg %p169
        $region34: #{tfblock_forward.1} parent=11 // pred_check_branch
          %227 = sbr.rel (%p225) target = $region36
        $region35: #{tfblock_forward.1} parent=11 // pred_region
          %s229 = ssub.s32 16, 16
          %230 = vsyncadd [#allocation5], %s229
          %s232 = sshll.u32 %s6, 4
          %s233 = int_to_ptr.vmem [resolvable:$true] %s232
          %235 = dma.vmem_to_smem %s233, 16, [#allocation3], [#allocation5]
        $region36: #{tfblock_forward.1} parent=11 // pred_fallthru
          _
      $region12: #{tfblock_forward.1} parent=5 // pred_fallthru
        _
      %p236 = scmp.lt.s32.totalorder %s17, 2
      // Predicated region
      $region37: #{tfblock_forward.1} parent=5 // pred_check
        %p237 = pneg %p236
      $region38: #{tfblock_forward.1} parent=5 // pred_check_branch
        %239 = sbr.rel (%p237) target = $region40
      $region39: #{tfblock_forward.1} parent=5 // pred_region
        // Predicated region
        $region41: #{tfblock_forward.1} parent=39 // pred_check
          %p240 = pneg %p37
        $region42: #{tfblock_forward.1} parent=39 // pred_check_branch
          %242 = sbr.rel (%p240) target = $region44
        $region43: #{tfblock_forward.1} parent=39 // pred_region
          %p243 = scmp.lt.s32.totalorder %s17, 1
          %s244 = scalar_select %p243, %s17, 1
          %s245 = smul.addr %s244, 32
          %s246 = smul.addr %s245, 4
          %s247 = scalar_lea.vmem %s0, %s246
        $region44: #{tfblock_forward.1} parent=39 // pred_fallthru
          _
      $region40: #{tfblock_forward.1} parent=5 // pred_fallthru
        _
      %p248 = scmp.le.s32.totalorder 1, %s17
      %p249 = scmp.lt.s32.totalorder %s17, 3
      %p250 = pnand %p248, %p249
      %p251 = pneg %p250
      // Predicated region
      $region45: #{tfblock_forward.1} parent=5 // pred_check
        _
      $region46: #{tfblock_forward.1} parent=5 // pred_check_branch
        %253 = sbr.rel (%p250) target = $region48
      $region47: #{tfblock_forward.1} parent=5 // pred_region
        %s254 = ssub.s32 %s17, 1
        // Predicated region
        $region49: #{tfblock_forward.1} parent=47 // pred_check
          %p255 = pneg %p169
        $region50: #{tfblock_forward.1} parent=47 // pred_check_branch
          %257 = sbr.rel (%p255) target = $region52
        $region51: #{tfblock_forward.1} parent=47 // pred_region
          %258 = dma.done [#allocation5], 16
        $region52: #{tfblock_forward.1} parent=47 // pred_fallthru
          _
        %259 = sfence
        %p260 = scmp.lt.s32.totalorder %s22, 1
        %s261 = scalar_select %p260, %s22, 1
        %s262 = smul.addr %s261, 32
        %s263 = smul.addr %s262, 4
        %s264 = scalar_lea.vmem %s0, %s263
        %p265 = pneg %p43
        %p266 = pneg %p40
        %p267 = pneg %p64
        %p268 = pneg %p61
        %p269 = pneg %p85
        %p270 = pneg %p82
        %p271 = pneg %p106
        %p272 = pneg %p103
        %p273 = pneg %p127
        %p274 = pneg %p124
        %p275 = pneg %p148
        %p276 = pneg %p145
        %p277 = pneg %p169
        %p278 = pneg %p166
        %p279 = pneg %p195
        %p280 = pneg %p192
        %s281 = sand.u32 %s182, 1
        %s282 = scalar_lea.sflag [#allocation4], %s281
        %s283 = sand.u32 %s182, 1
        %s284 = smul.addr %s283, 64
        %s285 = scalar_lea.vmem [#allocation6], %s284
        %p286 = scmp.lt.s32.totalorder %s22, 1
        %s287 = scalar_select %p286, %s22, 1
        %s288 = smul.addr %s287, 32
        %s289 = smul.addr %s288, 4
        %s290 = scalar_lea.vmem %s0, %s289
        %v292 = vld [vmem:[%s290] sm:$0xf]
        %v293 = vld [vmem:[%s290 + $0x4] sm:$0xf]
        %v294 = vld [vmem:[%s290 + $0x8] sm:$0xf]
        %v295 = vld [vmem:[%s290 + $0xc] sm:$0xf]
        %v296 = vld [vmem:[%s290 + $0x10] sm:$0xf]
        %v297 = vld [vmem:[%s290 + $0x14] sm:$0xf]
        %v298 = vld [vmem:[%s290 + $0x18] sm:$0xf]
        %v299 = vld [vmem:[%s290 + $0x1c] sm:$0xf]
        %v300 = vld [vmem:[%s290 + $0x20] sm:$0xf]
        %v301 = vld [vmem:[%s290 + $0x24] sm:$0xf]
        %v302 = vld [vmem:[%s290 + $0x28] sm:$0xf]
        %v303 = vld [vmem:[%s290 + $0x2c] sm:$0xf]
        %v304 = vld [vmem:[%s290 + $0x30] sm:$0xf]
        %v305 = vld [vmem:[%s290 + $0x34] sm:$0xf]
        %v306 = vld [vmem:[%s290 + $0x38] sm:$0xf]
        %v307 = vld [vmem:[%s290 + $0x3c] sm:$0xf]
        %v308 = vld [vmem:[%s290 + $0x40] sm:$0xf]
        %v309 = vld [vmem:[%s290 + $0x44] sm:$0xf]
        %v310 = vld [vmem:[%s290 + $0x48] sm:$0xf]
        %v311 = vld [vmem:[%s290 + $0x4c] sm:$0xf]
        %v312 = vld [vmem:[%s290 + $0x50] sm:$0xf]
        %v313 = vld [vmem:[%s290 + $0x54] sm:$0xf]
        %v314 = vld [vmem:[%s290 + $0x58] sm:$0xf]
        %v315 = vld [vmem:[%s290 + $0x5c] sm:$0xf]
        %v316 = vld [vmem:[%s290 + $0x60] sm:$0xf]
        %v317 = vld [vmem:[%s290 + $0x64] sm:$0xf]
        %v318 = vld [vmem:[%s290 + $0x68] sm:$0xf]
        %v319 = vld [vmem:[%s290 + $0x6c] sm:$0xf]
        %v320 = vld [vmem:[%s290 + $0x70] sm:$0xf]
        %v321 = vld [vmem:[%s290 + $0x74] sm:$0xf]
        %v322 = vld [vmem:[%s290 + $0x78] sm:$0xf]
        %v323 = vld [vmem:[%s290 + $0x7c] sm:$0xf]
        %v324 = vld [vmem:[%s1] sm:$0xf]
        %v325 = vld [vmem:[%s1 + $0x4] sm:$0xf]
        %v326 = vld [vmem:[%s1 + $0x8] sm:$0xf]
        %v327 = vld [vmem:[%s1 + $0xc] sm:$0xf]
        %v328 = vld [vmem:[%s1 + $0x10] sm:$0x3]
        %v361 = vunpack.c.l.b16 %v292
        %v362 = vunpack.c.l.b16 %v293
        %v363 = vunpack.c.l.b16 %v294
        %v364 = vunpack.c.l.b16 %v295
        %v365 = vunpack.c.l.b16 %v296
        %v366 = vunpack.c.l.b16 %v297
        %v367 = vunpack.c.l.b16 %v298
        %v368 = vunpack.c.l.b16 %v299
        %v369 = vunpack.c.l.b16 %v300
        %v370 = vunpack.c.l.b16 %v301
        %v371 = vunpack.c.l.b16 %v302
        %v372 = vunpack.c.l.b16 %v303
        %v373 = vunpack.c.l.b16 %v304
        %v374 = vunpack.c.l.b16 %v305
        %v375 = vunpack.c.l.b16 %v306
        %v376 = vunpack.c.l.b16 %v307
        %v377 = vunpack.c.l.b16 %v308
        %v378 = vunpack.c.l.b16 %v309
        %v379 = vunpack.c.l.b16 %v310
        %v380 = vunpack.c.l.b16 %v311
        %v381 = vunpack.c.l.b16 %v312
        %v382 = vunpack.c.l.b16 %v313
        %v383 = vunpack.c.l.b16 %v314
        %v384 = vunpack.c.l.b16 %v315
        %v385 = vunpack.c.l.b16 %v316
        %v386 = vunpack.c.l.b16 %v317
        %v387 = vunpack.c.l.b16 %v318
        %v388 = vunpack.c.l.b16 %v319
        %v389 = vunpack.c.l.b16 %v320
        %v390 = vunpack.c.l.b16 %v321
        %v391 = vunpack.c.l.b16 %v322
        %v392 = vunpack.c.l.b16 %v323
        %v393 = vpack.c.b16 %v362, %v361
        %v394 = vpack.c.b16 %v364, %v363
        %v395 = vpack.c.b16 %v366, %v365
        %v396 = vpack.c.b16 %v368, %v367
        %v397 = vpack.c.b16 %v370, %v369
        %v398 = vpack.c.b16 %v372, %v371
        %v399 = vpack.c.b16 %v374, %v373
        %v400 = vpack.c.b16 %v376, %v375
        %v401 = vpack.c.b16 %v378, %v377
        %v402 = vpack.c.b16 %v380, %v379
        %v403 = vpack.c.b16 %v382, %v381
        %v404 = vpack.c.b16 %v384, %v383
        %v405 = vpack.c.b16 %v386, %v385
        %v406 = vpack.c.b16 %v388, %v387
        %v407 = vpack.c.b16 %v390, %v389
        %v408 = vpack.c.b16 %v392, %v391
        %v414 = vunpack.c.l.b16 %v324
        %v415 = vunpack.c.l.b16 %v325
        %v416 = vunpack.c.l.b16 %v326
        %v417 = vunpack.c.l.b16 %v327
        %v418 = vunpack.c.l.b16 %v328
        %v419 = vpack.c.b16 %v415, %v414
        %v420 = vpack.c.b16 %v417, %v416
        %v421 = vpack.c.b16 %v418, %v418
        %vm424 = vcmask 293888
        %v426 = vsel %vm424, %v393, 0
        %v429 = vsel %vm424, %v394, 0
        %v432 = vsel %vm424, %v395, 0
        %v435 = vsel %vm424, %v396, 0
        %v438 = vsel %vm424, %v397, 0
        %v441 = vsel %vm424, %v398, 0
        %v444 = vsel %vm424, %v399, 0
        %v447 = vsel %vm424, %v400, 0
        %v450 = vsel %vm424, %v401, 0
        %v453 = vsel %vm424, %v402, 0
        %v456 = vsel %vm424, %v403, 0
        %v459 = vsel %vm424, %v404, 0
        %v462 = vsel %vm424, %v405, 0
        %v465 = vsel %vm424, %v406, 0
        %v468 = vsel %vm424, %v407, 0
        %v471 = vsel %vm424, %v408, 0
        %vm473 = vcmask 1041408
        %v475 = vsel %vm473, %v421, 0
        %477 = vmatprep.subr.bf16.mxu0 0
        %478 = vmatpush1.bf16.msra.mxu0 %v419
        %479 = vmatprep.subr.bf16.mxu0 0
        %480 = vmatpush1.bf16.msra.mxu0 %v420
        %481 = vmatprep.subr.bf16.mxu0 0
        %482 = vmatpush1.bf16.msra.mxu0 %v475
        %483 = vmatprep.subr.bf16.mxu0 0
        %484 = vmatpush1.bf16.msra.mxu0 0
        %485 = vmatprep.subr.bf16.mxu0 0
        %486 = vmatpush1.bf16.msra.mxu0 0
        %487 = vmatprep.subr.bf16.mxu0 0
        %488 = vmatpush1.bf16.msra.mxu0 0
        %489 = vmatprep.subr.bf16.mxu0 0
        %490 = vmatpush1.bf16.msra.mxu0 0
        %491 = vmatprep.subr.bf16.mxu0 0
        %492 = vmatpush1.bf16.msra.mxu0 0
        %493 = vmatprep.subr.bf16.mxu0 0
        %494 = vmatpush1.bf16.msra.mxu0 0
        %495 = vmatprep.subr.bf16.mxu0 0
        %496 = vmatpush1.bf16.msra.mxu0 0
        %497 = vmatprep.subr.bf16.mxu0 0
        %498 = vmatpush1.bf16.msra.mxu0 0
        %499 = vmatprep.subr.bf16.mxu0 0
        %500 = vmatpush1.bf16.msra.mxu0 0
        %501 = vmatprep.subr.bf16.mxu0 0
        %502 = vmatpush1.bf16.msra.mxu0 0
        %503 = vmatprep.subr.bf16.mxu0 0
        %504 = vmatpush1.bf16.msra.mxu0 0
        %505 = vmatprep.subr.bf16.mxu0 0
        %506 = vmatpush1.bf16.msra.mxu0 0
        %507 = vmatprep.subr.bf16.mxu0 0
        %508 = vmatpush1.bf16.msra.mxu0 0
        %509 = vmatprep.mubr.bf16.mxu0 0
        %510 = vmatmul.mubr.bf16.gmra.mrb[0].mxu0 %v426
        %v511 = vpop.f32.mrb[0].mxu0
        %v512 = vadd.f32 0.0, %v511
        %v513 = vpop.f32.mrb[0].mxu0
        %v514 = vpop.f32.mrb[0].mxu0
        %v515 = vadd.f32 0.0, %v514
        %v516 = vpop.f32.mrb[0].mxu0
        %517 = vmatprep.mubr.bf16.mxu0 0
        %518 = vmatmul.mubr.bf16.gmra.mrb[0].mxu0 %v429
        %v519 = vpop.f32.mrb[0].mxu0
        %v520 = vadd.f32 0.0, %v519
        %v521 = vpop.f32.mrb[0].mxu0
        %v522 = vpop.f32.mrb[0].mxu0
        %v523 = vadd.f32 0.0, %v522
        %v524 = vpop.f32.mrb[0].mxu0
        %525 = vmatprep.mubr.bf16.mxu0 0
        %526 = vmatmul.mubr.bf16.gmra.mrb[0].mxu0 %v432
        %v527 = vpop.f32.mrb[0].mxu0
        %v528 = vadd.f32 0.0, %v527
        %v529 = vpop.f32.mrb[0].mxu0
        %v530 = vpop.f32.mrb[0].mxu0
        %v531 = vadd.f32 0.0, %v530
        %v532 = vpop.f32.mrb[0].mxu0
        %533 = vmatprep.mubr.bf16.mxu0 0
        %534 = vmatmul.mubr.bf16.gmra.mrb[0].mxu0 %v435
        %v535 = vpop.f32.mrb[0].mxu0
        %v536 = vadd.f32 0.0, %v535
        %v537 = vpop.f32.mrb[0].mxu0
        %v538 = vpop.f32.mrb[0].mxu0
        %v539 = vadd.f32 0.0, %v538
        %v540 = vpop.f32.mrb[0].mxu0
        %541 = vmatprep.mubr.bf16.mxu0 0
        %542 = vmatmul.mubr.bf16.gmra.mrb[0].mxu0 %v438
        %v543 = vpop.f32.mrb[0].mxu0
        %v544 = vadd.f32 0.0, %v543
        %v545 = vpop.f32.mrb[0].mxu0
        %v546 = vpop.f32.mrb[0].mxu0
        %v547 = vadd.f32 0.0, %v546
        %v548 = vpop.f32.mrb[0].mxu0
        %549 = vmatprep.mubr.bf16.mxu0 0
        %550 = vmatmul.mubr.bf16.gmra.mrb[0].mxu0 %v441
        %v551 = vpop.f32.mrb[0].mxu0
        %v552 = vadd.f32 0.0, %v551
        %v553 = vpop.f32.mrb[0].mxu0
        %v554 = vpop.f32.mrb[0].mxu0
        %v555 = vadd.f32 0.0, %v554
        %v556 = vpop.f32.mrb[0].mxu0
        %557 = vmatprep.mubr.bf16.mxu0 0
        %558 = vmatmul.mubr.bf16.gmra.mrb[0].mxu0 %v444
        %v559 = vpop.f32.mrb[0].mxu0
        %v560 = vadd.f32 0.0, %v559
        %v561 = vpop.f32.mrb[0].mxu0
        %v562 = vpop.f32.mrb[0].mxu0
        %v563 = vadd.f32 0.0, %v562
        %v564 = vpop.f32.mrb[0].mxu0
        %565 = vmatprep.mubr.bf16.mxu0 0
        %566 = vmatmul.mubr.bf16.gmra.mrb[0].mxu0 %v447
        %v567 = vpop.f32.mrb[0].mxu0
        %v568 = vadd.f32 0.0, %v567
        %v569 = vpop.f32.mrb[0].mxu0
        %v570 = vpop.f32.mrb[0].mxu0
        %v571 = vadd.f32 0.0, %v570
        %v572 = vpop.f32.mrb[0].mxu0
        %573 = vmatprep.mubr.bf16.mxu0 0
        %574 = vmatmul.mubr.bf16.gmra.mrb[0].mxu0 %v450
        %v575 = vpop.f32.mrb[0].mxu0
        %v576 = vadd.f32 0.0, %v575
        %v577 = vpop.f32.mrb[0].mxu0
        %v578 = vpop.f32.mrb[0].mxu0
        %v579 = vadd.f32 0.0, %v578
        %v580 = vpop.f32.mrb[0].mxu0
        %581 = vmatprep.mubr.bf16.mxu0 0
        %582 = vmatmul.mubr.bf16.gmra.mrb[0].mxu0 %v453
        %v583 = vpop.f32.mrb[0].mxu0
        %v584 = vadd.f32 0.0, %v583
        %v585 = vpop.f32.mrb[0].mxu0
        %v586 = vpop.f32.mrb[0].mxu0
        %v587 = vadd.f32 0.0, %v586
        %v588 = vpop.f32.mrb[0].mxu0
        %589 = vmatprep.mubr.bf16.mxu0 0
        %590 = vmatmul.mubr.bf16.gmra.mrb[0].mxu0 %v456
        %v591 = vpop.f32.mrb[0].mxu0
        %v592 = vadd.f32 0.0, %v591
        %v593 = vpop.f32.mrb[0].mxu0
        %v594 = vpop.f32.mrb[0].mxu0
        %v595 = vadd.f32 0.0, %v594
        %v596 = vpop.f32.mrb[0].mxu0
        %597 = vmatprep.mubr.bf16.mxu0 0
        %598 = vmatmul.mubr.bf16.gmra.mrb[0].mxu0 %v459
        %v599 = vpop.f32.mrb[0].mxu0
        %v600 = vadd.f32 0.0, %v599
        %v601 = vpop.f32.mrb[0].mxu0
        %v602 = vpop.f32.mrb[0].mxu0
        %v603 = vadd.f32 0.0, %v602
        %v604 = vpop.f32.mrb[0].mxu0
        %605 = vmatprep.mubr.bf16.mxu0 0
        %606 = vmatmul.mubr.bf16.gmra.mrb[0].mxu0 %v462
        %v607 = vpop.f32.mrb[0].mxu0
        %v608 = vadd.f32 0.0, %v607
        %v609 = vpop.f32.mrb[0].mxu0
        %v610 = vpop.f32.mrb[0].mxu0
        %v611 = vadd.f32 0.0, %v610
        %v612 = vpop.f32.mrb[0].mxu0
        %613 = vmatprep.mubr.bf16.mxu0 0
        %614 = vmatmul.mubr.bf16.gmra.mrb[0].mxu0 %v465
        %v615 = vpop.f32.mrb[0].mxu0
        %v616 = vadd.f32 0.0, %v615
        %v617 = vpop.f32.mrb[0].mxu0
        %v618 = vpop.f32.mrb[0].mxu0
        %v619 = vadd.f32 0.0, %v618
        %v620 = vpop.f32.mrb[0].mxu0
        %621 = vmatprep.mubr.bf16.mxu0 0
        %622 = vmatmul.mubr.bf16.gmra.mrb[0].mxu0 %v468
        %v623 = vpop.f32.mrb[0].mxu0
        %v624 = vadd.f32 0.0, %v623
        %v625 = vpop.f32.mrb[0].mxu0
        %v626 = vpop.f32.mrb[0].mxu0
        %v627 = vadd.f32 0.0, %v626
        %v628 = vpop.f32.mrb[0].mxu0
        %629 = vmatprep.mubr.bf16.mxu0 0
        %630 = vmatmul.mubr.bf16.gmra.mrb[0].mxu0 %v471
        %v631 = vpop.f32.mrb[0].mxu0
        %v632 = vadd.f32 0.0, %v631
        %v633 = vpop.f32.mrb[0].mxu0
        %v634 = vpop.f32.mrb[0].mxu0
        %v635 = vadd.f32 0.0, %v634
        %v636 = vpop.f32.mrb[0].mxu0
        %637 = vdwg.mxu0
        %v638 = vmul.f32 %v512, 0.2
        %v639 = vmul.f32 %v515, 0.2
        %v640 = vmul.f32 %v520, 0.2
        %v641 = vmul.f32 %v523, 0.2
        %v642 = vmul.f32 %v528, 0.2
        %v643 = vmul.f32 %v531, 0.2
        %v644 = vmul.f32 %v536, 0.2
        %v645 = vmul.f32 %v539, 0.2
        %v646 = vmul.f32 %v544, 0.2
        %v647 = vmul.f32 %v547, 0.2
        %v648 = vmul.f32 %v552, 0.2
        %v649 = vmul.f32 %v555, 0.2
        %v650 = vmul.f32 %v560, 0.2
        %v651 = vmul.f32 %v563, 0.2
        %v652 = vmul.f32 %v568, 0.2
        %v653 = vmul.f32 %v571, 0.2
        %v654 = vmul.f32 %v576, 0.2
        %v655 = vmul.f32 %v579, 0.2
        %v656 = vmul.f32 %v584, 0.2
        %v657 = vmul.f32 %v587, 0.2
        %v658 = vmul.f32 %v592, 0.2
        %v659 = vmul.f32 %v595, 0.2
        %v660 = vmul.f32 %v600, 0.2
        %v661 = vmul.f32 %v603, 0.2
        %v662 = vmul.f32 %v608, 0.2
        %v663 = vmul.f32 %v611, 0.2
        %v664 = vmul.f32 %v616, 0.2
        %v665 = vmul.f32 %v619, 0.2
        %v666 = vmul.f32 %v624, 0.2
        %v667 = vmul.f32 %v627, 0.2
        %v668 = vmul.f32 %v632, 0.2
        %v669 = vmul.f32 %v635, 0.2
        %v670 = vmax.f32 %v512, %v638
        %v671 = vmax.f32 %v515, %v639
        %v672 = vmax.f32 %v520, %v640
        %v673 = vmax.f32 %v523, %v641
        %v674 = vmax.f32 %v528, %v642
        %v675 = vmax.f32 %v531, %v643
        %v676 = vmax.f32 %v536, %v644
        %v677 = vmax.f32 %v539, %v645
        %v678 = vmax.f32 %v544, %v646
        %v679 = vmax.f32 %v547, %v647
        %v680 = vmax.f32 %v552, %v648
        %v681 = vmax.f32 %v555, %v649
        %v682 = vmax.f32 %v560, %v650
        %v683 = vmax.f32 %v563, %v651
        %v684 = vmax.f32 %v568, %v652
        %v685 = vmax.f32 %v571, %v653
        %v686 = vmax.f32 %v576, %v654
        %v687 = vmax.f32 %v579, %v655
        %v688 = vmax.f32 %v584, %v656
        %v689 = vmax.f32 %v587, %v657
        %v690 = vmax.f32 %v592, %v658
        %v691 = vmax.f32 %v595, %v659
        %v692 = vmax.f32 %v600, %v660
        %v693 = vmax.f32 %v603, %v661
        %v694 = vmax.f32 %v608, %v662
        %v695 = vmax.f32 %v611, %v663
        %v696 = vmax.f32 %v616, %v664
        %v697 = vmax.f32 %v619, %v665
        %v698 = vmax.f32 %v624, %v666
        %v699 = vmax.f32 %v627, %v667
        %v700 = vmax.f32 %v632, %v668
        %v701 = vmax.f32 %v635, %v669
        %v702 = vld [vmem:[%s4] sm:$0x1]
        %v703 = vlaneseq
        %v704 = vshrl.u32 %v703, 7
        %v705 = vsub.s32 0, %v704
        %v706 = vrot.slane %v702, %v705
        %v707 = vmul.f32 %v670, %v706
        %v708 = vmul.f32 %v671, %v706
        %v709 = vmul.f32 %v672, %v706
        %v710 = vmul.f32 %v673, %v706
        %v711 = vmul.f32 %v674, %v706
        %v712 = vmul.f32 %v675, %v706
        %v713 = vmul.f32 %v676, %v706
        %v714 = vmul.f32 %v677, %v706
        %v715 = vmul.f32 %v678, %v706
        %v716 = vmul.f32 %v679, %v706
        %v717 = vmul.f32 %v680, %v706
        %v718 = vmul.f32 %v681, %v706
        %v719 = vmul.f32 %v682, %v706
        %v720 = vmul.f32 %v683, %v706
        %v721 = vmul.f32 %v684, %v706
        %v722 = vmul.f32 %v685, %v706
        %v723 = vmul.f32 %v686, %v706
        %v724 = vmul.f32 %v687, %v706
        %v725 = vmul.f32 %v688, %v706
        %v726 = vmul.f32 %v689, %v706
        %v727 = vmul.f32 %v690, %v706
        %v728 = vmul.f32 %v691, %v706
        %v729 = vmul.f32 %v692, %v706
        %v730 = vmul.f32 %v693, %v706
        %v731 = vmul.f32 %v694, %v706
        %v732 = vmul.f32 %v695, %v706
        %v733 = vmul.f32 %v696, %v706
        %v734 = vmul.f32 %v697, %v706
        %v735 = vmul.f32 %v698, %v706
        %v736 = vmul.f32 %v699, %v706
        %v737 = vmul.f32 %v700, %v706
        %v738 = vmul.f32 %v701, %v706
        %v739 = vld [vmem:[%s4 + $0x1] sm:$0x1]
        %v740 = vlaneseq
        %v741 = vshrl.u32 %v740, 7
        %v742 = vsub.s32 0, %v741
        %v743 = vrot.slane %v739, %v742
        %v744 = vadd.f32 %v707, %v743
        %v745 = vadd.f32 %v708, %v743
        %v746 = vadd.f32 %v709, %v743
        %v747 = vadd.f32 %v710, %v743
        %v748 = vadd.f32 %v711, %v743
        %v749 = vadd.f32 %v712, %v743
        %v750 = vadd.f32 %v713, %v743
        %v751 = vadd.f32 %v714, %v743
        %v752 = vadd.f32 %v715, %v743
        %v753 = vadd.f32 %v716, %v743
        %v754 = vadd.f32 %v717, %v743
        %v755 = vadd.f32 %v718, %v743
        %v756 = vadd.f32 %v719, %v743
        %v757 = vadd.f32 %v720, %v743
        %v758 = vadd.f32 %v721, %v743
        %v759 = vadd.f32 %v722, %v743
        %v760 = vadd.f32 %v723, %v743
        %v761 = vadd.f32 %v724, %v743
        %v762 = vadd.f32 %v725, %v743
        %v763 = vadd.f32 %v726, %v743
        %v764 = vadd.f32 %v727, %v743
        %v765 = vadd.f32 %v728, %v743
        %v766 = vadd.f32 %v729, %v743
        %v767 = vadd.f32 %v730, %v743
        %v768 = vadd.f32 %v731, %v743
        %v769 = vadd.f32 %v732, %v743
        %v770 = vadd.f32 %v733, %v743
        %v771 = vadd.f32 %v734, %v743
        %v772 = vadd.f32 %v735, %v743
        %v773 = vadd.f32 %v736, %v743
        %v774 = vadd.f32 %v737, %v743
        %v775 = vadd.f32 %v738, %v743
        %v776 = vrot.slane %v744, 7
        %v777 = vrot.slane %v745, 7
        %v778 = vrot.slane %v746, 7
        %v779 = vrot.slane %v747, 7
        %v780 = vrot.slane %v748, 7
        %v781 = vrot.slane %v749, 7
        %v782 = vrot.slane %v750, 7
        %v783 = vrot.slane %v751, 7
        %v784 = vrot.slane %v752, 7
        %v785 = vrot.slane %v753, 7
        %v786 = vrot.slane %v754, 7
        %v787 = vrot.slane %v755, 7
        %v788 = vrot.slane %v756, 7
        %v789 = vrot.slane %v757, 7
        %v790 = vrot.slane %v758, 7
        %v791 = vrot.slane %v759, 7
        %v792 = vrot.slane %v760, 7
        %v793 = vrot.slane %v761, 7
        %v794 = vrot.slane %v762, 7
        %v795 = vrot.slane %v763, 7
        %v796 = vrot.slane %v764, 7
        %v797 = vrot.slane %v765, 7
        %v798 = vrot.slane %v766, 7
        %v799 = vrot.slane %v767, 7
        %v800 = vrot.slane %v768, 7
        %v801 = vrot.slane %v769, 7
        %v802 = vrot.slane %v770, 7
        %v803 = vrot.slane %v771, 7
        %v804 = vrot.slane %v772, 7
        %v805 = vrot.slane %v773, 7
        %v806 = vrot.slane %v774, 7
        %v807 = vrot.slane %v775, 7
        %v808 = vlaneseq
        %v809 = vshrl.u32 %v808, 7
        %vm810 = vcmp.lt.s32.totalorder %v809, 1
        %v811 = vsel %vm810, %v806, %v807
        %v812 = vsel %vm810, %v805, %v806
        %v813 = vsel %vm810, %v804, %v805
        %v814 = vsel %vm810, %v803, %v804
        %v815 = vsel %vm810, %v802, %v803
        %v816 = vsel %vm810, %v801, %v802
        %v817 = vsel %vm810, %v800, %v801
        %v818 = vsel %vm810, %v799, %v800
        %v819 = vsel %vm810, %v798, %v799
        %v820 = vsel %vm810, %v797, %v798
        %v821 = vsel %vm810, %v796, %v797
        %v822 = vsel %vm810, %v795, %v796
        %v823 = vsel %vm810, %v794, %v795
        %v824 = vsel %vm810, %v793, %v794
        %v825 = vsel %vm810, %v792, %v793
        %v826 = vsel %vm810, %v791, %v792
        %v827 = vsel %vm810, %v790, %v791
        %v828 = vsel %vm810, %v789, %v790
        %v829 = vsel %vm810, %v788, %v789
        %v830 = vsel %vm810, %v787, %v788
        %v831 = vsel %vm810, %v786, %v787
        %v832 = vsel %vm810, %v785, %v786
        %v833 = vsel %vm810, %v784, %v785
        %v834 = vsel %vm810, %v783, %v784
        %v835 = vsel %vm810, %v782, %v783
        %v836 = vsel %vm810, %v781, %v782
        %v837 = vsel %vm810, %v780, %v781
        %v838 = vsel %vm810, %v779, %v780
        %v839 = vsel %vm810, %v778, %v779
        %v840 = vsel %vm810, %v777, %v778
        %v841 = vsel %vm810, %v776, %v777
        %v842 = vsel %vm810, %v807, %v776
        %v843 = vld [vmem:[%s5] sm:$0xff]
        %v844 = vld [vmem:[%s5 + $0x8] sm:$0xff]
        %v845 = vld [vmem:[%s5 + $0x10] sm:$0xff]
        %v846 = vld [vmem:[%s5 + $0x18] sm:$0xff]
        %v847 = vld [vmem:[%s5 + $0x20] sm:$0xff]
        %v848 = vld [vmem:[%s5 + $0x28] sm:$0xff]
        %v849 = vld [vmem:[%s5 + $0x30] sm:$0xff]
        %v850 = vld [vmem:[%s5 + $0x38] sm:$0xff]
        %v851 = vld [vmem:[%s5 + $0x40] sm:$0xff]
        %v852 = vld [vmem:[%s5 + $0x48] sm:$0xff]
        %v853 = vld [vmem:[%s5 + $0x50] sm:$0xff]
        %v854 = vld [vmem:[%s5 + $0x58] sm:$0xff]
        %v855 = vld [vmem:[%s5 + $0x60] sm:$0xff]
        %v856 = vld [vmem:[%s5 + $0x68] sm:$0xff]
        %v857 = vld [vmem:[%s5 + $0x70] sm:$0xff]
        %v858 = vld [vmem:[%s5 + $0x78] sm:$0xff]
        %v859 = vld [vmem:[%s5 + $0x80] sm:$0xff]
        %v860 = vld [vmem:[%s5 + $0x88] sm:$0xff]
        %v861 = vld [vmem:[%s5 + $0x90] sm:$0xff]
        %v862 = vld [vmem:[%s5 + $0x98] sm:$0xff]
        %v863 = vld [vmem:[%s5 + $0xa0] sm:$0xff]
        %v864 = vld [vmem:[%s5 + $0xa8] sm:$0xff]
        %v865 = vld [vmem:[%s5 + $0xb0] sm:$0xff]
        %v866 = vld [vmem:[%s5 + $0xb8] sm:$0xff]
        %v867 = vld [vmem:[%s5 + $0xc0] sm:$0xff]
        %v868 = vld [vmem:[%s5 + $0xc8] sm:$0xff]
        %v869 = vld [vmem:[%s5 + $0xd0] sm:$0xff]
        %v870 = vld [vmem:[%s5 + $0xd8] sm:$0xff]
        %v871 = vld [vmem:[%s5 + $0xe0] sm:$0xff]
        %v872 = vld [vmem:[%s5 + $0xe8] sm:$0xff]
        %v873 = vld [vmem:[%s5 + $0xf0] sm:$0xff]
        %v874 = vld [vmem:[%s5 + $0xf8] sm:$0xff]
        %876 = vset.pattern.permute.xlu0 0
        %877 = vperm.xlu0 %876, %v843
        %v878 = vpop.permute.xlu0 %877
        %881 = vset.pattern.permute.xlu0 0
        %882 = vperm.xlu0 %881, %v844
        %v883 = vpop.permute.xlu0 %882
        %886 = vset.pattern.permute.xlu0 0
        %887 = vperm.xlu0 %886, %v845
        %v888 = vpop.permute.xlu0 %887
        %891 = vset.pattern.permute.xlu0 0
        %892 = vperm.xlu0 %891, %v846
        %v893 = vpop.permute.xlu0 %892
        %896 = vset.pattern.permute.xlu0 0
        %897 = vperm.xlu0 %896, %v847
        %v898 = vpop.permute.xlu0 %897
        %901 = vset.pattern.permute.xlu0 0
        %902 = vperm.xlu0 %901, %v848
        %v903 = vpop.permute.xlu0 %902
        %906 = vset.pattern.permute.xlu0 0
        %907 = vperm.xlu0 %906, %v849
        %v908 = vpop.permute.xlu0 %907
        %911 = vset.pattern.permute.xlu0 0
        %912 = vperm.xlu0 %911, %v850
        %v913 = vpop.permute.xlu0 %912
        %916 = vset.pattern.permute.xlu0 0
        %917 = vperm.xlu0 %916, %v851
        %v918 = vpop.permute.xlu0 %917
        %921 = vset.pattern.permute.xlu0 0
        %922 = vperm.xlu0 %921, %v852
        %v923 = vpop.permute.xlu0 %922
        %926 = vset.pattern.permute.xlu0 0
        %927 = vperm.xlu0 %926, %v853
        %v928 = vpop.permute.xlu0 %927
        %931 = vset.pattern.permute.xlu0 0
        %932 = vperm.xlu0 %931, %v854
        %v933 = vpop.permute.xlu0 %932
        %936 = vset.pattern.permute.xlu0 0
        %937 = vperm.xlu0 %936, %v855
        %v938 = vpop.permute.xlu0 %937
        %941 = vset.pattern.permute.xlu0 0
        %942 = vperm.xlu0 %941, %v856
        %v943 = vpop.permute.xlu0 %942
        %946 = vset.pattern.permute.xlu0 0
        %947 = vperm.xlu0 %946, %v857
        %v948 = vpop.permute.xlu0 %947
        %951 = vset.pattern.permute.xlu0 0
        %952 = vperm.xlu0 %951, %v858
        %v953 = vpop.permute.xlu0 %952
        %956 = vset.pattern.permute.xlu0 0
        %957 = vperm.xlu0 %956, %v859
        %v958 = vpop.permute.xlu0 %957
        %961 = vset.pattern.permute.xlu0 0
        %962 = vperm.xlu0 %961, %v860
        %v963 = vpop.permute.xlu0 %962
        %966 = vset.pattern.permute.xlu0 0
        %967 = vperm.xlu0 %966, %v861
        %v968 = vpop.permute.xlu0 %967
        %971 = vset.pattern.permute.xlu0 0
        %972 = vperm.xlu0 %971, %v862
        %v973 = vpop.permute.xlu0 %972
        %976 = vset.pattern.permute.xlu0 0
        %977 = vperm.xlu0 %976, %v863
        %v978 = vpop.permute.xlu0 %977
        %981 = vset.pattern.permute.xlu0 0
        %982 = vperm.xlu0 %981, %v864
        %v983 = vpop.permute.xlu0 %982
        %986 = vset.pattern.permute.xlu0 0
        %987 = vperm.xlu0 %986, %v865
        %v988 = vpop.permute.xlu0 %987
        %991 = vset.pattern.permute.xlu0 0
        %992 = vperm.xlu0 %991, %v866
        %v993 = vpop.permute.xlu0 %992
        %996 = vset.pattern.permute.xlu0 0
        %997 = vperm.xlu0 %996, %v867
        %v998 = vpop.permute.xlu0 %997
        %1001 = vset.pattern.permute.xlu0 0
        %1002 = vperm.xlu0 %1001, %v868
        %v1003 = vpop.permute.xlu0 %1002
        %1006 = vset.pattern.permute.xlu0 0
        %1007 = vperm.xlu0 %1006, %v869
        %v1008 = vpop.permute.xlu0 %1007
        %1011 = vset.pattern.permute.xlu0 0
        %1012 = vperm.xlu0 %1011, %v870
        %v1013 = vpop.permute.xlu0 %1012
        %1016 = vset.pattern.permute.xlu0 0
        %1017 = vperm.xlu0 %1016, %v871
        %v1018 = vpop.permute.xlu0 %1017
        %1021 = vset.pattern.permute.xlu0 0
        %1022 = vperm.xlu0 %1021, %v872
        %v1023 = vpop.permute.xlu0 %1022
        %1026 = vset.pattern.permute.xlu0 0
        %1027 = vperm.xlu0 %1026, %v873
        %v1028 = vpop.permute.xlu0 %1027
        %1031 = vset.pattern.permute.xlu0 0
        %1032 = vperm.xlu0 %1031, %v874
        %v1033 = vpop.permute.xlu0 %1032
        %v1035 = vmul.f32 %v812, %v878
        %v1036 = vmul.f32 %v811, %v883
        %v1037 = vmul.f32 %v842, %v888
        %v1038 = vmul.f32 %v841, %v893
        %v1039 = vmul.f32 %v840, %v898
        %v1040 = vmul.f32 %v839, %v903
        %v1041 = vmul.f32 %v838, %v908
        %v1042 = vmul.f32 %v837, %v913
        %v1043 = vmul.f32 %v836, %v918
        %v1044 = vmul.f32 %v835, %v923
        %v1045 = vmul.f32 %v834, %v928
        %v1046 = vmul.f32 %v833, %v933
        %v1047 = vmul.f32 %v832, %v938
        %v1048 = vmul.f32 %v831, %v943
        %v1049 = vmul.f32 %v830, %v948
        %v1050 = vmul.f32 %v829, %v953
        %v1051 = vmul.f32 %v828, %v958
        %v1052 = vmul.f32 %v827, %v963
        %v1053 = vmul.f32 %v826, %v968
        %v1054 = vmul.f32 %v825, %v973
        %v1055 = vmul.f32 %v824, %v978
        %v1056 = vmul.f32 %v823, %v983
        %v1057 = vmul.f32 %v822, %v988
        %v1058 = vmul.f32 %v821, %v993
        %v1059 = vmul.f32 %v820, %v998
        %v1060 = vmul.f32 %v819, %v1003
        %v1061 = vmul.f32 %v818, %v1008
        %v1062 = vmul.f32 %v817, %v1013
        %v1063 = vmul.f32 %v816, %v1018
        %v1064 = vmul.f32 %v815, %v1023
        %v1065 = vmul.f32 %v814, %v1028
        %v1066 = vmul.f32 %v813, %v1033
        %v1067 = vpack.c.bf16 %v1036, %v1035
        %v1068 = vpack.c.bf16 %v1038, %v1037
        %v1069 = vpack.c.bf16 %v1040, %v1039
        %v1070 = vpack.c.bf16 %v1042, %v1041
        %v1071 = vpack.c.bf16 %v1044, %v1043
        %v1072 = vpack.c.bf16 %v1046, %v1045
        %v1073 = vpack.c.bf16 %v1048, %v1047
        %v1074 = vpack.c.bf16 %v1050, %v1049
        %v1075 = vpack.c.bf16 %v1052, %v1051
        %v1076 = vpack.c.bf16 %v1054, %v1053
        %v1077 = vpack.c.bf16 %v1056, %v1055
        %v1078 = vpack.c.bf16 %v1058, %v1057
        %v1079 = vpack.c.bf16 %v1060, %v1059
        %v1080 = vpack.c.bf16 %v1062, %v1061
        %v1081 = vpack.c.bf16 %v1064, %v1063
        %v1082 = vpack.c.bf16 %v1066, %v1065
        %v1083 = vld [vmem:[%s2] sm:$0xf]
        %v1084 = vld [vmem:[%s2 + $0x4] sm:$0xf]
        %v1085 = vld [vmem:[%s2 + $0x8] sm:$0xf]
        %v1086 = vld [vmem:[%s2 + $0xc] sm:$0xf]
        %v1087 = vld [vmem:[%s2 + $0x10] sm:$0xf]
        %v1088 = vld [vmem:[%s2 + $0x14] sm:$0xf]
        %v1089 = vld [vmem:[%s2 + $0x18] sm:$0xf]
        %v1090 = vld [vmem:[%s2 + $0x1c] sm:$0xf]
        %1091 = vset.pattern.permute.xlu0 1
        %1092 = vperm.xlu0 %1091, %v843
        %v1093 = vpop.permute.xlu0 %1092
        %1095 = vset.pattern.permute.xlu0 1
        %1096 = vperm.xlu0 %1095, %v844
        %v1097 = vpop.permute.xlu0 %1096
        %1099 = vset.pattern.permute.xlu0 1
        %1100 = vperm.xlu0 %1099, %v845
        %v1101 = vpop.permute.xlu0 %1100
        %1103 = vset.pattern.permute.xlu0 1
        %1104 = vperm.xlu0 %1103, %v846
        %v1105 = vpop.permute.xlu0 %1104
        %1107 = vset.pattern.permute.xlu0 1
        %1108 = vperm.xlu0 %1107, %v847
        %v1109 = vpop.permute.xlu0 %1108
        %1111 = vset.pattern.permute.xlu0 1
        %1112 = vperm.xlu0 %1111, %v848
        %v1113 = vpop.permute.xlu0 %1112
        %1115 = vset.pattern.permute.xlu0 1
        %1116 = vperm.xlu0 %1115, %v849
        %v1117 = vpop.permute.xlu0 %1116
        %1119 = vset.pattern.permute.xlu0 1
        %1120 = vperm.xlu0 %1119, %v850
        %v1121 = vpop.permute.xlu0 %1120
        %1123 = vset.pattern.permute.xlu0 1
        %1124 = vperm.xlu0 %1123, %v851
        %v1125 = vpop.permute.xlu0 %1124
        %1127 = vset.pattern.permute.xlu0 1
        %1128 = vperm.xlu0 %1127, %v852
        %v1129 = vpop.permute.xlu0 %1128
        %1131 = vset.pattern.permute.xlu0 1
        %1132 = vperm.xlu0 %1131, %v853
        %v1133 = vpop.permute.xlu0 %1132
        %1135 = vset.pattern.permute.xlu0 1
        %1136 = vperm.xlu0 %1135, %v854
        %v1137 = vpop.permute.xlu0 %1136
        %1139 = vset.pattern.permute.xlu0 1
        %1140 = vperm.xlu0 %1139, %v855
        %v1141 = vpop.permute.xlu0 %1140
        %1143 = vset.pattern.permute.xlu0 1
        %1144 = vperm.xlu0 %1143, %v856
        %v1145 = vpop.permute.xlu0 %1144
        %1147 = vset.pattern.permute.xlu0 1
        %1148 = vperm.xlu0 %1147, %v857
        %v1149 = vpop.permute.xlu0 %1148
        %1151 = vset.pattern.permute.xlu0 1
        %1152 = vperm.xlu0 %1151, %v858
        %v1153 = vpop.permute.xlu0 %1152
        %1155 = vset.pattern.permute.xlu0 1
        %1156 = vperm.xlu0 %1155, %v859
        %v1157 = vpop.permute.xlu0 %1156
        %1159 = vset.pattern.permute.xlu0 1
        %1160 = vperm.xlu0 %1159, %v860
        %v1161 = vpop.permute.xlu0 %1160
        %1163 = vset.pattern.permute.xlu0 1
        %1164 = vperm.xlu0 %1163, %v861
        %v1165 = vpop.permute.xlu0 %1164
        %1167 = vset.pattern.permute.xlu0 1
        %1168 = vperm.xlu0 %1167, %v862
        %v1169 = vpop.permute.xlu0 %1168
        %1171 = vset.pattern.permute.xlu0 1
        %1172 = vperm.xlu0 %1171, %v863
        %v1173 = vpop.permute.xlu0 %1172
        %1175 = vset.pattern.permute.xlu0 1
        %1176 = vperm.xlu0 %1175, %v864
        %v1177 = vpop.permute.xlu0 %1176
        %1179 = vset.pattern.permute.xlu0 1
        %1180 = vperm.xlu0 %1179, %v865
        %v1181 = vpop.permute.xlu0 %1180
        %1183 = vset.pattern.permute.xlu0 1
        %1184 = vperm.xlu0 %1183, %v866
        %v1185 = vpop.permute.xlu0 %1184
        %1187 = vset.pattern.permute.xlu0 1
        %1188 = vperm.xlu0 %1187, %v867
        %v1189 = vpop.permute.xlu0 %1188
        %1191 = vset.pattern.permute.xlu0 1
        %1192 = vperm.xlu0 %1191, %v868
        %v1193 = vpop.permute.xlu0 %1192
        %1195 = vset.pattern.permute.xlu0 1
        %1196 = vperm.xlu0 %1195, %v869
        %v1197 = vpop.permute.xlu0 %1196
        %1199 = vset.pattern.permute.xlu0 1
        %1200 = vperm.xlu0 %1199, %v870
        %v1201 = vpop.permute.xlu0 %1200
        %1203 = vset.pattern.permute.xlu0 1
        %1204 = vperm.xlu0 %1203, %v871
        %v1205 = vpop.permute.xlu0 %1204
        %1207 = vset.pattern.permute.xlu0 1
        %1208 = vperm.xlu0 %1207, %v872
        %v1209 = vpop.permute.xlu0 %1208
        %1211 = vset.pattern.permute.xlu0 1
        %1212 = vperm.xlu0 %1211, %v873
        %v1213 = vpop.permute.xlu0 %1212
        %1215 = vset.pattern.permute.xlu0 1
        %1216 = vperm.xlu0 %1215, %v874
        %v1217 = vpop.permute.xlu0 %1216
        %v1219 = vmul.f32 %v774, %v1093
        %v1220 = vmul.f32 %v775, %v1097
        %v1221 = vmul.f32 %v744, %v1101
        %v1222 = vmul.f32 %v745, %v1105
        %v1223 = vmul.f32 %v746, %v1109
        %v1224 = vmul.f32 %v747, %v1113
        %v1225 = vmul.f32 %v748, %v1117
        %v1226 = vmul.f32 %v749, %v1121
        %v1227 = vmul.f32 %v750, %v1125
        %v1228 = vmul.f32 %v751, %v1129
        %v1229 = vmul.f32 %v752, %v1133
        %v1230 = vmul.f32 %v753, %v1137
        %v1231 = vmul.f32 %v754, %v1141
        %v1232 = vmul.f32 %v755, %v1145
        %v1233 = vmul.f32 %v756, %v1149
        %v1234 = vmul.f32 %v757, %v1153
        %v1235 = vmul.f32 %v758, %v1157
        %v1236 = vmul.f32 %v759, %v1161
        %v1237 = vmul.f32 %v760, %v1165
        %v1238 = vmul.f32 %v761, %v1169
        %v1239 = vmul.f32 %v762, %v1173
        %v1240 = vmul.f32 %v763, %v1177
        %v1241 = vmul.f32 %v764, %v1181
        %v1242 = vmul.f32 %v765, %v1185
        %v1243 = vmul.f32 %v766, %v1189
        %v1244 = vmul.f32 %v767, %v1193
        %v1245 = vmul.f32 %v768, %v1197
        %v1246 = vmul.f32 %v769, %v1201
        %v1247 = vmul.f32 %v770, %v1205
        %v1248 = vmul.f32 %v771, %v1209
        %v1249 = vmul.f32 %v772, %v1213
        %v1250 = vmul.f32 %v773, %v1217
        %v1251 = vpack.c.bf16 %v1220, %v1219
        %v1252 = vpack.c.bf16 %v1222, %v1221
        %v1253 = vpack.c.bf16 %v1224, %v1223
        %v1254 = vpack.c.bf16 %v1226, %v1225
        %v1255 = vpack.c.bf16 %v1228, %v1227
        %v1256 = vpack.c.bf16 %v1230, %v1229
        %v1257 = vpack.c.bf16 %v1232, %v1231
        %v1258 = vpack.c.bf16 %v1234, %v1233
        %v1259 = vpack.c.bf16 %v1236, %v1235
        %v1260 = vpack.c.bf16 %v1238, %v1237
        %v1261 = vpack.c.bf16 %v1240, %v1239
        %v1262 = vpack.c.bf16 %v1242, %v1241
        %v1263 = vpack.c.bf16 %v1244, %v1243
        %v1264 = vpack.c.bf16 %v1246, %v1245
        %v1265 = vpack.c.bf16 %v1248, %v1247
        %v1266 = vpack.c.bf16 %v1250, %v1249
        %v1267 = vld [vmem:[%s2 + $0x20] sm:$0xf]
        %v1268 = vld [vmem:[%s2 + $0x24] sm:$0xf]
        %v1269 = vld [vmem:[%s2 + $0x28] sm:$0xf]
        %v1270 = vld [vmem:[%s2 + $0x2c] sm:$0xf]
        %v1271 = vld [vmem:[%s2 + $0x30] sm:$0xf]
        %v1272 = vld [vmem:[%s2 + $0x34] sm:$0xf]
        %v1273 = vld [vmem:[%s2 + $0x38] sm:$0xf]
        %v1274 = vld [vmem:[%s2 + $0x3c] sm:$0xf]
        %v1283 = vunpack.c.l.b16 %v1267
        %v1284 = vunpack.c.l.b16 %v1268
        %v1285 = vunpack.c.l.b16 %v1269
        %v1286 = vunpack.c.l.b16 %v1270
        %v1287 = vunpack.c.l.b16 %v1271
        %v1288 = vunpack.c.l.b16 %v1272
        %v1289 = vunpack.c.l.b16 %v1273
        %v1290 = vunpack.c.l.b16 %v1274
        %v1291 = vpack.c.b16 %v1284, %v1283
        %v1292 = vpack.c.b16 %v1286, %v1285
        %v1293 = vpack.c.b16 %v1288, %v1287
        %v1294 = vpack.c.b16 %v1290, %v1289
        %vm1299 = vcmask 523264
        %v1301 = vsel %vm1299, %v1251, 0
        %v1304 = vsel %vm1299, %v1252, 0
        %v1307 = vsel %vm1299, %v1253, 0
        %v1310 = vsel %vm1299, %v1254, 0
        %v1313 = vsel %vm1299, %v1255, 0
        %v1316 = vsel %vm1299, %v1256, 0
        %v1319 = vsel %vm1299, %v1257, 0
        %v1322 = vsel %vm1299, %v1258, 0
        %v1325 = vsel %vm1299, %v1259, 0
        %v1328 = vsel %vm1299, %v1260, 0
        %v1331 = vsel %vm1299, %v1261, 0
        %v1334 = vsel %vm1299, %v1262, 0
        %v1337 = vsel %vm1299, %v1263, 0
        %v1340 = vsel %vm1299, %v1264, 0
        %v1343 = vsel %vm1299, %v1265, 0
        %v1346 = vsel %vm1299, %v1266, 0
        %1348 = vmatprep.subr.bf16.mxu0 0
        %1349 = vmatpush1.bf16.msra.mxu0 %v1291
        %1350 = vmatprep.subr.bf16.mxu0 0
        %1351 = vmatpush1.bf16.msra.mxu0 %v1292
        %1352 = vmatprep.subr.bf16.mxu0 0
        %1353 = vmatpush1.bf16.msra.mxu0 %v1293
        %1354 = vmatprep.subr.bf16.mxu0 0
        %1355 = vmatpush1.bf16.msra.mxu0 %v1294
        %1356 = vmatprep.subr.bf16.mxu0 0
        %1357 = vmatpush1.bf16.msra.mxu0 0
        %1358 = vmatprep.subr.bf16.mxu0 0
        %1359 = vmatpush1.bf16.msra.mxu0 0
        %1360 = vmatprep.subr.bf16.mxu0 0
        %1361 = vmatpush1.bf16.msra.mxu0 0
        %1362 = vmatprep.subr.bf16.mxu0 0
        %1363 = vmatpush1.bf16.msra.mxu0 0
        %1364 = vmatprep.subr.bf16.mxu0 0
        %1365 = vmatpush1.bf16.msra.mxu0 0
        %1366 = vmatprep.subr.bf16.mxu0 0
        %1367 = vmatpush1.bf16.msra.mxu0 0
        %1368 = vmatprep.subr.bf16.mxu0 0
        %1369 = vmatpush1.bf16.msra.mxu0 0
        %1370 = vmatprep.subr.bf16.mxu0 0
        %1371 = vmatpush1.bf16.msra.mxu0 0
        %1372 = vmatprep.subr.bf16.mxu0 0
        %1373 = vmatpush1.bf16.msra.mxu0 0
        %1374 = vmatprep.subr.bf16.mxu0 0
        %1375 = vmatpush1.bf16.msra.mxu0 0
        %1376 = vmatprep.subr.bf16.mxu0 0
        %1377 = vmatpush1.bf16.msra.mxu0 0
        %1378 = vmatprep.subr.bf16.mxu0 0
        %1379 = vmatpush1.bf16.msra.mxu0 0
        %1380 = vmatprep.mubr.bf16.mxu0 0
        %1381 = vmatmul.mubr.bf16.gmra.mrb[0].mxu0 %v1301
        %v1382 = vpop.f32.mrb[0].mxu0
        %v1383 = vadd.f32 0.0, %v1382
        %v1384 = vpop.f32.mrb[0].mxu0
        %v1385 = vpop.f32.mrb[0].mxu0
        %v1386 = vadd.f32 0.0, %v1385
        %v1387 = vpop.f32.mrb[0].mxu0
        %1388 = vmatprep.mubr.bf16.mxu0 0
        %1389 = vmatmul.mubr.bf16.gmra.mrb[0].mxu0 %v1304
        %v1390 = vpop.f32.mrb[0].mxu0
        %v1391 = vadd.f32 0.0, %v1390
        %v1392 = vpop.f32.mrb[0].mxu0
        %v1393 = vpop.f32.mrb[0].mxu0
        %v1394 = vadd.f32 0.0, %v1393
        %v1395 = vpop.f32.mrb[0].mxu0
        %1396 = vmatprep.mubr.bf16.mxu0 0
        %1397 = vmatmul.mubr.bf16.gmra.mrb[0].mxu0 %v1307
        %v1398 = vpop.f32.mrb[0].mxu0
        %v1399 = vadd.f32 0.0, %v1398
        %v1400 = vpop.f32.mrb[0].mxu0
        %v1401 = vpop.f32.mrb[0].mxu0
        %v1402 = vadd.f32 0.0, %v1401
        %v1403 = vpop.f32.mrb[0].mxu0
        %1404 = vmatprep.mubr.bf16.mxu0 0
        %1405 = vmatmul.mubr.bf16.gmra.mrb[0].mxu0 %v1310
        %v1406 = vpop.f32.mrb[0].mxu0
        %v1407 = vadd.f32 0.0, %v1406
        %v1408 = vpop.f32.mrb[0].mxu0
        %v1409 = vpop.f32.mrb[0].mxu0
        %v1410 = vadd.f32 0.0, %v1409
        %v1411 = vpop.f32.mrb[0].mxu0
        %1412 = vmatprep.mubr.bf16.mxu0 0
        %1413 = vmatmul.mubr.bf16.gmra.mrb[0].mxu0 %v1313
        %v1414 = vpop.f32.mrb[0].mxu0
        %v1415 = vadd.f32 0.0, %v1414
        %v1416 = vpop.f32.mrb[0].mxu0
        %v1417 = vpop.f32.mrb[0].mxu0
        %v1418 = vadd.f32 0.0, %v1417
        %v1419 = vpop.f32.mrb[0].mxu0
        %1420 = vmatprep.mubr.bf16.mxu0 0
        %1421 = vmatmul.mubr.bf16.gmra.mrb[0].mxu0 %v1316
        %v1422 = vpop.f32.mrb[0].mxu0
        %v1423 = vadd.f32 0.0, %v1422
        %v1424 = vpop.f32.mrb[0].mxu0
        %v1425 = vpop.f32.mrb[0].mxu0
        %v1426 = vadd.f32 0.0, %v1425
        %v1427 = vpop.f32.mrb[0].mxu0
        %1428 = vmatprep.mubr.bf16.mxu0 0
        %1429 = vmatmul.mubr.bf16.gmra.mrb[0].mxu0 %v1319
        %v1430 = vpop.f32.mrb[0].mxu0
        %v1431 = vadd.f32 0.0, %v1430
        %v1432 = vpop.f32.mrb[0].mxu0
        %v1433 = vpop.f32.mrb[0].mxu0
        %v1434 = vadd.f32 0.0, %v1433
        %v1435 = vpop.f32.mrb[0].mxu0
        %1436 = vmatprep.mubr.bf16.mxu0 0
        %1437 = vmatmul.mubr.bf16.gmra.mrb[0].mxu0 %v1322
        %v1438 = vpop.f32.mrb[0].mxu0
        %v1439 = vadd.f32 0.0, %v1438
        %v1440 = vpop.f32.mrb[0].mxu0
        %v1441 = vpop.f32.mrb[0].mxu0
        %v1442 = vadd.f32 0.0, %v1441
        %v1443 = vpop.f32.mrb[0].mxu0
        %1444 = vmatprep.mubr.bf16.mxu0 0
        %1445 = vmatmul.mubr.bf16.gmra.mrb[0].mxu0 %v1325
        %v1446 = vpop.f32.mrb[0].mxu0
        %v1447 = vadd.f32 0.0, %v1446
        %v1448 = vpop.f32.mrb[0].mxu0
        %v1449 = vpop.f32.mrb[0].mxu0
        %v1450 = vadd.f32 0.0, %v1449
        %v1451 = vpop.f32.mrb[0].mxu0
        %1452 = vmatprep.mubr.bf16.mxu0 0
        %1453 = vmatmul.mubr.bf16.gmra.mrb[0].mxu0 %v1328
        %v1454 = vpop.f32.mrb[0].mxu0
        %v1455 = vadd.f32 0.0, %v1454
        %v1456 = vpop.f32.mrb[0].mxu0
        %v1457 = vpop.f32.mrb[0].mxu0
        %v1458 = vadd.f32 0.0, %v1457
        %v1459 = vpop.f32.mrb[0].mxu0
        %1460 = vmatprep.mubr.bf16.mxu0 0
        %1461 = vmatmul.mubr.bf16.gmra.mrb[0].mxu0 %v1331
        %v1462 = vpop.f32.mrb[0].mxu0
        %v1463 = vadd.f32 0.0, %v1462
        %v1464 = vpop.f32.mrb[0].mxu0
        %v1465 = vpop.f32.mrb[0].mxu0
        %v1466 = vadd.f32 0.0, %v1465
        %v1467 = vpop.f32.mrb[0].mxu0
        %1468 = vmatprep.mubr.bf16.mxu0 0
        %1469 = vmatmul.mubr.bf16.gmra.mrb[0].mxu0 %v1334
        %v1470 = vpop.f32.mrb[0].mxu0
        %v1471 = vadd.f32 0.0, %v1470
        %v1472 = vpop.f32.mrb[0].mxu0
        %v1473 = vpop.f32.mrb[0].mxu0
        %v1474 = vadd.f32 0.0, %v1473
        %v1475 = vpop.f32.mrb[0].mxu0
        %1476 = vmatprep.mubr.bf16.mxu0 0
        %1477 = vmatmul.mubr.bf16.gmra.mrb[0].mxu0 %v1337
        %v1478 = vpop.f32.mrb[0].mxu0
        %v1479 = vadd.f32 0.0, %v1478
        %v1480 = vpop.f32.mrb[0].mxu0
        %v1481 = vpop.f32.mrb[0].mxu0
        %v1482 = vadd.f32 0.0, %v1481
        %v1483 = vpop.f32.mrb[0].mxu0
        %1484 = vmatprep.mubr.bf16.mxu0 0
        %1485 = vmatmul.mubr.bf16.gmra.mrb[0].mxu0 %v1340
        %v1486 = vpop.f32.mrb[0].mxu0
        %v1487 = vadd.f32 0.0, %v1486
        %v1488 = vpop.f32.mrb[0].mxu0
        %v1489 = vpop.f32.mrb[0].mxu0
        %v1490 = vadd.f32 0.0, %v1489
        %v1491 = vpop.f32.mrb[0].mxu0
        %1492 = vmatprep.mubr.bf16.mxu0 0
        %1493 = vmatmul.mubr.bf16.gmra.mrb[0].mxu0 %v1343
        %v1494 = vpop.f32.mrb[0].mxu0
        %v1495 = vadd.f32 0.0, %v1494
        %v1496 = vpop.f32.mrb[0].mxu0
        %v1497 = vpop.f32.mrb[0].mxu0
        %v1498 = vadd.f32 0.0, %v1497
        %v1499 = vpop.f32.mrb[0].mxu0
        %1500 = vmatprep.mubr.bf16.mxu0 0
        %1501 = vmatmul.mubr.bf16.gmra.mrb[0].mxu0 %v1346
        %v1502 = vpop.f32.mrb[0].mxu0
        %v1503 = vadd.f32 0.0, %v1502
        %v1504 = vpop.f32.mrb[0].mxu0
        %v1505 = vpop.f32.mrb[0].mxu0
        %v1506 = vadd.f32 0.0, %v1505
        %v1507 = vpop.f32.mrb[0].mxu0
        %1508 = vdwg.mxu0
        %v1517 = vunpack.c.l.b16 %v1083
        %v1518 = vunpack.c.l.b16 %v1084
        %v1519 = vunpack.c.l.b16 %v1085
        %v1520 = vunpack.c.l.b16 %v1086
        %v1521 = vunpack.c.l.b16 %v1087
        %v1522 = vunpack.c.l.b16 %v1088
        %v1523 = vunpack.c.l.b16 %v1089
        %v1524 = vunpack.c.l.b16 %v1090
        %v1525 = vpack.c.b16 %v1518, %v1517
        %v1526 = vpack.c.b16 %v1520, %v1519
        %v1527 = vpack.c.b16 %v1522, %v1521
        %v1528 = vpack.c.b16 %v1524, %v1523
        %v1534 = vsel %vm1299, %v1067, 0
        %v1537 = vsel %vm1299, %v1068, 0
        %v1540 = vsel %vm1299, %v1069, 0
        %v1543 = vsel %vm1299, %v1070, 0
        %v1546 = vsel %vm1299, %v1071, 0
        %v1549 = vsel %vm1299, %v1072, 0
        %v1552 = vsel %vm1299, %v1073, 0
        %v1555 = vsel %vm1299, %v1074, 0
        %v1558 = vsel %vm1299, %v1075, 0
        %v1561 = vsel %vm1299, %v1076, 0
        %v1564 = vsel %vm1299, %v1077, 0
        %v1567 = vsel %vm1299, %v1078, 0
        %v1570 = vsel %vm1299, %v1079, 0
        %v1573 = vsel %vm1299, %v1080, 0
        %v1576 = vsel %vm1299, %v1081, 0
        %v1579 = vsel %vm1299, %v1082, 0
        %1581 = vmatprep.subr.bf16.mxu0 0
        %1582 = vmatpush1.bf16.msra.mxu0 %v1525
        %1583 = vmatprep.subr.bf16.mxu0 0
        %1584 = vmatpush1.bf16.msra.mxu0 %v1526
        %1585 = vmatprep.subr.bf16.mxu0 0
        %1586 = vmatpush1.bf16.msra.mxu0 %v1527
        %1587 = vmatprep.subr.bf16.mxu0 0
        %1588 = vmatpush1.bf16.msra.mxu0 %v1528
        %1589 = vmatprep.subr.bf16.mxu0 0
        %1590 = vmatpush1.bf16.msra.mxu0 0
        %1591 = vmatprep.subr.bf16.mxu0 0
        %1592 = vmatpush1.bf16.msra.mxu0 0
        %1593 = vmatprep.subr.bf16.mxu0 0
        %1594 = vmatpush1.bf16.msra.mxu0 0
        %1595 = vmatprep.subr.bf16.mxu0 0
        %1596 = vmatpush1.bf16.msra.mxu0 0
        %1597 = vmatprep.subr.bf16.mxu0 0
        %1598 = vmatpush1.bf16.msra.mxu0 0
        %1599 = vmatprep.subr.bf16.mxu0 0
        %1600 = vmatpush1.bf16.msra.mxu0 0
        %1601 = vmatprep.subr.bf16.mxu0 0
        %1602 = vmatpush1.bf16.msra.mxu0 0
        %1603 = vmatprep.subr.bf16.mxu0 0
        %1604 = vmatpush1.bf16.msra.mxu0 0
        %1605 = vmatprep.subr.bf16.mxu0 0
        %1606 = vmatpush1.bf16.msra.mxu0 0
        %1607 = vmatprep.subr.bf16.mxu0 0
        %1608 = vmatpush1.bf16.msra.mxu0 0
        %1609 = vmatprep.subr.bf16.mxu0 0
        %1610 = vmatpush1.bf16.msra.mxu0 0
        %1611 = vmatprep.subr.bf16.mxu0 0
        %1612 = vmatpush1.bf16.msra.mxu0 0
        %1613 = vmatprep.mubr.bf16.mxu0 0
        %1614 = vmatmul.mubr.bf16.gmra.mrb[0].mxu0 %v1534
        %v1615 = vpop.f32.mrb[0].mxu0
        %v1616 = vadd.f32 %v1383, %v1615
        %v1617 = vpop.f32.mrb[0].mxu0
        %v1618 = vpop.f32.mrb[0].mxu0
        %v1619 = vadd.f32 %v1386, %v1618
        %v1620 = vpop.f32.mrb[0].mxu0
        %1621 = vmatprep.mubr.bf16.mxu0 0
        %1622 = vmatmul.mubr.bf16.gmra.mrb[0].mxu0 %v1537
        %v1623 = vpop.f32.mrb[0].mxu0
        %v1624 = vadd.f32 %v1391, %v1623
        %v1625 = vpop.f32.mrb[0].mxu0
        %v1626 = vpop.f32.mrb[0].mxu0
        %v1627 = vadd.f32 %v1394, %v1626
        %v1628 = vpop.f32.mrb[0].mxu0
        %1629 = vmatprep.mubr.bf16.mxu0 0
        %1630 = vmatmul.mubr.bf16.gmra.mrb[0].mxu0 %v1540
        %v1631 = vpop.f32.mrb[0].mxu0
        %v1632 = vadd.f32 %v1399, %v1631
        %v1633 = vpop.f32.mrb[0].mxu0
        %v1634 = vpop.f32.mrb[0].mxu0
        %v1635 = vadd.f32 %v1402, %v1634
        %v1636 = vpop.f32.mrb[0].mxu0
        %1637 = vmatprep.mubr.bf16.mxu0 0
        %1638 = vmatmul.mubr.bf16.gmra.mrb[0].mxu0 %v1543
        %v1639 = vpop.f32.mrb[0].mxu0
        %v1640 = vadd.f32 %v1407, %v1639
        %v1641 = vpop.f32.mrb[0].mxu0
        %v1642 = vpop.f32.mrb[0].mxu0
        %v1643 = vadd.f32 %v1410, %v1642
        %v1644 = vpop.f32.mrb[0].mxu0
        %1645 = vmatprep.mubr.bf16.mxu0 0
        %1646 = vmatmul.mubr.bf16.gmra.mrb[0].mxu0 %v1546
        %v1647 = vpop.f32.mrb[0].mxu0
        %v1648 = vadd.f32 %v1415, %v1647
        %v1649 = vpop.f32.mrb[0].mxu0
        %v1650 = vpop.f32.mrb[0].mxu0
        %v1651 = vadd.f32 %v1418, %v1650
        %v1652 = vpop.f32.mrb[0].mxu0
        %1653 = vmatprep.mubr.bf16.mxu0 0
        %1654 = vmatmul.mubr.bf16.gmra.mrb[0].mxu0 %v1549
        %v1655 = vpop.f32.mrb[0].mxu0
        %v1656 = vadd.f32 %v1423, %v1655
        %v1657 = vpop.f32.mrb[0].mxu0
        %v1658 = vpop.f32.mrb[0].mxu0
        %v1659 = vadd.f32 %v1426, %v1658
        %v1660 = vpop.f32.mrb[0].mxu0
        %1661 = vmatprep.mubr.bf16.mxu0 0
        %1662 = vmatmul.mubr.bf16.gmra.mrb[0].mxu0 %v1552
        %v1663 = vpop.f32.mrb[0].mxu0
        %v1664 = vadd.f32 %v1431, %v1663
        %v1665 = vpop.f32.mrb[0].mxu0
        %v1666 = vpop.f32.mrb[0].mxu0
        %v1667 = vadd.f32 %v1434, %v1666
        %v1668 = vpop.f32.mrb[0].mxu0
        %1669 = vmatprep.mubr.bf16.mxu0 0
        %1670 = vmatmul.mubr.bf16.gmra.mrb[0].mxu0 %v1555
        %v1671 = vpop.f32.mrb[0].mxu0
        %v1672 = vadd.f32 %v1439, %v1671
        %v1673 = vpop.f32.mrb[0].mxu0
        %v1674 = vpop.f32.mrb[0].mxu0
        %v1675 = vadd.f32 %v1442, %v1674
        %v1676 = vpop.f32.mrb[0].mxu0
        %1677 = vmatprep.mubr.bf16.mxu0 0
        %1678 = vmatmul.mubr.bf16.gmra.mrb[0].mxu0 %v1558
        %v1679 = vpop.f32.mrb[0].mxu0
        %v1680 = vadd.f32 %v1447, %v1679
        %v1681 = vpop.f32.mrb[0].mxu0
        %v1682 = vpop.f32.mrb[0].mxu0
        %v1683 = vadd.f32 %v1450, %v1682
        %v1684 = vpop.f32.mrb[0].mxu0
        %1685 = vmatprep.mubr.bf16.mxu0 0
        %1686 = vmatmul.mubr.bf16.gmra.mrb[0].mxu0 %v1561
        %v1687 = vpop.f32.mrb[0].mxu0
        %v1688 = vadd.f32 %v1455, %v1687
        %v1689 = vpop.f32.mrb[0].mxu0
        %v1690 = vpop.f32.mrb[0].mxu0
        %v1691 = vadd.f32 %v1458, %v1690
        %v1692 = vpop.f32.mrb[0].mxu0
        %1693 = vmatprep.mubr.bf16.mxu0 0
        %1694 = vmatmul.mubr.bf16.gmra.mrb[0].mxu0 %v1564
        %v1695 = vpop.f32.mrb[0].mxu0
        %v1696 = vadd.f32 %v1463, %v1695
        %v1697 = vpop.f32.mrb[0].mxu0
        %v1698 = vpop.f32.mrb[0].mxu0
        %v1699 = vadd.f32 %v1466, %v1698
        %v1700 = vpop.f32.mrb[0].mxu0
        %1701 = vmatprep.mubr.bf16.mxu0 0
        %1702 = vmatmul.mubr.bf16.gmra.mrb[0].mxu0 %v1567
        %v1703 = vpop.f32.mrb[0].mxu0
        %v1704 = vadd.f32 %v1471, %v1703
        %v1705 = vpop.f32.mrb[0].mxu0
        %v1706 = vpop.f32.mrb[0].mxu0
        %v1707 = vadd.f32 %v1474, %v1706
        %v1708 = vpop.f32.mrb[0].mxu0
        %1709 = vmatprep.mubr.bf16.mxu0 0
        %1710 = vmatmul.mubr.bf16.gmra.mrb[0].mxu0 %v1570
        %v1711 = vpop.f32.mrb[0].mxu0
        %v1712 = vadd.f32 %v1479, %v1711
        %v1713 = vpop.f32.mrb[0].mxu0
        %v1714 = vpop.f32.mrb[0].mxu0
        %v1715 = vadd.f32 %v1482, %v1714
        %v1716 = vpop.f32.mrb[0].mxu0
        %1717 = vmatprep.mubr.bf16.mxu0 0
        %1718 = vmatmul.mubr.bf16.gmra.mrb[0].mxu0 %v1573
        %v1719 = vpop.f32.mrb[0].mxu0
        %v1720 = vadd.f32 %v1487, %v1719
        %v1721 = vpop.f32.mrb[0].mxu0
        %v1722 = vpop.f32.mrb[0].mxu0
        %v1723 = vadd.f32 %v1490, %v1722
        %v1724 = vpop.f32.mrb[0].mxu0
        %1725 = vmatprep.mubr.bf16.mxu0 0
        %1726 = vmatmul.mubr.bf16.gmra.mrb[0].mxu0 %v1576
        %v1727 = vpop.f32.mrb[0].mxu0
        %v1728 = vadd.f32 %v1495, %v1727
        %v1729 = vpop.f32.mrb[0].mxu0
        %v1730 = vpop.f32.mrb[0].mxu0
        %v1731 = vadd.f32 %v1498, %v1730
        %v1732 = vpop.f32.mrb[0].mxu0
        %1733 = vmatprep.mubr.bf16.mxu0 0
        %1734 = vmatmul.mubr.bf16.gmra.mrb[0].mxu0 %v1579
        %v1735 = vpop.f32.mrb[0].mxu0
        %v1736 = vadd.f32 %v1503, %v1735
        %v1737 = vpop.f32.mrb[0].mxu0
        %v1738 = vpop.f32.mrb[0].mxu0
        %v1739 = vadd.f32 %v1506, %v1738
        %v1740 = vpop.f32.mrb[0].mxu0
        %1741 = vdwg.mxu0
        %v1742 = vrot.slane %v744, 1
        %v1743 = vrot.slane %v745, 1
        %v1744 = vrot.slane %v746, 1
        %v1745 = vrot.slane %v747, 1
        %v1746 = vrot.slane %v748, 1
        %v1747 = vrot.slane %v749, 1
        %v1748 = vrot.slane %v750, 1
        %v1749 = vrot.slane %v751, 1
        %v1750 = vrot.slane %v752, 1
        %v1751 = vrot.slane %v753, 1
        %v1752 = vrot.slane %v754, 1
        %v1753 = vrot.slane %v755, 1
        %v1754 = vrot.slane %v756, 1
        %v1755 = vrot.slane %v757, 1
        %v1756 = vrot.slane %v758, 1
        %v1757 = vrot.slane %v759, 1
        %v1758 = vrot.slane %v760, 1
        %v1759 = vrot.slane %v761, 1
        %v1760 = vrot.slane %v762, 1
        %v1761 = vrot.slane %v763, 1
        %v1762 = vrot.slane %v764, 1
        %v1763 = vrot.slane %v765, 1
        %v1764 = vrot.slane %v766, 1
        %v1765 = vrot.slane %v767, 1
        %v1766 = vrot.slane %v768, 1
        %v1767 = vrot.slane %v769, 1
        %v1768 = vrot.slane %v770, 1
        %v1769 = vrot.slane %v771, 1
        %v1770 = vrot.slane %v772, 1
        %v1771 = vrot.slane %v773, 1
        %v1772 = vrot.slane %v774, 1
        %v1773 = vrot.slane %v775, 1
        %vm1774 = vcmp.lt.s32.totalorder %v809, 7
        %v1775 = vsel %vm1774, %v1772, %v1773
        %v1776 = vsel %vm1774, %v1771, %v1772
        %v1777 = vsel %vm1774, %v1770, %v1771
        %v1778 = vsel %vm1774, %v1769, %v1770
        %v1779 = vsel %vm1774, %v1768, %v1769
        %v1780 = vsel %vm1774, %v1767, %v1768
        %v1781 = vsel %vm1774, %v1766, %v1767
        %v1782 = vsel %vm1774, %v1765, %v1766
        %v1783 = vsel %vm1774, %v1764, %v1765
        %v1784 = vsel %vm1774, %v1763, %v1764
        %v1785 = vsel %vm1774, %v1762, %v1763
        %v1786 = vsel %vm1774, %v1761, %v1762
        %v1787 = vsel %vm1774, %v1760, %v1761
        %v1788 = vsel %vm1774, %v1759, %v1760
        %v1789 = vsel %vm1774, %v1758, %v1759
        %v1790 = vsel %vm1774, %v1757, %v1758
        %v1791 = vsel %vm1774, %v1756, %v1757
        %v1792 = vsel %vm1774, %v1755, %v1756
        %v1793 = vsel %vm1774, %v1754, %v1755
        %v1794 = vsel %vm1774, %v1753, %v1754
        %v1795 = vsel %vm1774, %v1752, %v1753
        %v1796 = vsel %vm1774, %v1751, %v1752
        %v1797 = vsel %vm1774, %v1750, %v1751
        %v1798 = vsel %vm1774, %v1749, %v1750
        %v1799 = vsel %vm1774, %v1748, %v1749
        %v1800 = vsel %vm1774, %v1747, %v1748
        %v1801 = vsel %vm1774, %v1746, %v1747
        %v1802 = vsel %vm1774, %v1745, %v1746
        %v1803 = vsel %vm1774, %v1744, %v1745
        %v1804 = vsel %vm1774, %v1743, %v1744
        %v1805 = vsel %vm1774, %v1742, %v1743
        %v1806 = vsel %vm1774, %v1773, %v1742
        %1807 = vset.pattern.permute.xlu0 2
        %1808 = vperm.xlu0 %1807, %v843
        %v1809 = vpop.permute.xlu0 %1808
        %1811 = vset.pattern.permute.xlu0 2
        %1812 = vperm.xlu0 %1811, %v844
        %v1813 = vpop.permute.xlu0 %1812
        %1815 = vset.pattern.permute.xlu0 2
        %1816 = vperm.xlu0 %1815, %v845
        %v1817 = vpop.permute.xlu0 %1816
        %1819 = vset.pattern.permute.xlu0 2
        %1820 = vperm.xlu0 %1819, %v846
        %v1821 = vpop.permute.xlu0 %1820
        %1823 = vset.pattern.permute.xlu0 2
        %1824 = vperm.xlu0 %1823, %v847
        %v1825 = vpop.permute.xlu0 %1824
        %1827 = vset.pattern.permute.xlu0 2
        %1828 = vperm.xlu0 %1827, %v848
        %v1829 = vpop.permute.xlu0 %1828
        %1831 = vset.pattern.permute.xlu0 2
        %1832 = vperm.xlu0 %1831, %v849
        %v1833 = vpop.permute.xlu0 %1832
        %1835 = vset.pattern.permute.xlu0 2
        %1836 = vperm.xlu0 %1835, %v850
        %v1837 = vpop.permute.xlu0 %1836
        %1839 = vset.pattern.permute.xlu0 2
        %1840 = vperm.xlu0 %1839, %v851
        %v1841 = vpop.permute.xlu0 %1840
        %1843 = vset.pattern.permute.xlu0 2
        %1844 = vperm.xlu0 %1843, %v852
        %v1845 = vpop.permute.xlu0 %1844
        %1847 = vset.pattern.permute.xlu0 2
        %1848 = vperm.xlu0 %1847, %v853
        %v1849 = vpop.permute.xlu0 %1848
        %1851 = vset.pattern.permute.xlu0 2
        %1852 = vperm.xlu0 %1851, %v854
        %v1853 = vpop.permute.xlu0 %1852
        %1855 = vset.pattern.permute.xlu0 2
        %1856 = vperm.xlu0 %1855, %v855
        %v1857 = vpop.permute.xlu0 %1856
        %1859 = vset.pattern.permute.xlu0 2
        %1860 = vperm.xlu0 %1859, %v856
        %v1861 = vpop.permute.xlu0 %1860
        %1863 = vset.pattern.permute.xlu0 2
        %1864 = vperm.xlu0 %1863, %v857
        %v1865 = vpop.permute.xlu0 %1864
        %1867 = vset.pattern.permute.xlu0 2
        %1868 = vperm.xlu0 %1867, %v858
        %v1869 = vpop.permute.xlu0 %1868
        %1871 = vset.pattern.permute.xlu0 2
        %1872 = vperm.xlu0 %1871, %v859
        %v1873 = vpop.permute.xlu0 %1872
        %1875 = vset.pattern.permute.xlu0 2
        %1876 = vperm.xlu0 %1875, %v860
        %v1877 = vpop.permute.xlu0 %1876
        %1879 = vset.pattern.permute.xlu0 2
        %1880 = vperm.xlu0 %1879, %v861
        %v1881 = vpop.permute.xlu0 %1880
        %1883 = vset.pattern.permute.xlu0 2
        %1884 = vperm.xlu0 %1883, %v862
        %v1885 = vpop.permute.xlu0 %1884
        %1887 = vset.pattern.permute.xlu0 2
        %1888 = vperm.xlu0 %1887, %v863
        %v1889 = vpop.permute.xlu0 %1888
        %1891 = vset.pattern.permute.xlu0 2
        %1892 = vperm.xlu0 %1891, %v864
        %v1893 = vpop.permute.xlu0 %1892
        %1895 = vset.pattern.permute.xlu0 2
        %1896 = vperm.xlu0 %1895, %v865
        %v1897 = vpop.permute.xlu0 %1896
        %1899 = vset.pattern.permute.xlu0 2
        %1900 = vperm.xlu0 %1899, %v866
        %v1901 = vpop.permute.xlu0 %1900
        %1903 = vset.pattern.permute.xlu0 2
        %1904 = vperm.xlu0 %1903, %v867
        %v1905 = vpop.permute.xlu0 %1904
        %1907 = vset.pattern.permute.xlu0 2
        %1908 = vperm.xlu0 %1907, %v868
        %v1909 = vpop.permute.xlu0 %1908
        %1911 = vset.pattern.permute.xlu0 2
        %1912 = vperm.xlu0 %1911, %v869
        %v1913 = vpop.permute.xlu0 %1912
        %1915 = vset.pattern.permute.xlu0 2
        %1916 = vperm.xlu0 %1915, %v870
        %v1917 = vpop.permute.xlu0 %1916
        %1919 = vset.pattern.permute.xlu0 2
        %1920 = vperm.xlu0 %1919, %v871
        %v1921 = vpop.permute.xlu0 %1920
        %1923 = vset.pattern.permute.xlu0 2
        %1924 = vperm.xlu0 %1923, %v872
        %v1925 = vpop.permute.xlu0 %1924
        %1927 = vset.pattern.permute.xlu0 2
        %1928 = vperm.xlu0 %1927, %v873
        %v1929 = vpop.permute.xlu0 %1928
        %1931 = vset.pattern.permute.xlu0 2
        %1932 = vperm.xlu0 %1931, %v874
        %v1933 = vpop.permute.xlu0 %1932
        %v1935 = vmul.f32 %v1775, %v1809
        %v1936 = vmul.f32 %v1806, %v1813
        %v1937 = vmul.f32 %v1805, %v1817
        %v1938 = vmul.f32 %v1804, %v1821
        %v1939 = vmul.f32 %v1803, %v1825
        %v1940 = vmul.f32 %v1802, %v1829
        %v1941 = vmul.f32 %v1801, %v1833
        %v1942 = vmul.f32 %v1800, %v1837
        %v1943 = vmul.f32 %v1799, %v1841
        %v1944 = vmul.f32 %v1798, %v1845
        %v1945 = vmul.f32 %v1797, %v1849
        %v1946 = vmul.f32 %v1796, %v1853
        %v1947 = vmul.f32 %v1795, %v1857
        %v1948 = vmul.f32 %v1794, %v1861
        %v1949 = vmul.f32 %v1793, %v1865
        %v1950 = vmul.f32 %v1792, %v1869
        %v1951 = vmul.f32 %v1791, %v1873
        %v1952 = vmul.f32 %v1790, %v1877
        %v1953 = vmul.f32 %v1789, %v1881
        %v1954 = vmul.f32 %v1788, %v1885
        %v1955 = vmul.f32 %v1787, %v1889
        %v1956 = vmul.f32 %v1786, %v1893
        %v1957 = vmul.f32 %v1785, %v1897
        %v1958 = vmul.f32 %v1784, %v1901
        %v1959 = vmul.f32 %v1783, %v1905
        %v1960 = vmul.f32 %v1782, %v1909
        %v1961 = vmul.f32 %v1781, %v1913
        %v1962 = vmul.f32 %v1780, %v1917
        %v1963 = vmul.f32 %v1779, %v1921
        %v1964 = vmul.f32 %v1778, %v1925
        %v1965 = vmul.f32 %v1777, %v1929
        %v1966 = vmul.f32 %v1776, %v1933
        %v1967 = vpack.c.bf16 %v1936, %v1935
        %v1968 = vpack.c.bf16 %v1938, %v1937
        %v1969 = vpack.c.bf16 %v1940, %v1939
        %v1970 = vpack.c.bf16 %v1942, %v1941
        %v1971 = vpack.c.bf16 %v1944, %v1943
        %v1972 = vpack.c.bf16 %v1946, %v1945
        %v1973 = vpack.c.bf16 %v1948, %v1947
        %v1974 = vpack.c.bf16 %v1950, %v1949
        %v1975 = vpack.c.bf16 %v1952, %v1951
        %v1976 = vpack.c.bf16 %v1954, %v1953
        %v1977 = vpack.c.bf16 %v1956, %v1955
        %v1978 = vpack.c.bf16 %v1958, %v1957
        %v1979 = vpack.c.bf16 %v1960, %v1959
        %v1980 = vpack.c.bf16 %v1962, %v1961
        %v1981 = vpack.c.bf16 %v1964, %v1963
        %v1982 = vpack.c.bf16 %v1966, %v1965
        %v1983 = vld [vmem:[%s2 + $0x40] sm:$0xf]
        %v1984 = vld [vmem:[%s2 + $0x44] sm:$0xf]
        %v1985 = vld [vmem:[%s2 + $0x48] sm:$0xf]
        %v1986 = vld [vmem:[%s2 + $0x4c] sm:$0xf]
        %v1987 = vld [vmem:[%s2 + $0x50] sm:$0xf]
        %v1988 = vld [vmem:[%s2 + $0x54] sm:$0xf]
        %v1989 = vld [vmem:[%s2 + $0x58] sm:$0xf]
        %v1990 = vld [vmem:[%s2 + $0x5c] sm:$0xf]
        %v1999 = vunpack.c.l.b16 %v1983
        %v2000 = vunpack.c.l.b16 %v1984
        %v2001 = vunpack.c.l.b16 %v1985
        %v2002 = vunpack.c.l.b16 %v1986
        %v2003 = vunpack.c.l.b16 %v1987
        %v2004 = vunpack.c.l.b16 %v1988
        %v2005 = vunpack.c.l.b16 %v1989
        %v2006 = vunpack.c.l.b16 %v1990
        %v2007 = vpack.c.b16 %v2000, %v1999
        %v2008 = vpack.c.b16 %v2002, %v2001
        %v2009 = vpack.c.b16 %v2004, %v2003
        %v2010 = vpack.c.b16 %v2006, %v2005
        %v2016 = vsel %vm1299, %v1967, 0
        %v2019 = vsel %vm1299, %v1968, 0
        %v2022 = vsel %vm1299, %v1969, 0
        %v2025 = vsel %vm1299, %v1970, 0
        %v2028 = vsel %vm1299, %v1971, 0
        %v2031 = vsel %vm1299, %v1972, 0
        %v2034 = vsel %vm1299, %v1973, 0
        %v2037 = vsel %vm1299, %v1974, 0
        %v2040 = vsel %vm1299, %v1975, 0
        %v2043 = vsel %vm1299, %v1976, 0
        %v2046 = vsel %vm1299, %v1977, 0
        %v2049 = vsel %vm1299, %v1978, 0
        %v2052 = vsel %vm1299, %v1979, 0
        %v2055 = vsel %vm1299, %v1980, 0
        %v2058 = vsel %vm1299, %v1981, 0
        %v2061 = vsel %vm1299, %v1982, 0
        %2063 = vmatprep.subr.bf16.mxu0 0
        %2064 = vmatpush1.bf16.msra.mxu0 %v2007
        %2065 = vmatprep.subr.bf16.mxu0 0
        %2066 = vmatpush1.bf16.msra.mxu0 %v2008
        %2067 = vmatprep.subr.bf16.mxu0 0
        %2068 = vmatpush1.bf16.msra.mxu0 %v2009
        %2069 = vmatprep.subr.bf16.mxu0 0
        %2070 = vmatpush1.bf16.msra.mxu0 %v2010
        %2071 = vmatprep.subr.bf16.mxu0 0
        %2072 = vmatpush1.bf16.msra.mxu0 0
        %2073 = vmatprep.subr.bf16.mxu0 0
        %2074 = vmatpush1.bf16.msra.mxu0 0
        %2075 = vmatprep.subr.bf16.mxu0 0
        %2076 = vmatpush1.bf16.msra.mxu0 0
        %2077 = vmatprep.subr.bf16.mxu0 0
        %2078 = vmatpush1.bf16.msra.mxu0 0
        %2079 = vmatprep.subr.bf16.mxu0 0
        %2080 = vmatpush1.bf16.msra.mxu0 0
        %2081 = vmatprep.subr.bf16.mxu0 0
        %2082 = vmatpush1.bf16.msra.mxu0 0
        %2083 = vmatprep.subr.bf16.mxu0 0
        %2084 = vmatpush1.bf16.msra.mxu0 0
        %2085 = vmatprep.subr.bf16.mxu0 0
        %2086 = vmatpush1.bf16.msra.mxu0 0
        %2087 = vmatprep.subr.bf16.mxu0 0
        %2088 = vmatpush1.bf16.msra.mxu0 0
        %2089 = vmatprep.subr.bf16.mxu0 0
        %2090 = vmatpush1.bf16.msra.mxu0 0
        %2091 = vmatprep.subr.bf16.mxu0 0
        %2092 = vmatpush1.bf16.msra.mxu0 0
        %2093 = vmatprep.subr.bf16.mxu0 0
        %2094 = vmatpush1.bf16.msra.mxu0 0
        %2095 = vmatprep.mubr.bf16.mxu0 0
        %2096 = vmatmul.mubr.bf16.gmra.mrb[0].mxu0 %v2016
        %v2097 = vpop.f32.mrb[0].mxu0
        %v2098 = vadd.f32 0.0, %v2097
        %v2099 = vpop.f32.mrb[0].mxu0
        %v2100 = vpop.f32.mrb[0].mxu0
        %v2101 = vadd.f32 0.0, %v2100
        %v2102 = vpop.f32.mrb[0].mxu0
        %2103 = vmatprep.mubr.bf16.mxu0 0
        %2104 = vmatmul.mubr.bf16.gmra.mrb[0].mxu0 %v2019
        %v2105 = vpop.f32.mrb[0].mxu0
        %v2106 = vadd.f32 0.0, %v2105
        %v2107 = vpop.f32.mrb[0].mxu0
        %v2108 = vpop.f32.mrb[0].mxu0
        %v2109 = vadd.f32 0.0, %v2108
        %v2110 = vpop.f32.mrb[0].mxu0
        %2111 = vmatprep.mubr.bf16.mxu0 0
        %2112 = vmatmul.mubr.bf16.gmra.mrb[0].mxu0 %v2022
        %v2113 = vpop.f32.mrb[0].mxu0
        %v2114 = vadd.f32 0.0, %v2113
        %v2115 = vpop.f32.mrb[0].mxu0
        %v2116 = vpop.f32.mrb[0].mxu0
        %v2117 = vadd.f32 0.0, %v2116
        %v2118 = vpop.f32.mrb[0].mxu0
        %2119 = vmatprep.mubr.bf16.mxu0 0
        %2120 = vmatmul.mubr.bf16.gmra.mrb[0].mxu0 %v2025
        %v2121 = vpop.f32.mrb[0].mxu0
        %v2122 = vadd.f32 0.0, %v2121
        %v2123 = vpop.f32.mrb[0].mxu0
        %v2124 = vpop.f32.mrb[0].mxu0
        %v2125 = vadd.f32 0.0, %v2124
        %v2126 = vpop.f32.mrb[0].mxu0
        %2127 = vmatprep.mubr.bf16.mxu0 0
        %2128 = vmatmul.mubr.bf16.gmra.mrb[0].mxu0 %v2028
        %v2129 = vpop.f32.mrb[0].mxu0
        %v2130 = vadd.f32 0.0, %v2129
        %v2131 = vpop.f32.mrb[0].mxu0
        %v2132 = vpop.f32.mrb[0].mxu0
        %v2133 = vadd.f32 0.0, %v2132
        %v2134 = vpop.f32.mrb[0].mxu0
        %2135 = vmatprep.mubr.bf16.mxu0 0
        %2136 = vmatmul.mubr.bf16.gmra.mrb[0].mxu0 %v2031
        %v2137 = vpop.f32.mrb[0].mxu0
        %v2138 = vadd.f32 0.0, %v2137
        %v2139 = vpop.f32.mrb[0].mxu0
        %v2140 = vpop.f32.mrb[0].mxu0
        %v2141 = vadd.f32 0.0, %v2140
        %v2142 = vpop.f32.mrb[0].mxu0
        %2143 = vmatprep.mubr.bf16.mxu0 0
        %2144 = vmatmul.mubr.bf16.gmra.mrb[0].mxu0 %v2034
        %v2145 = vpop.f32.mrb[0].mxu0
        %v2146 = vadd.f32 0.0, %v2145
        %v2147 = vpop.f32.mrb[0].mxu0
        %v2148 = vpop.f32.mrb[0].mxu0
        %v2149 = vadd.f32 0.0, %v2148
        %v2150 = vpop.f32.mrb[0].mxu0
        %2151 = vmatprep.mubr.bf16.mxu0 0
        %2152 = vmatmul.mubr.bf16.gmra.mrb[0].mxu0 %v2037
        %v2153 = vpop.f32.mrb[0].mxu0
        %v2154 = vadd.f32 0.0, %v2153
        %v2155 = vpop.f32.mrb[0].mxu0
        %v2156 = vpop.f32.mrb[0].mxu0
        %v2157 = vadd.f32 0.0, %v2156
        %v2158 = vpop.f32.mrb[0].mxu0
        %2159 = vmatprep.mubr.bf16.mxu0 0
        %2160 = vmatmul.mubr.bf16.gmra.mrb[0].mxu0 %v2040
        %v2161 = vpop.f32.mrb[0].mxu0
        %v2162 = vadd.f32 0.0, %v2161
        %v2163 = vpop.f32.mrb[0].mxu0
        %v2164 = vpop.f32.mrb[0].mxu0
        %v2165 = vadd.f32 0.0, %v2164
        %v2166 = vpop.f32.mrb[0].mxu0
        %2167 = vmatprep.mubr.bf16.mxu0 0
        %2168 = vmatmul.mubr.bf16.gmra.mrb[0].mxu0 %v2043
        %v2169 = vpop.f32.mrb[0].mxu0
        %v2170 = vadd.f32 0.0, %v2169
        %v2171 = vpop.f32.mrb[0].mxu0
        %v2172 = vpop.f32.mrb[0].mxu0
        %v2173 = vadd.f32 0.0, %v2172
        %v2174 = vpop.f32.mrb[0].mxu0
        %2175 = vmatprep.mubr.bf16.mxu0 0
        %2176 = vmatmul.mubr.bf16.gmra.mrb[0].mxu0 %v2046
        %v2177 = vpop.f32.mrb[0].mxu0
        %v2178 = vadd.f32 0.0, %v2177
        %v2179 = vpop.f32.mrb[0].mxu0
        %v2180 = vpop.f32.mrb[0].mxu0
        %v2181 = vadd.f32 0.0, %v2180
        %v2182 = vpop.f32.mrb[0].mxu0
        %2183 = vmatprep.mubr.bf16.mxu0 0
        %2184 = vmatmul.mubr.bf16.gmra.mrb[0].mxu0 %v2049
        %v2185 = vpop.f32.mrb[0].mxu0
        %v2186 = vadd.f32 0.0, %v2185
        %v2187 = vpop.f32.mrb[0].mxu0
        %v2188 = vpop.f32.mrb[0].mxu0
        %v2189 = vadd.f32 0.0, %v2188
        %v2190 = vpop.f32.mrb[0].mxu0
        %2191 = vmatprep.mubr.bf16.mxu0 0
        %2192 = vmatmul.mubr.bf16.gmra.mrb[0].mxu0 %v2052
        %v2193 = vpop.f32.mrb[0].mxu0
        %v2194 = vadd.f32 0.0, %v2193
        %v2195 = vpop.f32.mrb[0].mxu0
        %v2196 = vpop.f32.mrb[0].mxu0
        %v2197 = vadd.f32 0.0, %v2196
        %v2198 = vpop.f32.mrb[0].mxu0
        %2199 = vmatprep.mubr.bf16.mxu0 0
        %2200 = vmatmul.mubr.bf16.gmra.mrb[0].mxu0 %v2055
        %v2201 = vpop.f32.mrb[0].mxu0
        %v2202 = vadd.f32 0.0, %v2201
        %v2203 = vpop.f32.mrb[0].mxu0
        %v2204 = vpop.f32.mrb[0].mxu0
        %v2205 = vadd.f32 0.0, %v2204
        %v2206 = vpop.f32.mrb[0].mxu0
        %2207 = vmatprep.mubr.bf16.mxu0 0
        %2208 = vmatmul.mubr.bf16.gmra.mrb[0].mxu0 %v2058
        %v2209 = vpop.f32.mrb[0].mxu0
        %v2210 = vadd.f32 0.0, %v2209
        %v2211 = vpop.f32.mrb[0].mxu0
        %v2212 = vpop.f32.mrb[0].mxu0
        %v2213 = vadd.f32 0.0, %v2212
        %v2214 = vpop.f32.mrb[0].mxu0
        %2215 = vmatprep.mubr.bf16.mxu0 0
        %2216 = vmatmul.mubr.bf16.gmra.mrb[0].mxu0 %v2061
        %v2217 = vpop.f32.mrb[0].mxu0
        %v2218 = vadd.f32 0.0, %v2217
        %v2219 = vpop.f32.mrb[0].mxu0
        %v2220 = vpop.f32.mrb[0].mxu0
        %v2221 = vadd.f32 0.0, %v2220
        %v2222 = vpop.f32.mrb[0].mxu0
        %2223 = vdwg.mxu0
        %v2224 = vadd.f32 %v1616, %v2098
        %v2225 = vadd.f32 %v1619, %v2101
        %v2226 = vadd.f32 %v1624, %v2106
        %v2227 = vadd.f32 %v1627, %v2109
        %v2228 = vadd.f32 %v1632, %v2114
        %v2229 = vadd.f32 %v1635, %v2117
        %v2230 = vadd.f32 %v1640, %v2122
        %v2231 = vadd.f32 %v1643, %v2125
        %v2232 = vadd.f32 %v1648, %v2130
        %v2233 = vadd.f32 %v1651, %v2133
        %v2234 = vadd.f32 %v1656, %v2138
        %v2235 = vadd.f32 %v1659, %v2141
        %v2236 = vadd.f32 %v1664, %v2146
        %v2237 = vadd.f32 %v1667, %v2149
        %v2238 = vadd.f32 %v1672, %v2154
        %v2239 = vadd.f32 %v1675, %v2157
        %v2240 = vadd.f32 %v1680, %v2162
        %v2241 = vadd.f32 %v1683, %v2165
        %v2242 = vadd.f32 %v1688, %v2170
        %v2243 = vadd.f32 %v1691, %v2173
        %v2244 = vadd.f32 %v1696, %v2178
        %v2245 = vadd.f32 %v1699, %v2181
        %v2246 = vadd.f32 %v1704, %v2186
        %v2247 = vadd.f32 %v1707, %v2189
        %v2248 = vadd.f32 %v1712, %v2194
        %v2249 = vadd.f32 %v1715, %v2197
        %v2250 = vadd.f32 %v1720, %v2202
        %v2251 = vadd.f32 %v1723, %v2205
        %v2252 = vadd.f32 %v1728, %v2210
        %v2253 = vadd.f32 %v1731, %v2213
        %v2254 = vadd.f32 %v1736, %v2218
        %v2255 = vadd.f32 %v1739, %v2221
        %2256 = vset.pattern.permute.xlu0 3
        %2257 = vperm.xlu0 %2256, %v843
        %v2258 = vpop.permute.xlu0 %2257
        %2260 = vset.pattern.permute.xlu0 3
        %2261 = vperm.xlu0 %2260, %v844
        %v2262 = vpop.permute.xlu0 %2261
        %2264 = vset.pattern.permute.xlu0 3
        %2265 = vperm.xlu0 %2264, %v845
        %v2266 = vpop.permute.xlu0 %2265
        %2268 = vset.pattern.permute.xlu0 3
        %2269 = vperm.xlu0 %2268, %v846
        %v2270 = vpop.permute.xlu0 %2269
        %2272 = vset.pattern.permute.xlu0 3
        %2273 = vperm.xlu0 %2272, %v847
        %v2274 = vpop.permute.xlu0 %2273
        %2276 = vset.pattern.permute.xlu0 3
        %2277 = vperm.xlu0 %2276, %v848
        %v2278 = vpop.permute.xlu0 %2277
        %2280 = vset.pattern.permute.xlu0 3
        %2281 = vperm.xlu0 %2280, %v849
        %v2282 = vpop.permute.xlu0 %2281
        %2284 = vset.pattern.permute.xlu0 3
        %2285 = vperm.xlu0 %2284, %v850
        %v2286 = vpop.permute.xlu0 %2285
        %2288 = vset.pattern.permute.xlu0 3
        %2289 = vperm.xlu0 %2288, %v851
        %v2290 = vpop.permute.xlu0 %2289
        %2292 = vset.pattern.permute.xlu0 3
        %2293 = vperm.xlu0 %2292, %v852
        %v2294 = vpop.permute.xlu0 %2293
        %2296 = vset.pattern.permute.xlu0 3
        %2297 = vperm.xlu0 %2296, %v853
        %v2298 = vpop.permute.xlu0 %2297
        %2300 = vset.pattern.permute.xlu0 3
        %2301 = vperm.xlu0 %2300, %v854
        %v2302 = vpop.permute.xlu0 %2301
        %2304 = vset.pattern.permute.xlu0 3
        %2305 = vperm.xlu0 %2304, %v855
        %v2306 = vpop.permute.xlu0 %2305
        %2308 = vset.pattern.permute.xlu0 3
        %2309 = vperm.xlu0 %2308, %v856
        %v2310 = vpop.permute.xlu0 %2309
        %2312 = vset.pattern.permute.xlu0 3
        %2313 = vperm.xlu0 %2312, %v857
        %v2314 = vpop.permute.xlu0 %2313
        %2316 = vset.pattern.permute.xlu0 3
        %2317 = vperm.xlu0 %2316, %v858
        %v2318 = vpop.permute.xlu0 %2317
        %2320 = vset.pattern.permute.xlu0 3
        %2321 = vperm.xlu0 %2320, %v859
        %v2322 = vpop.permute.xlu0 %2321
        %2324 = vset.pattern.permute.xlu0 3
        %2325 = vperm.xlu0 %2324, %v860
        %v2326 = vpop.permute.xlu0 %2325
        %2328 = vset.pattern.permute.xlu0 3
        %2329 = vperm.xlu0 %2328, %v861
        %v2330 = vpop.permute.xlu0 %2329
        %2332 = vset.pattern.permute.xlu0 3
        %2333 = vperm.xlu0 %2332, %v862
        %v2334 = vpop.permute.xlu0 %2333
        %2336 = vset.pattern.permute.xlu0 3
        %2337 = vperm.xlu0 %2336, %v863
        %v2338 = vpop.permute.xlu0 %2337
        %2340 = vset.pattern.permute.xlu0 3
        %2341 = vperm.xlu0 %2340, %v864
        %v2342 = vpop.permute.xlu0 %2341
        %2344 = vset.pattern.permute.xlu0 3
        %2345 = vperm.xlu0 %2344, %v865
        %v2346 = vpop.permute.xlu0 %2345
        %2348 = vset.pattern.permute.xlu0 3
        %2349 = vperm.xlu0 %2348, %v866
        %v2350 = vpop.permute.xlu0 %2349
        %2352 = vset.pattern.permute.xlu0 3
        %2353 = vperm.xlu0 %2352, %v867
        %v2354 = vpop.permute.xlu0 %2353
        %2356 = vset.pattern.permute.xlu0 3
        %2357 = vperm.xlu0 %2356, %v868
        %v2358 = vpop.permute.xlu0 %2357
        %2360 = vset.pattern.permute.xlu0 3
        %2361 = vperm.xlu0 %2360, %v869
        %v2362 = vpop.permute.xlu0 %2361
        %2364 = vset.pattern.permute.xlu0 3
        %2365 = vperm.xlu0 %2364, %v870
        %v2366 = vpop.permute.xlu0 %2365
        %2368 = vset.pattern.permute.xlu0 3
        %2369 = vperm.xlu0 %2368, %v871
        %v2370 = vpop.permute.xlu0 %2369
        %2372 = vset.pattern.permute.xlu0 3
        %2373 = vperm.xlu0 %2372, %v872
        %v2374 = vpop.permute.xlu0 %2373
        %2376 = vset.pattern.permute.xlu0 3
        %2377 = vperm.xlu0 %2376, %v873
        %v2378 = vpop.permute.xlu0 %2377
        %2380 = vset.pattern.permute.xlu0 3
        %2381 = vperm.xlu0 %2380, %v874
        %v2382 = vpop.permute.xlu0 %2381
        %v2384 = vmul.f32 %v842, %v2258
        %v2385 = vmul.f32 %v841, %v2262
        %v2386 = vmul.f32 %v840, %v2266
        %v2387 = vmul.f32 %v839, %v2270
        %v2388 = vmul.f32 %v838, %v2274
        %v2389 = vmul.f32 %v837, %v2278
        %v2390 = vmul.f32 %v836, %v2282
        %v2391 = vmul.f32 %v835, %v2286
        %v2392 = vmul.f32 %v834, %v2290
        %v2393 = vmul.f32 %v833, %v2294
        %v2394 = vmul.f32 %v832, %v2298
        %v2395 = vmul.f32 %v831, %v2302
        %v2396 = vmul.f32 %v830, %v2306
        %v2397 = vmul.f32 %v829, %v2310
        %v2398 = vmul.f32 %v828, %v2314
        %v2399 = vmul.f32 %v827, %v2318
        %v2400 = vmul.f32 %v826, %v2322
        %v2401 = vmul.f32 %v825, %v2326
        %v2402 = vmul.f32 %v824, %v2330
        %v2403 = vmul.f32 %v823, %v2334
        %v2404 = vmul.f32 %v822, %v2338
        %v2405 = vmul.f32 %v821, %v2342
        %v2406 = vmul.f32 %v820, %v2346
        %v2407 = vmul.f32 %v819, %v2350
        %v2408 = vmul.f32 %v818, %v2354
        %v2409 = vmul.f32 %v817, %v2358
        %v2410 = vmul.f32 %v816, %v2362
        %v2411 = vmul.f32 %v815, %v2366
        %v2412 = vmul.f32 %v814, %v2370
        %v2413 = vmul.f32 %v813, %v2374
        %v2414 = vmul.f32 %v812, %v2378
        %v2415 = vmul.f32 %v811, %v2382
        %v2416 = vpack.c.bf16 %v2385, %v2384
        %v2417 = vpack.c.bf16 %v2387, %v2386
        %v2418 = vpack.c.bf16 %v2389, %v2388
        %v2419 = vpack.c.bf16 %v2391, %v2390
        %v2420 = vpack.c.bf16 %v2393, %v2392
        %v2421 = vpack.c.bf16 %v2395, %v2394
        %v2422 = vpack.c.bf16 %v2397, %v2396
        %v2423 = vpack.c.bf16 %v2399, %v2398
        %v2424 = vpack.c.bf16 %v2401, %v2400
        %v2425 = vpack.c.bf16 %v2403, %v2402
        %v2426 = vpack.c.bf16 %v2405, %v2404
        %v2427 = vpack.c.bf16 %v2407, %v2406
        %v2428 = vpack.c.bf16 %v2409, %v2408
        %v2429 = vpack.c.bf16 %v2411, %v2410
        %v2430 = vpack.c.bf16 %v2413, %v2412
        %v2431 = vpack.c.bf16 %v2415, %v2414
        %v2432 = vld [vmem:[%s2 + $0x60] sm:$0xf]
        %v2433 = vld [vmem:[%s2 + $0x64] sm:$0xf]
        %v2434 = vld [vmem:[%s2 + $0x68] sm:$0xf]
        %v2435 = vld [vmem:[%s2 + $0x6c] sm:$0xf]
        %v2436 = vld [vmem:[%s2 + $0x70] sm:$0xf]
        %v2437 = vld [vmem:[%s2 + $0x74] sm:$0xf]
        %v2438 = vld [vmem:[%s2 + $0x78] sm:$0xf]
        %v2439 = vld [vmem:[%s2 + $0x7c] sm:$0xf]
        %v2448 = vunpack.c.l.b16 %v2432
        %v2449 = vunpack.c.l.b16 %v2433
        %v2450 = vunpack.c.l.b16 %v2434
        %v2451 = vunpack.c.l.b16 %v2435
        %v2452 = vunpack.c.l.b16 %v2436
        %v2453 = vunpack.c.l.b16 %v2437
        %v2454 = vunpack.c.l.b16 %v2438
        %v2455 = vunpack.c.l.b16 %v2439
        %v2456 = vpack.c.b16 %v2449, %v2448
        %v2457 = vpack.c.b16 %v2451, %v2450
        %v2458 = vpack.c.b16 %v2453, %v2452
        %v2459 = vpack.c.b16 %v2455, %v2454
        %v2465 = vsel %vm1299, %v2416, 0
        %v2468 = vsel %vm1299, %v2417, 0
        %v2471 = vsel %vm1299, %v2418, 0
        %v2474 = vsel %vm1299, %v2419, 0
        %v2477 = vsel %vm1299, %v2420, 0
        %v2480 = vsel %vm1299, %v2421, 0
        %v2483 = vsel %vm1299, %v2422, 0
        %v2486 = vsel %vm1299, %v2423, 0
        %v2489 = vsel %vm1299, %v2424, 0
        %v2492 = vsel %vm1299, %v2425, 0
        %v2495 = vsel %vm1299, %v2426, 0
        %v2498 = vsel %vm1299, %v2427, 0
        %v2501 = vsel %vm1299, %v2428, 0
        %v2504 = vsel %vm1299, %v2429, 0
        %v2507 = vsel %vm1299, %v2430, 0
        %v2510 = vsel %vm1299, %v2431, 0
        %2512 = vmatprep.subr.bf16.mxu0 0
        %2513 = vmatpush1.bf16.msra.mxu0 %v2456
        %2514 = vmatprep.subr.bf16.mxu0 0
        %2515 = vmatpush1.bf16.msra.mxu0 %v2457
        %2516 = vmatprep.subr.bf16.mxu0 0
        %2517 = vmatpush1.bf16.msra.mxu0 %v2458
        %2518 = vmatprep.subr.bf16.mxu0 0
        %2519 = vmatpush1.bf16.msra.mxu0 %v2459
        %2520 = vmatprep.subr.bf16.mxu0 0
        %2521 = vmatpush1.bf16.msra.mxu0 0
        %2522 = vmatprep.subr.bf16.mxu0 0
        %2523 = vmatpush1.bf16.msra.mxu0 0
        %2524 = vmatprep.subr.bf16.mxu0 0
        %2525 = vmatpush1.bf16.msra.mxu0 0
        %2526 = vmatprep.subr.bf16.mxu0 0
        %2527 = vmatpush1.bf16.msra.mxu0 0
        %2528 = vmatprep.subr.bf16.mxu0 0
        %2529 = vmatpush1.bf16.msra.mxu0 0
        %2530 = vmatprep.subr.bf16.mxu0 0
        %2531 = vmatpush1.bf16.msra.mxu0 0
        %2532 = vmatprep.subr.bf16.mxu0 0
        %2533 = vmatpush1.bf16.msra.mxu0 0
        %2534 = vmatprep.subr.bf16.mxu0 0
        %2535 = vmatpush1.bf16.msra.mxu0 0
        %2536 = vmatprep.subr.bf16.mxu0 0
        %2537 = vmatpush1.bf16.msra.mxu0 0
        %2538 = vmatprep.subr.bf16.mxu0 0
        %2539 = vmatpush1.bf16.msra.mxu0 0
        %2540 = vmatprep.subr.bf16.mxu0 0
        %2541 = vmatpush1.bf16.msra.mxu0 0
        %2542 = vmatprep.subr.bf16.mxu0 0
        %2543 = vmatpush1.bf16.msra.mxu0 0
        %2544 = vmatprep.mubr.bf16.mxu0 0
        %2545 = vmatmul.mubr.bf16.gmra.mrb[0].mxu0 %v2465
        %v2546 = vpop.f32.mrb[0].mxu0
        %v2547 = vadd.f32 0.0, %v2546
        %v2548 = vpop.f32.mrb[0].mxu0
        %v2549 = vpop.f32.mrb[0].mxu0
        %v2550 = vadd.f32 0.0, %v2549
        %v2551 = vpop.f32.mrb[0].mxu0
        %2552 = vmatprep.mubr.bf16.mxu0 0
        %2553 = vmatmul.mubr.bf16.gmra.mrb[0].mxu0 %v2468
        %v2554 = vpop.f32.mrb[0].mxu0
        %v2555 = vadd.f32 0.0, %v2554
        %v2556 = vpop.f32.mrb[0].mxu0
        %v2557 = vpop.f32.mrb[0].mxu0
        %v2558 = vadd.f32 0.0, %v2557
        %v2559 = vpop.f32.mrb[0].mxu0
        %2560 = vmatprep.mubr.bf16.mxu0 0
        %2561 = vmatmul.mubr.bf16.gmra.mrb[0].mxu0 %v2471
        %v2562 = vpop.f32.mrb[0].mxu0
        %v2563 = vadd.f32 0.0, %v2562
        %v2564 = vpop.f32.mrb[0].mxu0
        %v2565 = vpop.f32.mrb[0].mxu0
        %v2566 = vadd.f32 0.0, %v2565
        %v2567 = vpop.f32.mrb[0].mxu0
        %2568 = vmatprep.mubr.bf16.mxu0 0
        %2569 = vmatmul.mubr.bf16.gmra.mrb[0].mxu0 %v2474
        %v2570 = vpop.f32.mrb[0].mxu0
        %v2571 = vadd.f32 0.0, %v2570
        %v2572 = vpop.f32.mrb[0].mxu0
        %v2573 = vpop.f32.mrb[0].mxu0
        %v2574 = vadd.f32 0.0, %v2573
        %v2575 = vpop.f32.mrb[0].mxu0
        %2576 = vmatprep.mubr.bf16.mxu0 0
        %2577 = vmatmul.mubr.bf16.gmra.mrb[0].mxu0 %v2477
        %v2578 = vpop.f32.mrb[0].mxu0
        %v2579 = vadd.f32 0.0, %v2578
        %v2580 = vpop.f32.mrb[0].mxu0
        %v2581 = vpop.f32.mrb[0].mxu0
        %v2582 = vadd.f32 0.0, %v2581
        %v2583 = vpop.f32.mrb[0].mxu0
        %2584 = vmatprep.mubr.bf16.mxu0 0
        %2585 = vmatmul.mubr.bf16.gmra.mrb[0].mxu0 %v2480
        %v2586 = vpop.f32.mrb[0].mxu0
        %v2587 = vadd.f32 0.0, %v2586
        %v2588 = vpop.f32.mrb[0].mxu0
        %v2589 = vpop.f32.mrb[0].mxu0
        %v2590 = vadd.f32 0.0, %v2589
        %v2591 = vpop.f32.mrb[0].mxu0
        %2592 = vmatprep.mubr.bf16.mxu0 0
        %2593 = vmatmul.mubr.bf16.gmra.mrb[0].mxu0 %v2483
        %v2594 = vpop.f32.mrb[0].mxu0
        %v2595 = vadd.f32 0.0, %v2594
        %v2596 = vpop.f32.mrb[0].mxu0
        %v2597 = vpop.f32.mrb[0].mxu0
        %v2598 = vadd.f32 0.0, %v2597
        %v2599 = vpop.f32.mrb[0].mxu0
        %2600 = vmatprep.mubr.bf16.mxu0 0
        %2601 = vmatmul.mubr.bf16.gmra.mrb[0].mxu0 %v2486
        %v2602 = vpop.f32.mrb[0].mxu0
        %v2603 = vadd.f32 0.0, %v2602
        %v2604 = vpop.f32.mrb[0].mxu0
        %v2605 = vpop.f32.mrb[0].mxu0
        %v2606 = vadd.f32 0.0, %v2605
        %v2607 = vpop.f32.mrb[0].mxu0
        %2608 = vmatprep.mubr.bf16.mxu0 0
        %2609 = vmatmul.mubr.bf16.gmra.mrb[0].mxu0 %v2489
        %v2610 = vpop.f32.mrb[0].mxu0
        %v2611 = vadd.f32 0.0, %v2610
        %v2612 = vpop.f32.mrb[0].mxu0
        %v2613 = vpop.f32.mrb[0].mxu0
        %v2614 = vadd.f32 0.0, %v2613
        %v2615 = vpop.f32.mrb[0].mxu0
        %2616 = vmatprep.mubr.bf16.mxu0 0
        %2617 = vmatmul.mubr.bf16.gmra.mrb[0].mxu0 %v2492
        %v2618 = vpop.f32.mrb[0].mxu0
        %v2619 = vadd.f32 0.0, %v2618
        %v2620 = vpop.f32.mrb[0].mxu0
        %v2621 = vpop.f32.mrb[0].mxu0
        %v2622 = vadd.f32 0.0, %v2621
        %v2623 = vpop.f32.mrb[0].mxu0
        %2624 = vmatprep.mubr.bf16.mxu0 0
        %2625 = vmatmul.mubr.bf16.gmra.mrb[0].mxu0 %v2495
        %v2626 = vpop.f32.mrb[0].mxu0
        %v2627 = vadd.f32 0.0, %v2626
        %v2628 = vpop.f32.mrb[0].mxu0
        %v2629 = vpop.f32.mrb[0].mxu0
        %v2630 = vadd.f32 0.0, %v2629
        %v2631 = vpop.f32.mrb[0].mxu0
        %2632 = vmatprep.mubr.bf16.mxu0 0
        %2633 = vmatmul.mubr.bf16.gmra.mrb[0].mxu0 %v2498
        %v2634 = vpop.f32.mrb[0].mxu0
        %v2635 = vadd.f32 0.0, %v2634
        %v2636 = vpop.f32.mrb[0].mxu0
        %v2637 = vpop.f32.mrb[0].mxu0
        %v2638 = vadd.f32 0.0, %v2637
        %v2639 = vpop.f32.mrb[0].mxu0
        %2640 = vmatprep.mubr.bf16.mxu0 0
        %2641 = vmatmul.mubr.bf16.gmra.mrb[0].mxu0 %v2501
        %v2642 = vpop.f32.mrb[0].mxu0
        %v2643 = vadd.f32 0.0, %v2642
        %v2644 = vpop.f32.mrb[0].mxu0
        %v2645 = vpop.f32.mrb[0].mxu0
        %v2646 = vadd.f32 0.0, %v2645
        %v2647 = vpop.f32.mrb[0].mxu0
        %2648 = vmatprep.mubr.bf16.mxu0 0
        %2649 = vmatmul.mubr.bf16.gmra.mrb[0].mxu0 %v2504
        %v2650 = vpop.f32.mrb[0].mxu0
        %v2651 = vadd.f32 0.0, %v2650
        %v2652 = vpop.f32.mrb[0].mxu0
        %v2653 = vpop.f32.mrb[0].mxu0
        %v2654 = vadd.f32 0.0, %v2653
        %v2655 = vpop.f32.mrb[0].mxu0
        %2656 = vmatprep.mubr.bf16.mxu0 0
        %2657 = vmatmul.mubr.bf16.gmra.mrb[0].mxu0 %v2507
        %v2658 = vpop.f32.mrb[0].mxu0
        %v2659 = vadd.f32 0.0, %v2658
        %v2660 = vpop.f32.mrb[0].mxu0
        %v2661 = vpop.f32.mrb[0].mxu0
        %v2662 = vadd.f32 0.0, %v2661
        %v2663 = vpop.f32.mrb[0].mxu0
        %2664 = vmatprep.mubr.bf16.mxu0 0
        %2665 = vmatmul.mubr.bf16.gmra.mrb[0].mxu0 %v2510
        %v2666 = vpop.f32.mrb[0].mxu0
        %v2667 = vadd.f32 0.0, %v2666
        %v2668 = vpop.f32.mrb[0].mxu0
        %v2669 = vpop.f32.mrb[0].mxu0
        %v2670 = vadd.f32 0.0, %v2669
        %v2671 = vpop.f32.mrb[0].mxu0
        %2672 = vdwg.mxu0
        %v2673 = vadd.f32 %v2224, %v2547
        %v2674 = vadd.f32 %v2225, %v2550
        %v2675 = vadd.f32 %v2226, %v2555
        %v2676 = vadd.f32 %v2227, %v2558
        %v2677 = vadd.f32 %v2228, %v2563
        %v2678 = vadd.f32 %v2229, %v2566
        %v2679 = vadd.f32 %v2230, %v2571
        %v2680 = vadd.f32 %v2231, %v2574
        %v2681 = vadd.f32 %v2232, %v2579
        %v2682 = vadd.f32 %v2233, %v2582
        %v2683 = vadd.f32 %v2234, %v2587
        %v2684 = vadd.f32 %v2235, %v2590
        %v2685 = vadd.f32 %v2236, %v2595
        %v2686 = vadd.f32 %v2237, %v2598
        %v2687 = vadd.f32 %v2238, %v2603
        %v2688 = vadd.f32 %v2239, %v2606
        %v2689 = vadd.f32 %v2240, %v2611
        %v2690 = vadd.f32 %v2241, %v2614
        %v2691 = vadd.f32 %v2242, %v2619
        %v2692 = vadd.f32 %v2243, %v2622
        %v2693 = vadd.f32 %v2244, %v2627
        %v2694 = vadd.f32 %v2245, %v2630
        %v2695 = vadd.f32 %v2246, %v2635
        %v2696 = vadd.f32 %v2247, %v2638
        %v2697 = vadd.f32 %v2248, %v2643
        %v2698 = vadd.f32 %v2249, %v2646
        %v2699 = vadd.f32 %v2250, %v2651
        %v2700 = vadd.f32 %v2251, %v2654
        %v2701 = vadd.f32 %v2252, %v2659
        %v2702 = vadd.f32 %v2253, %v2662
        %v2703 = vadd.f32 %v2254, %v2667
        %v2704 = vadd.f32 %v2255, %v2670
        %v2705 = vpack.c.bf16 %v745, %v744
        %v2706 = vpack.c.bf16 %v747, %v746
        %v2707 = vpack.c.bf16 %v749, %v748
        %v2708 = vpack.c.bf16 %v751, %v750
        %v2709 = vpack.c.bf16 %v753, %v752
        %v2710 = vpack.c.bf16 %v755, %v754
        %v2711 = vpack.c.bf16 %v757, %v756
        %v2712 = vpack.c.bf16 %v759, %v758
        %v2713 = vpack.c.bf16 %v761, %v760
        %v2714 = vpack.c.bf16 %v763, %v762
        %v2715 = vpack.c.bf16 %v765, %v764
        %v2716 = vpack.c.bf16 %v767, %v766
        %v2717 = vpack.c.bf16 %v769, %v768
        %v2718 = vpack.c.bf16 %v771, %v770
        %v2719 = vpack.c.bf16 %v773, %v772
        %v2720 = vpack.c.bf16 %v775, %v774
        %v2721 = vld [vmem:[%s2 + $0x80] sm:$0xf]
        %v2722 = vld [vmem:[%s2 + $0x84] sm:$0xf]
        %v2723 = vld [vmem:[%s2 + $0x88] sm:$0xf]
        %v2724 = vld [vmem:[%s2 + $0x8c] sm:$0xf]
        %v2725 = vld [vmem:[%s2 + $0x90] sm:$0xf]
        %v2726 = vld [vmem:[%s2 + $0x94] sm:$0xf]
        %v2727 = vld [vmem:[%s2 + $0x98] sm:$0xf]
        %v2728 = vld [vmem:[%s2 + $0x9c] sm:$0xf]
        %v2737 = vunpack.c.l.b16 %v2721
        %v2738 = vunpack.c.l.b16 %v2722
        %v2739 = vunpack.c.l.b16 %v2723
        %v2740 = vunpack.c.l.b16 %v2724
        %v2741 = vunpack.c.l.b16 %v2725
        %v2742 = vunpack.c.l.b16 %v2726
        %v2743 = vunpack.c.l.b16 %v2727
        %v2744 = vunpack.c.l.b16 %v2728
        %v2745 = vpack.c.b16 %v2738, %v2737
        %v2746 = vpack.c.b16 %v2740, %v2739
        %v2747 = vpack.c.b16 %v2742, %v2741
        %v2748 = vpack.c.b16 %v2744, %v2743
        %v2754 = vsel %vm1299, %v2705, 0
        %v2757 = vsel %vm1299, %v2706, 0
        %v2760 = vsel %vm1299, %v2707, 0
        %v2763 = vsel %vm1299, %v2708, 0
        %v2766 = vsel %vm1299, %v2709, 0
        %v2769 = vsel %vm1299, %v2710, 0
        %v2772 = vsel %vm1299, %v2711, 0
        %v2775 = vsel %vm1299, %v2712, 0
        %v2778 = vsel %vm1299, %v2713, 0
        %v2781 = vsel %vm1299, %v2714, 0
        %v2784 = vsel %vm1299, %v2715, 0
        %v2787 = vsel %vm1299, %v2716, 0
        %v2790 = vsel %vm1299, %v2717, 0
        %v2793 = vsel %vm1299, %v2718, 0
        %v2796 = vsel %vm1299, %v2719, 0
        %v2799 = vsel %vm1299, %v2720, 0
        %2801 = vmatprep.subr.bf16.mxu0 0
        %2802 = vmatpush1.bf16.msra.mxu0 %v2745
        %2803 = vmatprep.subr.bf16.mxu0 0
        %2804 = vmatpush1.bf16.msra.mxu0 %v2746
        %2805 = vmatprep.subr.bf16.mxu0 0
        %2806 = vmatpush1.bf16.msra.mxu0 %v2747
        %2807 = vmatprep.subr.bf16.mxu0 0
        %2808 = vmatpush1.bf16.msra.mxu0 %v2748
        %2809 = vmatprep.subr.bf16.mxu0 0
        %2810 = vmatpush1.bf16.msra.mxu0 0
        %2811 = vmatprep.subr.bf16.mxu0 0
        %2812 = vmatpush1.bf16.msra.mxu0 0
        %2813 = vmatprep.subr.bf16.mxu0 0
        %2814 = vmatpush1.bf16.msra.mxu0 0
        %2815 = vmatprep.subr.bf16.mxu0 0
        %2816 = vmatpush1.bf16.msra.mxu0 0
        %2817 = vmatprep.subr.bf16.mxu0 0
        %2818 = vmatpush1.bf16.msra.mxu0 0
        %2819 = vmatprep.subr.bf16.mxu0 0
        %2820 = vmatpush1.bf16.msra.mxu0 0
        %2821 = vmatprep.subr.bf16.mxu0 0
        %2822 = vmatpush1.bf16.msra.mxu0 0
        %2823 = vmatprep.subr.bf16.mxu0 0
        %2824 = vmatpush1.bf16.msra.mxu0 0
        %2825 = vmatprep.subr.bf16.mxu0 0
        %2826 = vmatpush1.bf16.msra.mxu0 0
        %2827 = vmatprep.subr.bf16.mxu0 0
        %2828 = vmatpush1.bf16.msra.mxu0 0
        %2829 = vmatprep.subr.bf16.mxu0 0
        %2830 = vmatpush1.bf16.msra.mxu0 0
        %2831 = vmatprep.subr.bf16.mxu0 0
        %2832 = vmatpush1.bf16.msra.mxu0 0
        %2833 = vmatprep.mubr.bf16.mxu0 0
        %2834 = vmatmul.mubr.bf16.gmra.mrb[0].mxu0 %v2754
        %v2835 = vpop.f32.mrb[0].mxu0
        %v2836 = vadd.f32 0.0, %v2835
        %v2837 = vpop.f32.mrb[0].mxu0
        %v2838 = vpop.f32.mrb[0].mxu0
        %v2839 = vadd.f32 0.0, %v2838
        %v2840 = vpop.f32.mrb[0].mxu0
        %2841 = vmatprep.mubr.bf16.mxu0 0
        %2842 = vmatmul.mubr.bf16.gmra.mrb[0].mxu0 %v2757
        %v2843 = vpop.f32.mrb[0].mxu0
        %v2844 = vadd.f32 0.0, %v2843
        %v2845 = vpop.f32.mrb[0].mxu0
        %v2846 = vpop.f32.mrb[0].mxu0
        %v2847 = vadd.f32 0.0, %v2846
        %v2848 = vpop.f32.mrb[0].mxu0
        %2849 = vmatprep.mubr.bf16.mxu0 0
        %2850 = vmatmul.mubr.bf16.gmra.mrb[0].mxu0 %v2760
        %v2851 = vpop.f32.mrb[0].mxu0
        %v2852 = vadd.f32 0.0, %v2851
        %v2853 = vpop.f32.mrb[0].mxu0
        %v2854 = vpop.f32.mrb[0].mxu0
        %v2855 = vadd.f32 0.0, %v2854
        %v2856 = vpop.f32.mrb[0].mxu0
        %2857 = vmatprep.mubr.bf16.mxu0 0
        %2858 = vmatmul.mubr.bf16.gmra.mrb[0].mxu0 %v2763
        %v2859 = vpop.f32.mrb[0].mxu0
        %v2860 = vadd.f32 0.0, %v2859
        %v2861 = vpop.f32.mrb[0].mxu0
        %v2862 = vpop.f32.mrb[0].mxu0
        %v2863 = vadd.f32 0.0, %v2862
        %v2864 = vpop.f32.mrb[0].mxu0
        %2865 = vmatprep.mubr.bf16.mxu0 0
        %2866 = vmatmul.mubr.bf16.gmra.mrb[0].mxu0 %v2766
        %v2867 = vpop.f32.mrb[0].mxu0
        %v2868 = vadd.f32 0.0, %v2867
        %v2869 = vpop.f32.mrb[0].mxu0
        %v2870 = vpop.f32.mrb[0].mxu0
        %v2871 = vadd.f32 0.0, %v2870
        %v2872 = vpop.f32.mrb[0].mxu0
        %2873 = vmatprep.mubr.bf16.mxu0 0
        %2874 = vmatmul.mubr.bf16.gmra.mrb[0].mxu0 %v2769
        %v2875 = vpop.f32.mrb[0].mxu0
        %v2876 = vadd.f32 0.0, %v2875
        %v2877 = vpop.f32.mrb[0].mxu0
        %v2878 = vpop.f32.mrb[0].mxu0
        %v2879 = vadd.f32 0.0, %v2878
        %v2880 = vpop.f32.mrb[0].mxu0
        %2881 = vmatprep.mubr.bf16.mxu0 0
        %2882 = vmatmul.mubr.bf16.gmra.mrb[0].mxu0 %v2772
        %v2883 = vpop.f32.mrb[0].mxu0
        %v2884 = vadd.f32 0.0, %v2883
        %v2885 = vpop.f32.mrb[0].mxu0
        %v2886 = vpop.f32.mrb[0].mxu0
        %v2887 = vadd.f32 0.0, %v2886
        %v2888 = vpop.f32.mrb[0].mxu0
        %2889 = vmatprep.mubr.bf16.mxu0 0
        %2890 = vmatmul.mubr.bf16.gmra.mrb[0].mxu0 %v2775
        %v2891 = vpop.f32.mrb[0].mxu0
        %v2892 = vadd.f32 0.0, %v2891
        %v2893 = vpop.f32.mrb[0].mxu0
        %v2894 = vpop.f32.mrb[0].mxu0
        %v2895 = vadd.f32 0.0, %v2894
        %v2896 = vpop.f32.mrb[0].mxu0
        %2897 = vmatprep.mubr.bf16.mxu0 0
        %2898 = vmatmul.mubr.bf16.gmra.mrb[0].mxu0 %v2778
        %v2899 = vpop.f32.mrb[0].mxu0
        %v2900 = vadd.f32 0.0, %v2899
        %v2901 = vpop.f32.mrb[0].mxu0
        %v2902 = vpop.f32.mrb[0].mxu0
        %v2903 = vadd.f32 0.0, %v2902
        %v2904 = vpop.f32.mrb[0].mxu0
        %2905 = vmatprep.mubr.bf16.mxu0 0
        %2906 = vmatmul.mubr.bf16.gmra.mrb[0].mxu0 %v2781
        %v2907 = vpop.f32.mrb[0].mxu0
        %v2908 = vadd.f32 0.0, %v2907
        %v2909 = vpop.f32.mrb[0].mxu0
        %v2910 = vpop.f32.mrb[0].mxu0
        %v2911 = vadd.f32 0.0, %v2910
        %v2912 = vpop.f32.mrb[0].mxu0
        %2913 = vmatprep.mubr.bf16.mxu0 0
        %2914 = vmatmul.mubr.bf16.gmra.mrb[0].mxu0 %v2784
        %v2915 = vpop.f32.mrb[0].mxu0
        %v2916 = vadd.f32 0.0, %v2915
        %v2917 = vpop.f32.mrb[0].mxu0
        %v2918 = vpop.f32.mrb[0].mxu0
        %v2919 = vadd.f32 0.0, %v2918
        %v2920 = vpop.f32.mrb[0].mxu0
        %2921 = vmatprep.mubr.bf16.mxu0 0
        %2922 = vmatmul.mubr.bf16.gmra.mrb[0].mxu0 %v2787
        %v2923 = vpop.f32.mrb[0].mxu0
        %v2924 = vadd.f32 0.0, %v2923
        %v2925 = vpop.f32.mrb[0].mxu0
        %v2926 = vpop.f32.mrb[0].mxu0
        %v2927 = vadd.f32 0.0, %v2926
        %v2928 = vpop.f32.mrb[0].mxu0
        %2929 = vmatprep.mubr.bf16.mxu0 0
        %2930 = vmatmul.mubr.bf16.gmra.mrb[0].mxu0 %v2790
        %v2931 = vpop.f32.mrb[0].mxu0
        %v2932 = vadd.f32 0.0, %v2931
        %v2933 = vpop.f32.mrb[0].mxu0
        %v2934 = vpop.f32.mrb[0].mxu0
        %v2935 = vadd.f32 0.0, %v2934
        %v2936 = vpop.f32.mrb[0].mxu0
        %2937 = vmatprep.mubr.bf16.mxu0 0
        %2938 = vmatmul.mubr.bf16.gmra.mrb[0].mxu0 %v2793
        %v2939 = vpop.f32.mrb[0].mxu0
        %v2940 = vadd.f32 0.0, %v2939
        %v2941 = vpop.f32.mrb[0].mxu0
        %v2942 = vpop.f32.mrb[0].mxu0
        %v2943 = vadd.f32 0.0, %v2942
        %v2944 = vpop.f32.mrb[0].mxu0
        %2945 = vmatprep.mubr.bf16.mxu0 0
        %2946 = vmatmul.mubr.bf16.gmra.mrb[0].mxu0 %v2796
        %v2947 = vpop.f32.mrb[0].mxu0
        %v2948 = vadd.f32 0.0, %v2947
        %v2949 = vpop.f32.mrb[0].mxu0
        %v2950 = vpop.f32.mrb[0].mxu0
        %v2951 = vadd.f32 0.0, %v2950
        %v2952 = vpop.f32.mrb[0].mxu0
        %2953 = vmatprep.mubr.bf16.mxu0 0
        %2954 = vmatmul.mubr.bf16.gmra.mrb[0].mxu0 %v2799
        %v2955 = vpop.f32.mrb[0].mxu0
        %v2956 = vadd.f32 0.0, %v2955
        %v2957 = vpop.f32.mrb[0].mxu0
        %v2958 = vpop.f32.mrb[0].mxu0
        %v2959 = vadd.f32 0.0, %v2958
        %v2960 = vpop.f32.mrb[0].mxu0
        %2961 = vdwg.mxu0
        %v2962 = vadd.f32 %v2673, %v2836
        %v2963 = vadd.f32 %v2674, %v2839
        %v2964 = vadd.f32 %v2675, %v2844
        %v2965 = vadd.f32 %v2676, %v2847
        %v2966 = vadd.f32 %v2677, %v2852
        %v2967 = vadd.f32 %v2678, %v2855
        %v2968 = vadd.f32 %v2679, %v2860
        %v2969 = vadd.f32 %v2680, %v2863
        %v2970 = vadd.f32 %v2681, %v2868
        %v2971 = vadd.f32 %v2682, %v2871
        %v2972 = vadd.f32 %v2683, %v2876
        %v2973 = vadd.f32 %v2684, %v2879
        %v2974 = vadd.f32 %v2685, %v2884
        %v2975 = vadd.f32 %v2686, %v2887
        %v2976 = vadd.f32 %v2687, %v2892
        %v2977 = vadd.f32 %v2688, %v2895
        %v2978 = vadd.f32 %v2689, %v2900
        %v2979 = vadd.f32 %v2690, %v2903
        %v2980 = vadd.f32 %v2691, %v2908
        %v2981 = vadd.f32 %v2692, %v2911
        %v2982 = vadd.f32 %v2693, %v2916
        %v2983 = vadd.f32 %v2694, %v2919
        %v2984 = vadd.f32 %v2695, %v2924
        %v2985 = vadd.f32 %v2696, %v2927
        %v2986 = vadd.f32 %v2697, %v2932
        %v2987 = vadd.f32 %v2698, %v2935
        %v2988 = vadd.f32 %v2699, %v2940
        %v2989 = vadd.f32 %v2700, %v2943
        %v2990 = vadd.f32 %v2701, %v2948
        %v2991 = vadd.f32 %v2702, %v2951
        %v2992 = vadd.f32 %v2703, %v2956
        %v2993 = vadd.f32 %v2704, %v2959
        %2994 = vset.pattern.permute.xlu0 5
        %2995 = vperm.xlu0 %2994, %v843
        %v2996 = vpop.permute.xlu0 %2995
        %2998 = vset.pattern.permute.xlu0 5
        %2999 = vperm.xlu0 %2998, %v844
        %v3000 = vpop.permute.xlu0 %2999
        %3002 = vset.pattern.permute.xlu0 5
        %3003 = vperm.xlu0 %3002, %v845
        %v3004 = vpop.permute.xlu0 %3003
        %3006 = vset.pattern.permute.xlu0 5
        %3007 = vperm.xlu0 %3006, %v846
        %v3008 = vpop.permute.xlu0 %3007
        %3010 = vset.pattern.permute.xlu0 5
        %3011 = vperm.xlu0 %3010, %v847
        %v3012 = vpop.permute.xlu0 %3011
        %3014 = vset.pattern.permute.xlu0 5
        %3015 = vperm.xlu0 %3014, %v848
        %v3016 = vpop.permute.xlu0 %3015
        %3018 = vset.pattern.permute.xlu0 5
        %3019 = vperm.xlu0 %3018, %v849
        %v3020 = vpop.permute.xlu0 %3019
        %3022 = vset.pattern.permute.xlu0 5
        %3023 = vperm.xlu0 %3022, %v850
        %v3024 = vpop.permute.xlu0 %3023
        %3026 = vset.pattern.permute.xlu0 5
        %3027 = vperm.xlu0 %3026, %v851
        %v3028 = vpop.permute.xlu0 %3027
        %3030 = vset.pattern.permute.xlu0 5
        %3031 = vperm.xlu0 %3030, %v852
        %v3032 = vpop.permute.xlu0 %3031
        %3034 = vset.pattern.permute.xlu0 5
        %3035 = vperm.xlu0 %3034, %v853
        %v3036 = vpop.permute.xlu0 %3035
        %3038 = vset.pattern.permute.xlu0 5
        %3039 = vperm.xlu0 %3038, %v854
        %v3040 = vpop.permute.xlu0 %3039
        %3042 = vset.pattern.permute.xlu0 5
        %3043 = vperm.xlu0 %3042, %v855
        %v3044 = vpop.permute.xlu0 %3043
        %3046 = vset.pattern.permute.xlu0 5
        %3047 = vperm.xlu0 %3046, %v856
        %v3048 = vpop.permute.xlu0 %3047
        %3050 = vset.pattern.permute.xlu0 5
        %3051 = vperm.xlu0 %3050, %v857
        %v3052 = vpop.permute.xlu0 %3051
        %3054 = vset.pattern.permute.xlu0 5
        %3055 = vperm.xlu0 %3054, %v858
        %v3056 = vpop.permute.xlu0 %3055
        %3058 = vset.pattern.permute.xlu0 5
        %3059 = vperm.xlu0 %3058, %v859
        %v3060 = vpop.permute.xlu0 %3059
        %3062 = vset.pattern.permute.xlu0 5
        %3063 = vperm.xlu0 %3062, %v860
        %v3064 = vpop.permute.xlu0 %3063
        %3066 = vset.pattern.permute.xlu0 5
        %3067 = vperm.xlu0 %3066, %v861
        %v3068 = vpop.permute.xlu0 %3067
        %3070 = vset.pattern.permute.xlu0 5
        %3071 = vperm.xlu0 %3070, %v862
        %v3072 = vpop.permute.xlu0 %3071
        %3074 = vset.pattern.permute.xlu0 5
        %3075 = vperm.xlu0 %3074, %v863
        %v3076 = vpop.permute.xlu0 %3075
        %3078 = vset.pattern.permute.xlu0 5
        %3079 = vperm.xlu0 %3078, %v864
        %v3080 = vpop.permute.xlu0 %3079
        %3082 = vset.pattern.permute.xlu0 5
        %3083 = vperm.xlu0 %3082, %v865
        %v3084 = vpop.permute.xlu0 %3083
        %3086 = vset.pattern.permute.xlu0 5
        %3087 = vperm.xlu0 %3086, %v866
        %v3088 = vpop.permute.xlu0 %3087
        %3090 = vset.pattern.permute.xlu0 5
        %3091 = vperm.xlu0 %3090, %v867
        %v3092 = vpop.permute.xlu0 %3091
        %3094 = vset.pattern.permute.xlu0 5
        %3095 = vperm.xlu0 %3094, %v868
        %v3096 = vpop.permute.xlu0 %3095
        %3098 = vset.pattern.permute.xlu0 5
        %3099 = vperm.xlu0 %3098, %v869
        %v3100 = vpop.permute.xlu0 %3099
        %3102 = vset.pattern.permute.xlu0 5
        %3103 = vperm.xlu0 %3102, %v870
        %v3104 = vpop.permute.xlu0 %3103
        %3106 = vset.pattern.permute.xlu0 5
        %3107 = vperm.xlu0 %3106, %v871
        %v3108 = vpop.permute.xlu0 %3107
        %3110 = vset.pattern.permute.xlu0 5
        %3111 = vperm.xlu0 %3110, %v872
        %v3112 = vpop.permute.xlu0 %3111
        %3114 = vset.pattern.permute.xlu0 5
        %3115 = vperm.xlu0 %3114, %v873
        %v3116 = vpop.permute.xlu0 %3115
        %3118 = vset.pattern.permute.xlu0 5
        %3119 = vperm.xlu0 %3118, %v874
        %v3120 = vpop.permute.xlu0 %3119
        %v3122 = vmul.f32 %v1805, %v2996
        %v3123 = vmul.f32 %v1804, %v3000
        %v3124 = vmul.f32 %v1803, %v3004
        %v3125 = vmul.f32 %v1802, %v3008
        %v3126 = vmul.f32 %v1801, %v3012
        %v3127 = vmul.f32 %v1800, %v3016
        %v3128 = vmul.f32 %v1799, %v3020
        %v3129 = vmul.f32 %v1798, %v3024
        %v3130 = vmul.f32 %v1797, %v3028
        %v3131 = vmul.f32 %v1796, %v3032
        %v3132 = vmul.f32 %v1795, %v3036
        %v3133 = vmul.f32 %v1794, %v3040
        %v3134 = vmul.f32 %v1793, %v3044
        %v3135 = vmul.f32 %v1792, %v3048
        %v3136 = vmul.f32 %v1791, %v3052
        %v3137 = vmul.f32 %v1790, %v3056
        %v3138 = vmul.f32 %v1789, %v3060
        %v3139 = vmul.f32 %v1788, %v3064
        %v3140 = vmul.f32 %v1787, %v3068
        %v3141 = vmul.f32 %v1786, %v3072
        %v3142 = vmul.f32 %v1785, %v3076
        %v3143 = vmul.f32 %v1784, %v3080
        %v3144 = vmul.f32 %v1783, %v3084
        %v3145 = vmul.f32 %v1782, %v3088
        %v3146 = vmul.f32 %v1781, %v3092
        %v3147 = vmul.f32 %v1780, %v3096
        %v3148 = vmul.f32 %v1779, %v3100
        %v3149 = vmul.f32 %v1778, %v3104
        %v3150 = vmul.f32 %v1777, %v3108
        %v3151 = vmul.f32 %v1776, %v3112
        %v3152 = vmul.f32 %v1775, %v3116
        %v3153 = vmul.f32 %v1806, %v3120
        %v3154 = vpack.c.bf16 %v3123, %v3122
        %v3155 = vpack.c.bf16 %v3125, %v3124
        %v3156 = vpack.c.bf16 %v3127, %v3126
        %v3157 = vpack.c.bf16 %v3129, %v3128
        %v3158 = vpack.c.bf16 %v3131, %v3130
        %v3159 = vpack.c.bf16 %v3133, %v3132
        %v3160 = vpack.c.bf16 %v3135, %v3134
        %v3161 = vpack.c.bf16 %v3137, %v3136
        %v3162 = vpack.c.bf16 %v3139, %v3138
        %v3163 = vpack.c.bf16 %v3141, %v3140
        %v3164 = vpack.c.bf16 %v3143, %v3142
        %v3165 = vpack.c.bf16 %v3145, %v3144
        %v3166 = vpack.c.bf16 %v3147, %v3146
        %v3167 = vpack.c.bf16 %v3149, %v3148
        %v3168 = vpack.c.bf16 %v3151, %v3150
        %v3169 = vpack.c.bf16 %v3153, %v3152
        %v3170 = vld [vmem:[%s2 + $0xa0] sm:$0xf]
        %v3171 = vld [vmem:[%s2 + $0xa4] sm:$0xf]
        %v3172 = vld [vmem:[%s2 + $0xa8] sm:$0xf]
        %v3173 = vld [vmem:[%s2 + $0xac] sm:$0xf]
        %v3174 = vld [vmem:[%s2 + $0xb0] sm:$0xf]
        %v3175 = vld [vmem:[%s2 + $0xb4] sm:$0xf]
        %v3176 = vld [vmem:[%s2 + $0xb8] sm:$0xf]
        %v3177 = vld [vmem:[%s2 + $0xbc] sm:$0xf]
        %v3186 = vunpack.c.l.b16 %v3170
        %v3187 = vunpack.c.l.b16 %v3171
        %v3188 = vunpack.c.l.b16 %v3172
        %v3189 = vunpack.c.l.b16 %v3173
        %v3190 = vunpack.c.l.b16 %v3174
        %v3191 = vunpack.c.l.b16 %v3175
        %v3192 = vunpack.c.l.b16 %v3176
        %v3193 = vunpack.c.l.b16 %v3177
        %v3194 = vpack.c.b16 %v3187, %v3186
        %v3195 = vpack.c.b16 %v3189, %v3188
        %v3196 = vpack.c.b16 %v3191, %v3190
        %v3197 = vpack.c.b16 %v3193, %v3192
        %v3203 = vsel %vm1299, %v3154, 0
        %v3206 = vsel %vm1299, %v3155, 0
        %v3209 = vsel %vm1299, %v3156, 0
        %v3212 = vsel %vm1299, %v3157, 0
        %v3215 = vsel %vm1299, %v3158, 0
        %v3218 = vsel %vm1299, %v3159, 0
        %v3221 = vsel %vm1299, %v3160, 0
        %v3224 = vsel %vm1299, %v3161, 0
        %v3227 = vsel %vm1299, %v3162, 0
        %v3230 = vsel %vm1299, %v3163, 0
        %v3233 = vsel %vm1299, %v3164, 0
        %v3236 = vsel %vm1299, %v3165, 0
        %v3239 = vsel %vm1299, %v3166, 0
        %v3242 = vsel %vm1299, %v3167, 0
        %v3245 = vsel %vm1299, %v3168, 0
        %v3248 = vsel %vm1299, %v3169, 0
        %3250 = vmatprep.subr.bf16.mxu0 0
        %3251 = vmatpush1.bf16.msra.mxu0 %v3194
        %3252 = vmatprep.subr.bf16.mxu0 0
        %3253 = vmatpush1.bf16.msra.mxu0 %v3195
        %3254 = vmatprep.subr.bf16.mxu0 0
        %3255 = vmatpush1.bf16.msra.mxu0 %v3196
        %3256 = vmatprep.subr.bf16.mxu0 0
        %3257 = vmatpush1.bf16.msra.mxu0 %v3197
        %3258 = vmatprep.subr.bf16.mxu0 0
        %3259 = vmatpush1.bf16.msra.mxu0 0
        %3260 = vmatprep.subr.bf16.mxu0 0
        %3261 = vmatpush1.bf16.msra.mxu0 0
        %3262 = vmatprep.subr.bf16.mxu0 0
        %3263 = vmatpush1.bf16.msra.mxu0 0
        %3264 = vmatprep.subr.bf16.mxu0 0
        %3265 = vmatpush1.bf16.msra.mxu0 0
        %3266 = vmatprep.subr.bf16.mxu0 0
        %3267 = vmatpush1.bf16.msra.mxu0 0
        %3268 = vmatprep.subr.bf16.mxu0 0
        %3269 = vmatpush1.bf16.msra.mxu0 0
        %3270 = vmatprep.subr.bf16.mxu0 0
        %3271 = vmatpush1.bf16.msra.mxu0 0
        %3272 = vmatprep.subr.bf16.mxu0 0
        %3273 = vmatpush1.bf16.msra.mxu0 0
        %3274 = vmatprep.subr.bf16.mxu0 0
        %3275 = vmatpush1.bf16.msra.mxu0 0
        %3276 = vmatprep.subr.bf16.mxu0 0
        %3277 = vmatpush1.bf16.msra.mxu0 0
        %3278 = vmatprep.subr.bf16.mxu0 0
        %3279 = vmatpush1.bf16.msra.mxu0 0
        %3280 = vmatprep.subr.bf16.mxu0 0
        %3281 = vmatpush1.bf16.msra.mxu0 0
        %3282 = vmatprep.mubr.bf16.mxu0 0
        %3283 = vmatmul.mubr.bf16.gmra.mrb[0].mxu0 %v3203
        %v3284 = vpop.f32.mrb[0].mxu0
        %v3285 = vadd.f32 0.0, %v3284
        %v3286 = vpop.f32.mrb[0].mxu0
        %v3287 = vpop.f32.mrb[0].mxu0
        %v3288 = vadd.f32 0.0, %v3287
        %v3289 = vpop.f32.mrb[0].mxu0
        %3290 = vmatprep.mubr.bf16.mxu0 0
        %3291 = vmatmul.mubr.bf16.gmra.mrb[0].mxu0 %v3206
        %v3292 = vpop.f32.mrb[0].mxu0
        %v3293 = vadd.f32 0.0, %v3292
        %v3294 = vpop.f32.mrb[0].mxu0
        %v3295 = vpop.f32.mrb[0].mxu0
        %v3296 = vadd.f32 0.0, %v3295
        %v3297 = vpop.f32.mrb[0].mxu0
        %3298 = vmatprep.mubr.bf16.mxu0 0
        %3299 = vmatmul.mubr.bf16.gmra.mrb[0].mxu0 %v3209
        %v3300 = vpop.f32.mrb[0].mxu0
        %v3301 = vadd.f32 0.0, %v3300
        %v3302 = vpop.f32.mrb[0].mxu0
        %v3303 = vpop.f32.mrb[0].mxu0
        %v3304 = vadd.f32 0.0, %v3303
        %v3305 = vpop.f32.mrb[0].mxu0
        %3306 = vmatprep.mubr.bf16.mxu0 0
        %3307 = vmatmul.mubr.bf16.gmra.mrb[0].mxu0 %v3212
        %v3308 = vpop.f32.mrb[0].mxu0
        %v3309 = vadd.f32 0.0, %v3308
        %v3310 = vpop.f32.mrb[0].mxu0
        %v3311 = vpop.f32.mrb[0].mxu0
        %v3312 = vadd.f32 0.0, %v3311
        %v3313 = vpop.f32.mrb[0].mxu0
        %3314 = vmatprep.mubr.bf16.mxu0 0
        %3315 = vmatmul.mubr.bf16.gmra.mrb[0].mxu0 %v3215
        %v3316 = vpop.f32.mrb[0].mxu0
        %v3317 = vadd.f32 0.0, %v3316
        %v3318 = vpop.f32.mrb[0].mxu0
        %v3319 = vpop.f32.mrb[0].mxu0
        %v3320 = vadd.f32 0.0, %v3319
        %v3321 = vpop.f32.mrb[0].mxu0
        %3322 = vmatprep.mubr.bf16.mxu0 0
        %3323 = vmatmul.mubr.bf16.gmra.mrb[0].mxu0 %v3218
        %v3324 = vpop.f32.mrb[0].mxu0
        %v3325 = vadd.f32 0.0, %v3324
        %v3326 = vpop.f32.mrb[0].mxu0
        %v3327 = vpop.f32.mrb[0].mxu0
        %v3328 = vadd.f32 0.0, %v3327
        %v3329 = vpop.f32.mrb[0].mxu0
        %3330 = vmatprep.mubr.bf16.mxu0 0
        %3331 = vmatmul.mubr.bf16.gmra.mrb[0].mxu0 %v3221
        %v3332 = vpop.f32.mrb[0].mxu0
        %v3333 = vadd.f32 0.0, %v3332
        %v3334 = vpop.f32.mrb[0].mxu0
        %v3335 = vpop.f32.mrb[0].mxu0
        %v3336 = vadd.f32 0.0, %v3335
        %v3337 = vpop.f32.mrb[0].mxu0
        %3338 = vmatprep.mubr.bf16.mxu0 0
        %3339 = vmatmul.mubr.bf16.gmra.mrb[0].mxu0 %v3224
        %v3340 = vpop.f32.mrb[0].mxu0
        %v3341 = vadd.f32 0.0, %v3340
        %v3342 = vpop.f32.mrb[0].mxu0
        %v3343 = vpop.f32.mrb[0].mxu0
        %v3344 = vadd.f32 0.0, %v3343
        %v3345 = vpop.f32.mrb[0].mxu0
        %3346 = vmatprep.mubr.bf16.mxu0 0
        %3347 = vmatmul.mubr.bf16.gmra.mrb[0].mxu0 %v3227
        %v3348 = vpop.f32.mrb[0].mxu0
        %v3349 = vadd.f32 0.0, %v3348
        %v3350 = vpop.f32.mrb[0].mxu0
        %v3351 = vpop.f32.mrb[0].mxu0
        %v3352 = vadd.f32 0.0, %v3351
        %v3353 = vpop.f32.mrb[0].mxu0
        %3354 = vmatprep.mubr.bf16.mxu0 0
        %3355 = vmatmul.mubr.bf16.gmra.mrb[0].mxu0 %v3230
        %v3356 = vpop.f32.mrb[0].mxu0
        %v3357 = vadd.f32 0.0, %v3356
        %v3358 = vpop.f32.mrb[0].mxu0
        %v3359 = vpop.f32.mrb[0].mxu0
        %v3360 = vadd.f32 0.0, %v3359
        %v3361 = vpop.f32.mrb[0].mxu0
        %3362 = vmatprep.mubr.bf16.mxu0 0
        %3363 = vmatmul.mubr.bf16.gmra.mrb[0].mxu0 %v3233
        %v3364 = vpop.f32.mrb[0].mxu0
        %v3365 = vadd.f32 0.0, %v3364
        %v3366 = vpop.f32.mrb[0].mxu0
        %v3367 = vpop.f32.mrb[0].mxu0
        %v3368 = vadd.f32 0.0, %v3367
        %v3369 = vpop.f32.mrb[0].mxu0
        %3370 = vmatprep.mubr.bf16.mxu0 0
        %3371 = vmatmul.mubr.bf16.gmra.mrb[0].mxu0 %v3236
        %v3372 = vpop.f32.mrb[0].mxu0
        %v3373 = vadd.f32 0.0, %v3372
        %v3374 = vpop.f32.mrb[0].mxu0
        %v3375 = vpop.f32.mrb[0].mxu0
        %v3376 = vadd.f32 0.0, %v3375
        %v3377 = vpop.f32.mrb[0].mxu0
        %3378 = vmatprep.mubr.bf16.mxu0 0
        %3379 = vmatmul.mubr.bf16.gmra.mrb[0].mxu0 %v3239
        %v3380 = vpop.f32.mrb[0].mxu0
        %v3381 = vadd.f32 0.0, %v3380
        %v3382 = vpop.f32.mrb[0].mxu0
        %v3383 = vpop.f32.mrb[0].mxu0
        %v3384 = vadd.f32 0.0, %v3383
        %v3385 = vpop.f32.mrb[0].mxu0
        %3386 = vmatprep.mubr.bf16.mxu0 0
        %3387 = vmatmul.mubr.bf16.gmra.mrb[0].mxu0 %v3242
        %v3388 = vpop.f32.mrb[0].mxu0
        %v3389 = vadd.f32 0.0, %v3388
        %v3390 = vpop.f32.mrb[0].mxu0
        %v3391 = vpop.f32.mrb[0].mxu0
        %v3392 = vadd.f32 0.0, %v3391
        %v3393 = vpop.f32.mrb[0].mxu0
        %3394 = vmatprep.mubr.bf16.mxu0 0
        %3395 = vmatmul.mubr.bf16.gmra.mrb[0].mxu0 %v3245
        %v3396 = vpop.f32.mrb[0].mxu0
        %v3397 = vadd.f32 0.0, %v3396
        %v3398 = vpop.f32.mrb[0].mxu0
        %v3399 = vpop.f32.mrb[0].mxu0
        %v3400 = vadd.f32 0.0, %v3399
        %v3401 = vpop.f32.mrb[0].mxu0
        %3402 = vmatprep.mubr.bf16.mxu0 0
        %3403 = vmatmul.mubr.bf16.gmra.mrb[0].mxu0 %v3248
        %v3404 = vpop.f32.mrb[0].mxu0
        %v3405 = vadd.f32 0.0, %v3404
        %v3406 = vpop.f32.mrb[0].mxu0
        %v3407 = vpop.f32.mrb[0].mxu0
        %v3408 = vadd.f32 0.0, %v3407
        %v3409 = vpop.f32.mrb[0].mxu0
        %3410 = vdwg.mxu0
        %v3411 = vadd.f32 %v2962, %v3285
        %v3412 = vadd.f32 %v2963, %v3288
        %v3413 = vadd.f32 %v2964, %v3293
        %v3414 = vadd.f32 %v2965, %v3296
        %v3415 = vadd.f32 %v2966, %v3301
        %v3416 = vadd.f32 %v2967, %v3304
        %v3417 = vadd.f32 %v2968, %v3309
        %v3418 = vadd.f32 %v2969, %v3312
        %v3419 = vadd.f32 %v2970, %v3317
        %v3420 = vadd.f32 %v2971, %v3320
        %v3421 = vadd.f32 %v2972, %v3325
        %v3422 = vadd.f32 %v2973, %v3328
        %v3423 = vadd.f32 %v2974, %v3333
        %v3424 = vadd.f32 %v2975, %v3336
        %v3425 = vadd.f32 %v2976, %v3341
        %v3426 = vadd.f32 %v2977, %v3344
        %v3427 = vadd.f32 %v2978, %v3349
        %v3428 = vadd.f32 %v2979, %v3352
        %v3429 = vadd.f32 %v2980, %v3357
        %v3430 = vadd.f32 %v2981, %v3360
        %v3431 = vadd.f32 %v2982, %v3365
        %v3432 = vadd.f32 %v2983, %v3368
        %v3433 = vadd.f32 %v2984, %v3373
        %v3434 = vadd.f32 %v2985, %v3376
        %v3435 = vadd.f32 %v2986, %v3381
        %v3436 = vadd.f32 %v2987, %v3384
        %v3437 = vadd.f32 %v2988, %v3389
        %v3438 = vadd.f32 %v2989, %v3392
        %v3439 = vadd.f32 %v2990, %v3397
        %v3440 = vadd.f32 %v2991, %v3400
        %v3441 = vadd.f32 %v2992, %v3405
        %v3442 = vadd.f32 %v2993, %v3408
        %3443 = vset.pattern.permute.xlu0 6
        %3444 = vperm.xlu0 %3443, %v843
        %v3445 = vpop.permute.xlu0 %3444
        %3447 = vset.pattern.permute.xlu0 6
        %3448 = vperm.xlu0 %3447, %v844
        %v3449 = vpop.permute.xlu0 %3448
        %3451 = vset.pattern.permute.xlu0 6
        %3452 = vperm.xlu0 %3451, %v845
        %v3453 = vpop.permute.xlu0 %3452
        %3455 = vset.pattern.permute.xlu0 6
        %3456 = vperm.xlu0 %3455, %v846
        %v3457 = vpop.permute.xlu0 %3456
        %3459 = vset.pattern.permute.xlu0 6
        %3460 = vperm.xlu0 %3459, %v847
        %v3461 = vpop.permute.xlu0 %3460
        %3463 = vset.pattern.permute.xlu0 6
        %3464 = vperm.xlu0 %3463, %v848
        %v3465 = vpop.permute.xlu0 %3464
        %3467 = vset.pattern.permute.xlu0 6
        %3468 = vperm.xlu0 %3467, %v849
        %v3469 = vpop.permute.xlu0 %3468
        %3471 = vset.pattern.permute.xlu0 6
        %3472 = vperm.xlu0 %3471, %v850
        %v3473 = vpop.permute.xlu0 %3472
        %3475 = vset.pattern.permute.xlu0 6
        %3476 = vperm.xlu0 %3475, %v851
        %v3477 = vpop.permute.xlu0 %3476
        %3479 = vset.pattern.permute.xlu0 6
        %3480 = vperm.xlu0 %3479, %v852
        %v3481 = vpop.permute.xlu0 %3480
        %3483 = vset.pattern.permute.xlu0 6
        %3484 = vperm.xlu0 %3483, %v853
        %v3485 = vpop.permute.xlu0 %3484
        %3487 = vset.pattern.permute.xlu0 6
        %3488 = vperm.xlu0 %3487, %v854
        %v3489 = vpop.permute.xlu0 %3488
        %3491 = vset.pattern.permute.xlu0 6
        %3492 = vperm.xlu0 %3491, %v855
        %v3493 = vpop.permute.xlu0 %3492
        %3495 = vset.pattern.permute.xlu0 6
        %3496 = vperm.xlu0 %3495, %v856
        %v3497 = vpop.permute.xlu0 %3496
        %3499 = vset.pattern.permute.xlu0 6
        %3500 = vperm.xlu0 %3499, %v857
        %v3501 = vpop.permute.xlu0 %3500
        %3503 = vset.pattern.permute.xlu0 6
        %3504 = vperm.xlu0 %3503, %v858
        %v3505 = vpop.permute.xlu0 %3504
        %3507 = vset.pattern.permute.xlu0 6
        %3508 = vperm.xlu0 %3507, %v859
        %v3509 = vpop.permute.xlu0 %3508
        %3511 = vset.pattern.permute.xlu0 6
        %3512 = vperm.xlu0 %3511, %v860
        %v3513 = vpop.permute.xlu0 %3512
        %3515 = vset.pattern.permute.xlu0 6
        %3516 = vperm.xlu0 %3515, %v861
        %v3517 = vpop.permute.xlu0 %3516
        %3519 = vset.pattern.permute.xlu0 6
        %3520 = vperm.xlu0 %3519, %v862
        %v3521 = vpop.permute.xlu0 %3520
        %3523 = vset.pattern.permute.xlu0 6
        %3524 = vperm.xlu0 %3523, %v863
        %v3525 = vpop.permute.xlu0 %3524
        %3527 = vset.pattern.permute.xlu0 6
        %3528 = vperm.xlu0 %3527, %v864
        %v3529 = vpop.permute.xlu0 %3528
        %3531 = vset.pattern.permute.xlu0 6
        %3532 = vperm.xlu0 %3531, %v865
        %v3533 = vpop.permute.xlu0 %3532
        %3535 = vset.pattern.permute.xlu0 6
        %3536 = vperm.xlu0 %3535, %v866
        %v3537 = vpop.permute.xlu0 %3536
        %3539 = vset.pattern.permute.xlu0 6
        %3540 = vperm.xlu0 %3539, %v867
        %v3541 = vpop.permute.xlu0 %3540
        %3543 = vset.pattern.permute.xlu0 6
        %3544 = vperm.xlu0 %3543, %v868
        %v3545 = vpop.permute.xlu0 %3544
        %3547 = vset.pattern.permute.xlu0 6
        %3548 = vperm.xlu0 %3547, %v869
        %v3549 = vpop.permute.xlu0 %3548
        %3551 = vset.pattern.permute.xlu0 6
        %3552 = vperm.xlu0 %3551, %v870
        %v3553 = vpop.permute.xlu0 %3552
        %3555 = vset.pattern.permute.xlu0 6
        %3556 = vperm.xlu0 %3555, %v871
        %v3557 = vpop.permute.xlu0 %3556
        %3559 = vset.pattern.permute.xlu0 6
        %3560 = vperm.xlu0 %3559, %v872
        %v3561 = vpop.permute.xlu0 %3560
        %3563 = vset.pattern.permute.xlu0 6
        %3564 = vperm.xlu0 %3563, %v873
        %v3565 = vpop.permute.xlu0 %3564
        %3567 = vset.pattern.permute.xlu0 6
        %3568 = vperm.xlu0 %3567, %v874
        %v3569 = vpop.permute.xlu0 %3568
        %v3571 = vmul.f32 %v840, %v3445
        %v3572 = vmul.f32 %v839, %v3449
        %v3573 = vmul.f32 %v838, %v3453
        %v3574 = vmul.f32 %v837, %v3457
        %v3575 = vmul.f32 %v836, %v3461
        %v3576 = vmul.f32 %v835, %v3465
        %v3577 = vmul.f32 %v834, %v3469
        %v3578 = vmul.f32 %v833, %v3473
        %v3579 = vmul.f32 %v832, %v3477
        %v3580 = vmul.f32 %v831, %v3481
        %v3581 = vmul.f32 %v830, %v3485
        %v3582 = vmul.f32 %v829, %v3489
        %v3583 = vmul.f32 %v828, %v3493
        %v3584 = vmul.f32 %v827, %v3497
        %v3585 = vmul.f32 %v826, %v3501
        %v3586 = vmul.f32 %v825, %v3505
        %v3587 = vmul.f32 %v824, %v3509
        %v3588 = vmul.f32 %v823, %v3513
        %v3589 = vmul.f32 %v822, %v3517
        %v3590 = vmul.f32 %v821, %v3521
        %v3591 = vmul.f32 %v820, %v3525
        %v3592 = vmul.f32 %v819, %v3529
        %v3593 = vmul.f32 %v818, %v3533
        %v3594 = vmul.f32 %v817, %v3537
        %v3595 = vmul.f32 %v816, %v3541
        %v3596 = vmul.f32 %v815, %v3545
        %v3597 = vmul.f32 %v814, %v3549
        %v3598 = vmul.f32 %v813, %v3553
        %v3599 = vmul.f32 %v812, %v3557
        %v3600 = vmul.f32 %v811, %v3561
        %v3601 = vmul.f32 %v842, %v3565
        %v3602 = vmul.f32 %v841, %v3569
        %v3603 = vpack.c.bf16 %v3572, %v3571
        %v3604 = vpack.c.bf16 %v3574, %v3573
        %v3605 = vpack.c.bf16 %v3576, %v3575
        %v3606 = vpack.c.bf16 %v3578, %v3577
        %v3607 = vpack.c.bf16 %v3580, %v3579
        %v3608 = vpack.c.bf16 %v3582, %v3581
        %v3609 = vpack.c.bf16 %v3584, %v3583
        %v3610 = vpack.c.bf16 %v3586, %v3585
        %v3611 = vpack.c.bf16 %v3588, %v3587
        %v3612 = vpack.c.bf16 %v3590, %v3589
        %v3613 = vpack.c.bf16 %v3592, %v3591
        %v3614 = vpack.c.bf16 %v3594, %v3593
        %v3615 = vpack.c.bf16 %v3596, %v3595
        %v3616 = vpack.c.bf16 %v3598, %v3597
        %v3617 = vpack.c.bf16 %v3600, %v3599
        %v3618 = vpack.c.bf16 %v3602, %v3601
        %v3619 = vld [vmem:[%s2 + $0xc0] sm:$0xf]
        %v3620 = vld [vmem:[%s2 + $0xc4] sm:$0xf]
        %v3621 = vld [vmem:[%s2 + $0xc8] sm:$0xf]
        %v3622 = vld [vmem:[%s2 + $0xcc] sm:$0xf]
        %v3623 = vld [vmem:[%s2 + $0xd0] sm:$0xf]
        %v3624 = vld [vmem:[%s2 + $0xd4] sm:$0xf]
        %v3625 = vld [vmem:[%s2 + $0xd8] sm:$0xf]
        %v3626 = vld [vmem:[%s2 + $0xdc] sm:$0xf]
        %v3635 = vunpack.c.l.b16 %v3619
        %v3636 = vunpack.c.l.b16 %v3620
        %v3637 = vunpack.c.l.b16 %v3621
        %v3638 = vunpack.c.l.b16 %v3622
        %v3639 = vunpack.c.l.b16 %v3623
        %v3640 = vunpack.c.l.b16 %v3624
        %v3641 = vunpack.c.l.b16 %v3625
        %v3642 = vunpack.c.l.b16 %v3626
        %v3643 = vpack.c.b16 %v3636, %v3635
        %v3644 = vpack.c.b16 %v3638, %v3637
        %v3645 = vpack.c.b16 %v3640, %v3639
        %v3646 = vpack.c.b16 %v3642, %v3641
        %v3652 = vsel %vm1299, %v3603, 0
        %v3655 = vsel %vm1299, %v3604, 0
        %v3658 = vsel %vm1299, %v3605, 0
        %v3661 = vsel %vm1299, %v3606, 0
        %v3664 = vsel %vm1299, %v3607, 0
        %v3667 = vsel %vm1299, %v3608, 0
        %v3670 = vsel %vm1299, %v3609, 0
        %v3673 = vsel %vm1299, %v3610, 0
        %v3676 = vsel %vm1299, %v3611, 0
        %v3679 = vsel %vm1299, %v3612, 0
        %v3682 = vsel %vm1299, %v3613, 0
        %v3685 = vsel %vm1299, %v3614, 0
        %v3688 = vsel %vm1299, %v3615, 0
        %v3691 = vsel %vm1299, %v3616, 0
        %v3694 = vsel %vm1299, %v3617, 0
        %v3697 = vsel %vm1299, %v3618, 0
        %3699 = vmatprep.subr.bf16.mxu0 0
        %3700 = vmatpush1.bf16.msra.mxu0 %v3643
        %3701 = vmatprep.subr.bf16.mxu0 0
        %3702 = vmatpush1.bf16.msra.mxu0 %v3644
        %3703 = vmatprep.subr.bf16.mxu0 0
        %3704 = vmatpush1.bf16.msra.mxu0 %v3645
        %3705 = vmatprep.subr.bf16.mxu0 0
        %3706 = vmatpush1.bf16.msra.mxu0 %v3646
        %3707 = vmatprep.subr.bf16.mxu0 0
        %3708 = vmatpush1.bf16.msra.mxu0 0
        %3709 = vmatprep.subr.bf16.mxu0 0
        %3710 = vmatpush1.bf16.msra.mxu0 0
        %3711 = vmatprep.subr.bf16.mxu0 0
        %3712 = vmatpush1.bf16.msra.mxu0 0
        %3713 = vmatprep.subr.bf16.mxu0 0
        %3714 = vmatpush1.bf16.msra.mxu0 0
        %3715 = vmatprep.subr.bf16.mxu0 0
        %3716 = vmatpush1.bf16.msra.mxu0 0
        %3717 = vmatprep.subr.bf16.mxu0 0
        %3718 = vmatpush1.bf16.msra.mxu0 0
        %3719 = vmatprep.subr.bf16.mxu0 0
        %3720 = vmatpush1.bf16.msra.mxu0 0
        %3721 = vmatprep.subr.bf16.mxu0 0
        %3722 = vmatpush1.bf16.msra.mxu0 0
        %3723 = vmatprep.subr.bf16.mxu0 0
        %3724 = vmatpush1.bf16.msra.mxu0 0
        %3725 = vmatprep.subr.bf16.mxu0 0
        %3726 = vmatpush1.bf16.msra.mxu0 0
        %3727 = vmatprep.subr.bf16.mxu0 0
        %3728 = vmatpush1.bf16.msra.mxu0 0
        %3729 = vmatprep.subr.bf16.mxu0 0
        %3730 = vmatpush1.bf16.msra.mxu0 0
        %3731 = vmatprep.mubr.bf16.mxu0 0
        %3732 = vmatmul.mubr.bf16.gmra.mrb[0].mxu0 %v3652
        %v3733 = vpop.f32.mrb[0].mxu0
        %v3734 = vadd.f32 0.0, %v3733
        %v3735 = vpop.f32.mrb[0].mxu0
        %v3736 = vpop.f32.mrb[0].mxu0
        %v3737 = vadd.f32 0.0, %v3736
        %v3738 = vpop.f32.mrb[0].mxu0
        %3739 = vmatprep.mubr.bf16.mxu0 0
        %3740 = vmatmul.mubr.bf16.gmra.mrb[0].mxu0 %v3655
        %v3741 = vpop.f32.mrb[0].mxu0
        %v3742 = vadd.f32 0.0, %v3741
        %v3743 = vpop.f32.mrb[0].mxu0
        %v3744 = vpop.f32.mrb[0].mxu0
        %v3745 = vadd.f32 0.0, %v3744
        %v3746 = vpop.f32.mrb[0].mxu0
        %3747 = vmatprep.mubr.bf16.mxu0 0
        %3748 = vmatmul.mubr.bf16.gmra.mrb[0].mxu0 %v3658
        %v3749 = vpop.f32.mrb[0].mxu0
        %v3750 = vadd.f32 0.0, %v3749
        %v3751 = vpop.f32.mrb[0].mxu0
        %v3752 = vpop.f32.mrb[0].mxu0
        %v3753 = vadd.f32 0.0, %v3752
        %v3754 = vpop.f32.mrb[0].mxu0
        %3755 = vmatprep.mubr.bf16.mxu0 0
        %3756 = vmatmul.mubr.bf16.gmra.mrb[0].mxu0 %v3661
        %v3757 = vpop.f32.mrb[0].mxu0
        %v3758 = vadd.f32 0.0, %v3757
        %v3759 = vpop.f32.mrb[0].mxu0
        %v3760 = vpop.f32.mrb[0].mxu0
        %v3761 = vadd.f32 0.0, %v3760
        %v3762 = vpop.f32.mrb[0].mxu0
        %3763 = vmatprep.mubr.bf16.mxu0 0
        %3764 = vmatmul.mubr.bf16.gmra.mrb[0].mxu0 %v3664
        %v3765 = vpop.f32.mrb[0].mxu0
        %v3766 = vadd.f32 0.0, %v3765
        %v3767 = vpop.f32.mrb[0].mxu0
        %v3768 = vpop.f32.mrb[0].mxu0
        %v3769 = vadd.f32 0.0, %v3768
        %v3770 = vpop.f32.mrb[0].mxu0
        %3771 = vmatprep.mubr.bf16.mxu0 0
        %3772 = vmatmul.mubr.bf16.gmra.mrb[0].mxu0 %v3667
        %v3773 = vpop.f32.mrb[0].mxu0
        %v3774 = vadd.f32 0.0, %v3773
        %v3775 = vpop.f32.mrb[0].mxu0
        %v3776 = vpop.f32.mrb[0].mxu0
        %v3777 = vadd.f32 0.0, %v3776
        %v3778 = vpop.f32.mrb[0].mxu0
        %3779 = vmatprep.mubr.bf16.mxu0 0
        %3780 = vmatmul.mubr.bf16.gmra.mrb[0].mxu0 %v3670
        %v3781 = vpop.f32.mrb[0].mxu0
        %v3782 = vadd.f32 0.0, %v3781
        %v3783 = vpop.f32.mrb[0].mxu0
        %v3784 = vpop.f32.mrb[0].mxu0
        %v3785 = vadd.f32 0.0, %v3784
        %v3786 = vpop.f32.mrb[0].mxu0
        %3787 = vmatprep.mubr.bf16.mxu0 0
        %3788 = vmatmul.mubr.bf16.gmra.mrb[0].mxu0 %v3673
        %v3789 = vpop.f32.mrb[0].mxu0
        %v3790 = vadd.f32 0.0, %v3789
        %v3791 = vpop.f32.mrb[0].mxu0
        %v3792 = vpop.f32.mrb[0].mxu0
        %v3793 = vadd.f32 0.0, %v3792
        %v3794 = vpop.f32.mrb[0].mxu0
        %3795 = vmatprep.mubr.bf16.mxu0 0
        %3796 = vmatmul.mubr.bf16.gmra.mrb[0].mxu0 %v3676
        %v3797 = vpop.f32.mrb[0].mxu0
        %v3798 = vadd.f32 0.0, %v3797
        %v3799 = vpop.f32.mrb[0].mxu0
        %v3800 = vpop.f32.mrb[0].mxu0
        %v3801 = vadd.f32 0.0, %v3800
        %v3802 = vpop.f32.mrb[0].mxu0
        %3803 = vmatprep.mubr.bf16.mxu0 0
        %3804 = vmatmul.mubr.bf16.gmra.mrb[0].mxu0 %v3679
        %v3805 = vpop.f32.mrb[0].mxu0
        %v3806 = vadd.f32 0.0, %v3805
        %v3807 = vpop.f32.mrb[0].mxu0
        %v3808 = vpop.f32.mrb[0].mxu0
        %v3809 = vadd.f32 0.0, %v3808
        %v3810 = vpop.f32.mrb[0].mxu0
        %3811 = vmatprep.mubr.bf16.mxu0 0
        %3812 = vmatmul.mubr.bf16.gmra.mrb[0].mxu0 %v3682
        %v3813 = vpop.f32.mrb[0].mxu0
        %v3814 = vadd.f32 0.0, %v3813
        %v3815 = vpop.f32.mrb[0].mxu0
        %v3816 = vpop.f32.mrb[0].mxu0
        %v3817 = vadd.f32 0.0, %v3816
        %v3818 = vpop.f32.mrb[0].mxu0
        %3819 = vmatprep.mubr.bf16.mxu0 0
        %3820 = vmatmul.mubr.bf16.gmra.mrb[0].mxu0 %v3685
        %v3821 = vpop.f32.mrb[0].mxu0
        %v3822 = vadd.f32 0.0, %v3821
        %v3823 = vpop.f32.mrb[0].mxu0
        %v3824 = vpop.f32.mrb[0].mxu0
        %v3825 = vadd.f32 0.0, %v3824
        %v3826 = vpop.f32.mrb[0].mxu0
        %3827 = vmatprep.mubr.bf16.mxu0 0
        %3828 = vmatmul.mubr.bf16.gmra.mrb[0].mxu0 %v3688
        %v3829 = vpop.f32.mrb[0].mxu0
        %v3830 = vadd.f32 0.0, %v3829
        %v3831 = vpop.f32.mrb[0].mxu0
        %v3832 = vpop.f32.mrb[0].mxu0
        %v3833 = vadd.f32 0.0, %v3832
        %v3834 = vpop.f32.mrb[0].mxu0
        %3835 = vmatprep.mubr.bf16.mxu0 0
        %3836 = vmatmul.mubr.bf16.gmra.mrb[0].mxu0 %v3691
        %v3837 = vpop.f32.mrb[0].mxu0
        %v3838 = vadd.f32 0.0, %v3837
        %v3839 = vpop.f32.mrb[0].mxu0
        %v3840 = vpop.f32.mrb[0].mxu0
        %v3841 = vadd.f32 0.0, %v3840
        %v3842 = vpop.f32.mrb[0].mxu0
        %3843 = vmatprep.mubr.bf16.mxu0 0
        %3844 = vmatmul.mubr.bf16.gmra.mrb[0].mxu0 %v3694
        %v3845 = vpop.f32.mrb[0].mxu0
        %v3846 = vadd.f32 0.0, %v3845
        %v3847 = vpop.f32.mrb[0].mxu0
        %v3848 = vpop.f32.mrb[0].mxu0
        %v3849 = vadd.f32 0.0, %v3848
        %v3850 = vpop.f32.mrb[0].mxu0
        %3851 = vmatprep.mubr.bf16.mxu0 0
        %3852 = vmatmul.mubr.bf16.gmra.mrb[0].mxu0 %v3697
        %v3853 = vpop.f32.mrb[0].mxu0
        %v3854 = vadd.f32 0.0, %v3853
        %v3855 = vpop.f32.mrb[0].mxu0
        %v3856 = vpop.f32.mrb[0].mxu0
        %v3857 = vadd.f32 0.0, %v3856
        %v3858 = vpop.f32.mrb[0].mxu0
        %3859 = vdwg.mxu0
        %v3860 = vadd.f32 %v3411, %v3734
        %v3861 = vadd.f32 %v3412, %v3737
        %v3862 = vadd.f32 %v3413, %v3742
        %v3863 = vadd.f32 %v3414, %v3745
        %v3864 = vadd.f32 %v3415, %v3750
        %v3865 = vadd.f32 %v3416, %v3753
        %v3866 = vadd.f32 %v3417, %v3758
        %v3867 = vadd.f32 %v3418, %v3761
        %v3868 = vadd.f32 %v3419, %v3766
        %v3869 = vadd.f32 %v3420, %v3769
        %v3870 = vadd.f32 %v3421, %v3774
        %v3871 = vadd.f32 %v3422, %v3777
        %v3872 = vadd.f32 %v3423, %v3782
        %v3873 = vadd.f32 %v3424, %v3785
        %v3874 = vadd.f32 %v3425, %v3790
        %v3875 = vadd.f32 %v3426, %v3793
        %v3876 = vadd.f32 %v3427, %v3798
        %v3877 = vadd.f32 %v3428, %v3801
        %v3878 = vadd.f32 %v3429, %v3806
        %v3879 = vadd.f32 %v3430, %v3809
        %v3880 = vadd.f32 %v3431, %v3814
        %v3881 = vadd.f32 %v3432, %v3817
        %v3882 = vadd.f32 %v3433, %v3822
        %v3883 = vadd.f32 %v3434, %v3825
        %v3884 = vadd.f32 %v3435, %v3830
        %v3885 = vadd.f32 %v3436, %v3833
        %v3886 = vadd.f32 %v3437, %v3838
        %v3887 = vadd.f32 %v3438, %v3841
        %v3888 = vadd.f32 %v3439, %v3846
        %v3889 = vadd.f32 %v3440, %v3849
        %v3890 = vadd.f32 %v3441, %v3854
        %v3891 = vadd.f32 %v3442, %v3857
        %3892 = vset.pattern.permute.xlu0 7
        %3893 = vperm.xlu0 %3892, %v843
        %v3894 = vpop.permute.xlu0 %3893
        %3896 = vset.pattern.permute.xlu0 7
        %3897 = vperm.xlu0 %3896, %v844
        %v3898 = vpop.permute.xlu0 %3897
        %3900 = vset.pattern.permute.xlu0 7
        %3901 = vperm.xlu0 %3900, %v845
        %v3902 = vpop.permute.xlu0 %3901
        %3904 = vset.pattern.permute.xlu0 7
        %3905 = vperm.xlu0 %3904, %v846
        %v3906 = vpop.permute.xlu0 %3905
        %3908 = vset.pattern.permute.xlu0 7
        %3909 = vperm.xlu0 %3908, %v847
        %v3910 = vpop.permute.xlu0 %3909
        %3912 = vset.pattern.permute.xlu0 7
        %3913 = vperm.xlu0 %3912, %v848
        %v3914 = vpop.permute.xlu0 %3913
        %3916 = vset.pattern.permute.xlu0 7
        %3917 = vperm.xlu0 %3916, %v849
        %v3918 = vpop.permute.xlu0 %3917
        %3920 = vset.pattern.permute.xlu0 7
        %3921 = vperm.xlu0 %3920, %v850
        %v3922 = vpop.permute.xlu0 %3921
        %3924 = vset.pattern.permute.xlu0 7
        %3925 = vperm.xlu0 %3924, %v851
        %v3926 = vpop.permute.xlu0 %3925
        %3928 = vset.pattern.permute.xlu0 7
        %3929 = vperm.xlu0 %3928, %v852
        %v3930 = vpop.permute.xlu0 %3929
        %3932 = vset.pattern.permute.xlu0 7
        %3933 = vperm.xlu0 %3932, %v853
        %v3934 = vpop.permute.xlu0 %3933
        %3936 = vset.pattern.permute.xlu0 7
        %3937 = vperm.xlu0 %3936, %v854
        %v3938 = vpop.permute.xlu0 %3937
        %3940 = vset.pattern.permute.xlu0 7
        %3941 = vperm.xlu0 %3940, %v855
        %v3942 = vpop.permute.xlu0 %3941
        %3944 = vset.pattern.permute.xlu0 7
        %3945 = vperm.xlu0 %3944, %v856
        %v3946 = vpop.permute.xlu0 %3945
        %3948 = vset.pattern.permute.xlu0 7
        %3949 = vperm.xlu0 %3948, %v857
        %v3950 = vpop.permute.xlu0 %3949
        %3952 = vset.pattern.permute.xlu0 7
        %3953 = vperm.xlu0 %3952, %v858
        %v3954 = vpop.permute.xlu0 %3953
        %3956 = vset.pattern.permute.xlu0 7
        %3957 = vperm.xlu0 %3956, %v859
        %v3958 = vpop.permute.xlu0 %3957
        %3960 = vset.pattern.permute.xlu0 7
        %3961 = vperm.xlu0 %3960, %v860
        %v3962 = vpop.permute.xlu0 %3961
        %3964 = vset.pattern.permute.xlu0 7
        %3965 = vperm.xlu0 %3964, %v861
        %v3966 = vpop.permute.xlu0 %3965
        %3968 = vset.pattern.permute.xlu0 7
        %3969 = vperm.xlu0 %3968, %v862
        %v3970 = vpop.permute.xlu0 %3969
        %3972 = vset.pattern.permute.xlu0 7
        %3973 = vperm.xlu0 %3972, %v863
        %v3974 = vpop.permute.xlu0 %3973
        %3976 = vset.pattern.permute.xlu0 7
        %3977 = vperm.xlu0 %3976, %v864
        %v3978 = vpop.permute.xlu0 %3977
        %3980 = vset.pattern.permute.xlu0 7
        %3981 = vperm.xlu0 %3980, %v865
        %v3982 = vpop.permute.xlu0 %3981
        %3984 = vset.pattern.permute.xlu0 7
        %3985 = vperm.xlu0 %3984, %v866
        %v3986 = vpop.permute.xlu0 %3985
        %3988 = vset.pattern.permute.xlu0 7
        %3989 = vperm.xlu0 %3988, %v867
        %v3990 = vpop.permute.xlu0 %3989
        %3992 = vset.pattern.permute.xlu0 7
        %3993 = vperm.xlu0 %3992, %v868
        %v3994 = vpop.permute.xlu0 %3993
        %3996 = vset.pattern.permute.xlu0 7
        %3997 = vperm.xlu0 %3996, %v869
        %v3998 = vpop.permute.xlu0 %3997
        %4000 = vset.pattern.permute.xlu0 7
        %4001 = vperm.xlu0 %4000, %v870
        %v4002 = vpop.permute.xlu0 %4001
        %4004 = vset.pattern.permute.xlu0 7
        %4005 = vperm.xlu0 %4004, %v871
        %v4006 = vpop.permute.xlu0 %4005
        %4008 = vset.pattern.permute.xlu0 7
        %4009 = vperm.xlu0 %4008, %v872
        %v4010 = vpop.permute.xlu0 %4009
        %4012 = vset.pattern.permute.xlu0 7
        %4013 = vperm.xlu0 %4012, %v873
        %v4014 = vpop.permute.xlu0 %4013
        %4016 = vset.pattern.permute.xlu0 7
        %4017 = vperm.xlu0 %4016, %v874
        %v4018 = vpop.permute.xlu0 %4017
        %v4020 = vmul.f32 %v746, %v3894
        %v4021 = vmul.f32 %v747, %v3898
        %v4022 = vmul.f32 %v748, %v3902
        %v4023 = vmul.f32 %v749, %v3906
        %v4024 = vmul.f32 %v750, %v3910
        %v4025 = vmul.f32 %v751, %v3914
        %v4026 = vmul.f32 %v752, %v3918
        %v4027 = vmul.f32 %v753, %v3922
        %v4028 = vmul.f32 %v754, %v3926
        %v4029 = vmul.f32 %v755, %v3930
        %v4030 = vmul.f32 %v756, %v3934
        %v4031 = vmul.f32 %v757, %v3938
        %v4032 = vmul.f32 %v758, %v3942
        %v4033 = vmul.f32 %v759, %v3946
        %v4034 = vmul.f32 %v760, %v3950
        %v4035 = vmul.f32 %v761, %v3954
        %v4036 = vmul.f32 %v762, %v3958
        %v4037 = vmul.f32 %v763, %v3962
        %v4038 = vmul.f32 %v764, %v3966
        %v4039 = vmul.f32 %v765, %v3970
        %v4040 = vmul.f32 %v766, %v3974
        %v4041 = vmul.f32 %v767, %v3978
        %v4042 = vmul.f32 %v768, %v3982
        %v4043 = vmul.f32 %v769, %v3986
        %v4044 = vmul.f32 %v770, %v3990
        %v4045 = vmul.f32 %v771, %v3994
        %v4046 = vmul.f32 %v772, %v3998
        %v4047 = vmul.f32 %v773, %v4002
        %v4048 = vmul.f32 %v774, %v4006
        %v4049 = vmul.f32 %v775, %v4010
        %v4050 = vmul.f32 %v744, %v4014
        %v4051 = vmul.f32 %v745, %v4018
        %v4052 = vpack.c.bf16 %v4021, %v4020
        %v4053 = vpack.c.bf16 %v4023, %v4022
        %v4054 = vpack.c.bf16 %v4025, %v4024
        %v4055 = vpack.c.bf16 %v4027, %v4026
        %v4056 = vpack.c.bf16 %v4029, %v4028
        %v4057 = vpack.c.bf16 %v4031, %v4030
        %v4058 = vpack.c.bf16 %v4033, %v4032
        %v4059 = vpack.c.bf16 %v4035, %v4034
        %v4060 = vpack.c.bf16 %v4037, %v4036
        %v4061 = vpack.c.bf16 %v4039, %v4038
        %v4062 = vpack.c.bf16 %v4041, %v4040
        %v4063 = vpack.c.bf16 %v4043, %v4042
        %v4064 = vpack.c.bf16 %v4045, %v4044
        %v4065 = vpack.c.bf16 %v4047, %v4046
        %v4066 = vpack.c.bf16 %v4049, %v4048
        %v4067 = vpack.c.bf16 %v4051, %v4050
        %v4068 = vld [vmem:[%s2 + $0xe0] sm:$0xf]
        %v4069 = vld [vmem:[%s2 + $0xe4] sm:$0xf]
        %v4070 = vld [vmem:[%s2 + $0xe8] sm:$0xf]
        %v4071 = vld [vmem:[%s2 + $0xec] sm:$0xf]
        %v4072 = vld [vmem:[%s2 + $0xf0] sm:$0xf]
        %v4073 = vld [vmem:[%s2 + $0xf4] sm:$0xf]
        %v4074 = vld [vmem:[%s2 + $0xf8] sm:$0xf]
        %v4075 = vld [vmem:[%s2 + $0xfc] sm:$0xf]
        %v4084 = vunpack.c.l.b16 %v4068
        %v4085 = vunpack.c.l.b16 %v4069
        %v4086 = vunpack.c.l.b16 %v4070
        %v4087 = vunpack.c.l.b16 %v4071
        %v4088 = vunpack.c.l.b16 %v4072
        %v4089 = vunpack.c.l.b16 %v4073
        %v4090 = vunpack.c.l.b16 %v4074
        %v4091 = vunpack.c.l.b16 %v4075
        %v4092 = vpack.c.b16 %v4085, %v4084
        %v4093 = vpack.c.b16 %v4087, %v4086
        %v4094 = vpack.c.b16 %v4089, %v4088
        %v4095 = vpack.c.b16 %v4091, %v4090
        %v4101 = vsel %vm1299, %v4052, 0
        %v4104 = vsel %vm1299, %v4053, 0
        %v4107 = vsel %vm1299, %v4054, 0
        %v4110 = vsel %vm1299, %v4055, 0
        %v4113 = vsel %vm1299, %v4056, 0
        %v4116 = vsel %vm1299, %v4057, 0
        %v4119 = vsel %vm1299, %v4058, 0
        %v4122 = vsel %vm1299, %v4059, 0
        %v4125 = vsel %vm1299, %v4060, 0
        %v4128 = vsel %vm1299, %v4061, 0
        %v4131 = vsel %vm1299, %v4062, 0
        %v4134 = vsel %vm1299, %v4063, 0
        %v4137 = vsel %vm1299, %v4064, 0
        %v4140 = vsel %vm1299, %v4065, 0
        %v4143 = vsel %vm1299, %v4066, 0
        %v4146 = vsel %vm1299, %v4067, 0
        %4148 = vmatprep.subr.bf16.mxu0 0
        %4149 = vmatpush1.bf16.msra.mxu0 %v4092
        %4150 = vmatprep.subr.bf16.mxu0 0
        %4151 = vmatpush1.bf16.msra.mxu0 %v4093
        %4152 = vmatprep.subr.bf16.mxu0 0
        %4153 = vmatpush1.bf16.msra.mxu0 %v4094
        %4154 = vmatprep.subr.bf16.mxu0 0
        %4155 = vmatpush1.bf16.msra.mxu0 %v4095
        %4156 = vmatprep.subr.bf16.mxu0 0
        %4157 = vmatpush1.bf16.msra.mxu0 0
        %4158 = vmatprep.subr.bf16.mxu0 0
        %4159 = vmatpush1.bf16.msra.mxu0 0
        %4160 = vmatprep.subr.bf16.mxu0 0
        %4161 = vmatpush1.bf16.msra.mxu0 0
        %4162 = vmatprep.subr.bf16.mxu0 0
        %4163 = vmatpush1.bf16.msra.mxu0 0
        %4164 = vmatprep.subr.bf16.mxu0 0
        %4165 = vmatpush1.bf16.msra.mxu0 0
        %4166 = vmatprep.subr.bf16.mxu0 0
        %4167 = vmatpush1.bf16.msra.mxu0 0
        %4168 = vmatprep.subr.bf16.mxu0 0
        %4169 = vmatpush1.bf16.msra.mxu0 0
        %4170 = vmatprep.subr.bf16.mxu0 0
        %4171 = vmatpush1.bf16.msra.mxu0 0
        %4172 = vmatprep.subr.bf16.mxu0 0
        %4173 = vmatpush1.bf16.msra.mxu0 0
        %4174 = vmatprep.subr.bf16.mxu0 0
        %4175 = vmatpush1.bf16.msra.mxu0 0
        %4176 = vmatprep.subr.bf16.mxu0 0
        %4177 = vmatpush1.bf16.msra.mxu0 0
        %4178 = vmatprep.subr.bf16.mxu0 0
        %4179 = vmatpush1.bf16.msra.mxu0 0
        %4180 = vmatprep.mubr.bf16.mxu0 0
        %4181 = vmatmul.mubr.bf16.gmra.mrb[0].mxu0 %v4101
        %v4182 = vpop.f32.mrb[0].mxu0
        %v4183 = vadd.f32 0.0, %v4182
        %v4184 = vpop.f32.mrb[0].mxu0
        %v4185 = vpop.f32.mrb[0].mxu0
        %v4186 = vadd.f32 0.0, %v4185
        %v4187 = vpop.f32.mrb[0].mxu0
        %4188 = vmatprep.mubr.bf16.mxu0 0
        %4189 = vmatmul.mubr.bf16.gmra.mrb[0].mxu0 %v4104
        %v4190 = vpop.f32.mrb[0].mxu0
        %v4191 = vadd.f32 0.0, %v4190
        %v4192 = vpop.f32.mrb[0].mxu0
        %v4193 = vpop.f32.mrb[0].mxu0
        %v4194 = vadd.f32 0.0, %v4193
        %v4195 = vpop.f32.mrb[0].mxu0
        %4196 = vmatprep.mubr.bf16.mxu0 0
        %4197 = vmatmul.mubr.bf16.gmra.mrb[0].mxu0 %v4107
        %v4198 = vpop.f32.mrb[0].mxu0
        %v4199 = vadd.f32 0.0, %v4198
        %v4200 = vpop.f32.mrb[0].mxu0
        %v4201 = vpop.f32.mrb[0].mxu0
        %v4202 = vadd.f32 0.0, %v4201
        %v4203 = vpop.f32.mrb[0].mxu0
        %4204 = vmatprep.mubr.bf16.mxu0 0
        %4205 = vmatmul.mubr.bf16.gmra.mrb[0].mxu0 %v4110
        %v4206 = vpop.f32.mrb[0].mxu0
        %v4207 = vadd.f32 0.0, %v4206
        %v4208 = vpop.f32.mrb[0].mxu0
        %v4209 = vpop.f32.mrb[0].mxu0
        %v4210 = vadd.f32 0.0, %v4209
        %v4211 = vpop.f32.mrb[0].mxu0
        %4212 = vmatprep.mubr.bf16.mxu0 0
        %4213 = vmatmul.mubr.bf16.gmra.mrb[0].mxu0 %v4113
        %v4214 = vpop.f32.mrb[0].mxu0
        %v4215 = vadd.f32 0.0, %v4214
        %v4216 = vpop.f32.mrb[0].mxu0
        %v4217 = vpop.f32.mrb[0].mxu0
        %v4218 = vadd.f32 0.0, %v4217
        %v4219 = vpop.f32.mrb[0].mxu0
        %4220 = vmatprep.mubr.bf16.mxu0 0
        %4221 = vmatmul.mubr.bf16.gmra.mrb[0].mxu0 %v4116
        %v4222 = vpop.f32.mrb[0].mxu0
        %v4223 = vadd.f32 0.0, %v4222
        %v4224 = vpop.f32.mrb[0].mxu0
        %v4225 = vpop.f32.mrb[0].mxu0
        %v4226 = vadd.f32 0.0, %v4225
        %v4227 = vpop.f32.mrb[0].mxu0
        %4228 = vmatprep.mubr.bf16.mxu0 0
        %4229 = vmatmul.mubr.bf16.gmra.mrb[0].mxu0 %v4119
        %v4230 = vpop.f32.mrb[0].mxu0
        %v4231 = vadd.f32 0.0, %v4230
        %v4232 = vpop.f32.mrb[0].mxu0
        %v4233 = vpop.f32.mrb[0].mxu0
        %v4234 = vadd.f32 0.0, %v4233
        %v4235 = vpop.f32.mrb[0].mxu0
        %4236 = vmatprep.mubr.bf16.mxu0 0
        %4237 = vmatmul.mubr.bf16.gmra.mrb[0].mxu0 %v4122
        %v4238 = vpop.f32.mrb[0].mxu0
        %v4239 = vadd.f32 0.0, %v4238
        %v4240 = vpop.f32.mrb[0].mxu0
        %v4241 = vpop.f32.mrb[0].mxu0
        %v4242 = vadd.f32 0.0, %v4241
        %v4243 = vpop.f32.mrb[0].mxu0
        %4244 = vmatprep.mubr.bf16.mxu0 0
        %4245 = vmatmul.mubr.bf16.gmra.mrb[0].mxu0 %v4125
        %v4246 = vpop.f32.mrb[0].mxu0
        %v4247 = vadd.f32 0.0, %v4246
        %v4248 = vpop.f32.mrb[0].mxu0
        %v4249 = vpop.f32.mrb[0].mxu0
        %v4250 = vadd.f32 0.0, %v4249
        %v4251 = vpop.f32.mrb[0].mxu0
        %4252 = vmatprep.mubr.bf16.mxu0 0
        %4253 = vmatmul.mubr.bf16.gmra.mrb[0].mxu0 %v4128
        %v4254 = vpop.f32.mrb[0].mxu0
        %v4255 = vadd.f32 0.0, %v4254
        %v4256 = vpop.f32.mrb[0].mxu0
        %v4257 = vpop.f32.mrb[0].mxu0
        %v4258 = vadd.f32 0.0, %v4257
        %v4259 = vpop.f32.mrb[0].mxu0
        %4260 = vmatprep.mubr.bf16.mxu0 0
        %4261 = vmatmul.mubr.bf16.gmra.mrb[0].mxu0 %v4131
        %v4262 = vpop.f32.mrb[0].mxu0
        %v4263 = vadd.f32 0.0, %v4262
        %v4264 = vpop.f32.mrb[0].mxu0
        %v4265 = vpop.f32.mrb[0].mxu0
        %v4266 = vadd.f32 0.0, %v4265
        %v4267 = vpop.f32.mrb[0].mxu0
        %4268 = vmatprep.mubr.bf16.mxu0 0
        %4269 = vmatmul.mubr.bf16.gmra.mrb[0].mxu0 %v4134
        %v4270 = vpop.f32.mrb[0].mxu0
        %v4271 = vadd.f32 0.0, %v4270
        %v4272 = vpop.f32.mrb[0].mxu0
        %v4273 = vpop.f32.mrb[0].mxu0
        %v4274 = vadd.f32 0.0, %v4273
        %v4275 = vpop.f32.mrb[0].mxu0
        %4276 = vmatprep.mubr.bf16.mxu0 0
        %4277 = vmatmul.mubr.bf16.gmra.mrb[0].mxu0 %v4137
        %v4278 = vpop.f32.mrb[0].mxu0
        %v4279 = vadd.f32 0.0, %v4278
        %v4280 = vpop.f32.mrb[0].mxu0
        %v4281 = vpop.f32.mrb[0].mxu0
        %v4282 = vadd.f32 0.0, %v4281
        %v4283 = vpop.f32.mrb[0].mxu0
        %4284 = vmatprep.mubr.bf16.mxu0 0
        %4285 = vmatmul.mubr.bf16.gmra.mrb[0].mxu0 %v4140
        %v4286 = vpop.f32.mrb[0].mxu0
        %v4287 = vadd.f32 0.0, %v4286
        %v4288 = vpop.f32.mrb[0].mxu0
        %v4289 = vpop.f32.mrb[0].mxu0
        %v4290 = vadd.f32 0.0, %v4289
        %v4291 = vpop.f32.mrb[0].mxu0
        %4292 = vmatprep.mubr.bf16.mxu0 0
        %4293 = vmatmul.mubr.bf16.gmra.mrb[0].mxu0 %v4143
        %v4294 = vpop.f32.mrb[0].mxu0
        %v4295 = vadd.f32 0.0, %v4294
        %v4296 = vpop.f32.mrb[0].mxu0
        %v4297 = vpop.f32.mrb[0].mxu0
        %v4298 = vadd.f32 0.0, %v4297
        %v4299 = vpop.f32.mrb[0].mxu0
        %4300 = vmatprep.mubr.bf16.mxu0 0
        %4301 = vmatmul.mubr.bf16.gmra.mrb[0].mxu0 %v4146
        %v4302 = vpop.f32.mrb[0].mxu0
        %v4303 = vadd.f32 0.0, %v4302
        %v4304 = vpop.f32.mrb[0].mxu0
        %v4305 = vpop.f32.mrb[0].mxu0
        %v4306 = vadd.f32 0.0, %v4305
        %v4307 = vpop.f32.mrb[0].mxu0
        %4308 = vdwg.mxu0
        %v4309 = vadd.f32 %v3860, %v4183
        %v4310 = vadd.f32 %v3861, %v4186
        %v4311 = vadd.f32 %v3862, %v4191
        %v4312 = vadd.f32 %v3863, %v4194
        %v4313 = vadd.f32 %v3864, %v4199
        %v4314 = vadd.f32 %v3865, %v4202
        %v4315 = vadd.f32 %v3866, %v4207
        %v4316 = vadd.f32 %v3867, %v4210
        %v4317 = vadd.f32 %v3868, %v4215
        %v4318 = vadd.f32 %v3869, %v4218
        %v4319 = vadd.f32 %v3870, %v4223
        %v4320 = vadd.f32 %v3871, %v4226
        %v4321 = vadd.f32 %v3872, %v4231
        %v4322 = vadd.f32 %v3873, %v4234
        %v4323 = vadd.f32 %v3874, %v4239
        %v4324 = vadd.f32 %v3875, %v4242
        %v4325 = vadd.f32 %v3876, %v4247
        %v4326 = vadd.f32 %v3877, %v4250
        %v4327 = vadd.f32 %v3878, %v4255
        %v4328 = vadd.f32 %v3879, %v4258
        %v4329 = vadd.f32 %v3880, %v4263
        %v4330 = vadd.f32 %v3881, %v4266
        %v4331 = vadd.f32 %v3882, %v4271
        %v4332 = vadd.f32 %v3883, %v4274
        %v4333 = vadd.f32 %v3884, %v4279
        %v4334 = vadd.f32 %v3885, %v4282
        %v4335 = vadd.f32 %v3886, %v4287
        %v4336 = vadd.f32 %v3887, %v4290
        %v4337 = vadd.f32 %v3888, %v4295
        %v4338 = vadd.f32 %v3889, %v4298
        %v4339 = vadd.f32 %v3890, %v4303
        %v4340 = vadd.f32 %v3891, %v4306
        %4341 = vset.pattern.permute.xlu0 8
        %4342 = vperm.xlu0 %4341, %v843
        %v4343 = vpop.permute.xlu0 %4342
        %4345 = vset.pattern.permute.xlu0 8
        %4346 = vperm.xlu0 %4345, %v844
        %v4347 = vpop.permute.xlu0 %4346
        %4349 = vset.pattern.permute.xlu0 8
        %4350 = vperm.xlu0 %4349, %v845
        %v4351 = vpop.permute.xlu0 %4350
        %4353 = vset.pattern.permute.xlu0 8
        %4354 = vperm.xlu0 %4353, %v846
        %v4355 = vpop.permute.xlu0 %4354
        %4357 = vset.pattern.permute.xlu0 8
        %4358 = vperm.xlu0 %4357, %v847
        %v4359 = vpop.permute.xlu0 %4358
        %4361 = vset.pattern.permute.xlu0 8
        %4362 = vperm.xlu0 %4361, %v848
        %v4363 = vpop.permute.xlu0 %4362
        %4365 = vset.pattern.permute.xlu0 8
        %4366 = vperm.xlu0 %4365, %v849
        %v4367 = vpop.permute.xlu0 %4366
        %4369 = vset.pattern.permute.xlu0 8
        %4370 = vperm.xlu0 %4369, %v850
        %v4371 = vpop.permute.xlu0 %4370
        %4373 = vset.pattern.permute.xlu0 8
        %4374 = vperm.xlu0 %4373, %v851
        %v4375 = vpop.permute.xlu0 %4374
        %4377 = vset.pattern.permute.xlu0 8
        %4378 = vperm.xlu0 %4377, %v852
        %v4379 = vpop.permute.xlu0 %4378
        %4381 = vset.pattern.permute.xlu0 8
        %4382 = vperm.xlu0 %4381, %v853
        %v4383 = vpop.permute.xlu0 %4382
        %4385 = vset.pattern.permute.xlu0 8
        %4386 = vperm.xlu0 %4385, %v854
        %v4387 = vpop.permute.xlu0 %4386
        %4389 = vset.pattern.permute.xlu0 8
        %4390 = vperm.xlu0 %4389, %v855
        %v4391 = vpop.permute.xlu0 %4390
        %4393 = vset.pattern.permute.xlu0 8
        %4394 = vperm.xlu0 %4393, %v856
        %v4395 = vpop.permute.xlu0 %4394
        %4397 = vset.pattern.permute.xlu0 8
        %4398 = vperm.xlu0 %4397, %v857
        %v4399 = vpop.permute.xlu0 %4398
        %4401 = vset.pattern.permute.xlu0 8
        %4402 = vperm.xlu0 %4401, %v858
        %v4403 = vpop.permute.xlu0 %4402
        %4405 = vset.pattern.permute.xlu0 8
        %4406 = vperm.xlu0 %4405, %v859
        %v4407 = vpop.permute.xlu0 %4406
        %4409 = vset.pattern.permute.xlu0 8
        %4410 = vperm.xlu0 %4409, %v860
        %v4411 = vpop.permute.xlu0 %4410
        %4413 = vset.pattern.permute.xlu0 8
        %4414 = vperm.xlu0 %4413, %v861
        %v4415 = vpop.permute.xlu0 %4414
        %4417 = vset.pattern.permute.xlu0 8
        %4418 = vperm.xlu0 %4417, %v862
        %v4419 = vpop.permute.xlu0 %4418
        %4421 = vset.pattern.permute.xlu0 8
        %4422 = vperm.xlu0 %4421, %v863
        %v4423 = vpop.permute.xlu0 %4422
        %4425 = vset.pattern.permute.xlu0 8
        %4426 = vperm.xlu0 %4425, %v864
        %v4427 = vpop.permute.xlu0 %4426
        %4429 = vset.pattern.permute.xlu0 8
        %4430 = vperm.xlu0 %4429, %v865
        %v4431 = vpop.permute.xlu0 %4430
        %4433 = vset.pattern.permute.xlu0 8
        %4434 = vperm.xlu0 %4433, %v866
        %v4435 = vpop.permute.xlu0 %4434
        %4437 = vset.pattern.permute.xlu0 8
        %4438 = vperm.xlu0 %4437, %v867
        %v4439 = vpop.permute.xlu0 %4438
        %4441 = vset.pattern.permute.xlu0 8
        %4442 = vperm.xlu0 %4441, %v868
        %v4443 = vpop.permute.xlu0 %4442
        %4445 = vset.pattern.permute.xlu0 8
        %4446 = vperm.xlu0 %4445, %v869
        %v4447 = vpop.permute.xlu0 %4446
        %4449 = vset.pattern.permute.xlu0 8
        %4450 = vperm.xlu0 %4449, %v870
        %v4451 = vpop.permute.xlu0 %4450
        %4453 = vset.pattern.permute.xlu0 8
        %4454 = vperm.xlu0 %4453, %v871
        %v4455 = vpop.permute.xlu0 %4454
        %4457 = vset.pattern.permute.xlu0 8
        %4458 = vperm.xlu0 %4457, %v872
        %v4459 = vpop.permute.xlu0 %4458
        %4461 = vset.pattern.permute.xlu0 8
        %4462 = vperm.xlu0 %4461, %v873
        %v4463 = vpop.permute.xlu0 %4462
        %4465 = vset.pattern.permute.xlu0 8
        %4466 = vperm.xlu0 %4465, %v874
        %v4467 = vpop.permute.xlu0 %4466
        %v4469 = vmul.f32 %v1803, %v4343
        %v4470 = vmul.f32 %v1802, %v4347
        %v4471 = vmul.f32 %v1801, %v4351
        %v4472 = vmul.f32 %v1800, %v4355
        %v4473 = vmul.f32 %v1799, %v4359
        %v4474 = vmul.f32 %v1798, %v4363
        %v4475 = vmul.f32 %v1797, %v4367
        %v4476 = vmul.f32 %v1796, %v4371
        %v4477 = vmul.f32 %v1795, %v4375
        %v4478 = vmul.f32 %v1794, %v4379
        %v4479 = vmul.f32 %v1793, %v4383
        %v4480 = vmul.f32 %v1792, %v4387
        %v4481 = vmul.f32 %v1791, %v4391
        %v4482 = vmul.f32 %v1790, %v4395
        %v4483 = vmul.f32 %v1789, %v4399
        %v4484 = vmul.f32 %v1788, %v4403
        %v4485 = vmul.f32 %v1787, %v4407
        %v4486 = vmul.f32 %v1786, %v4411
        %v4487 = vmul.f32 %v1785, %v4415
        %v4488 = vmul.f32 %v1784, %v4419
        %v4489 = vmul.f32 %v1783, %v4423
        %v4490 = vmul.f32 %v1782, %v4427
        %v4491 = vmul.f32 %v1781, %v4431
        %v4492 = vmul.f32 %v1780, %v4435
        %v4493 = vmul.f32 %v1779, %v4439
        %v4494 = vmul.f32 %v1778, %v4443
        %v4495 = vmul.f32 %v1777, %v4447
        %v4496 = vmul.f32 %v1776, %v4451
        %v4497 = vmul.f32 %v1775, %v4455
        %v4498 = vmul.f32 %v1806, %v4459
        %v4499 = vmul.f32 %v1805, %v4463
        %v4500 = vmul.f32 %v1804, %v4467
        %v4501 = vpack.c.bf16 %v4470, %v4469
        %v4502 = vpack.c.bf16 %v4472, %v4471
        %v4503 = vpack.c.bf16 %v4474, %v4473
        %v4504 = vpack.c.bf16 %v4476, %v4475
        %v4505 = vpack.c.bf16 %v4478, %v4477
        %v4506 = vpack.c.bf16 %v4480, %v4479
        %v4507 = vpack.c.bf16 %v4482, %v4481
        %v4508 = vpack.c.bf16 %v4484, %v4483
        %v4509 = vpack.c.bf16 %v4486, %v4485
        %v4510 = vpack.c.bf16 %v4488, %v4487
        %v4511 = vpack.c.bf16 %v4490, %v4489
        %v4512 = vpack.c.bf16 %v4492, %v4491
        %v4513 = vpack.c.bf16 %v4494, %v4493
        %v4514 = vpack.c.bf16 %v4496, %v4495
        %v4515 = vpack.c.bf16 %v4498, %v4497
        %v4516 = vpack.c.bf16 %v4500, %v4499
        %v4517 = vld [vmem:[%s2 + $0x100] sm:$0xf]
        %v4518 = vld [vmem:[%s2 + $0x104] sm:$0xf]
        %v4519 = vld [vmem:[%s2 + $0x108] sm:$0xf]
        %v4520 = vld [vmem:[%s2 + $0x10c] sm:$0xf]
        %v4521 = vld [vmem:[%s2 + $0x110] sm:$0xf]
        %v4522 = vld [vmem:[%s2 + $0x114] sm:$0xf]
        %v4523 = vld [vmem:[%s2 + $0x118] sm:$0xf]
        %v4524 = vld [vmem:[%s2 + $0x11c] sm:$0xf]
        %v4533 = vunpack.c.l.b16 %v4517
        %v4534 = vunpack.c.l.b16 %v4518
        %v4535 = vunpack.c.l.b16 %v4519
        %v4536 = vunpack.c.l.b16 %v4520
        %v4537 = vunpack.c.l.b16 %v4521
        %v4538 = vunpack.c.l.b16 %v4522
        %v4539 = vunpack.c.l.b16 %v4523
        %v4540 = vunpack.c.l.b16 %v4524
        %v4541 = vpack.c.b16 %v4534, %v4533
        %v4542 = vpack.c.b16 %v4536, %v4535
        %v4543 = vpack.c.b16 %v4538, %v4537
        %v4544 = vpack.c.b16 %v4540, %v4539
        %v4550 = vsel %vm1299, %v4501, 0
        %v4553 = vsel %vm1299, %v4502, 0
        %v4556 = vsel %vm1299, %v4503, 0
        %v4559 = vsel %vm1299, %v4504, 0
        %v4562 = vsel %vm1299, %v4505, 0
        %v4565 = vsel %vm1299, %v4506, 0
        %v4568 = vsel %vm1299, %v4507, 0
        %v4571 = vsel %vm1299, %v4508, 0
        %v4574 = vsel %vm1299, %v4509, 0
        %v4577 = vsel %vm1299, %v4510, 0
        %v4580 = vsel %vm1299, %v4511, 0
        %v4583 = vsel %vm1299, %v4512, 0
        %v4586 = vsel %vm1299, %v4513, 0
        %v4589 = vsel %vm1299, %v4514, 0
        %v4592 = vsel %vm1299, %v4515, 0
        %v4595 = vsel %vm1299, %v4516, 0
        %4597 = vmatprep.subr.bf16.mxu0 0
        %4598 = vmatpush1.bf16.msra.mxu0 %v4541
        %4599 = vmatprep.subr.bf16.mxu0 0
        %4600 = vmatpush1.bf16.msra.mxu0 %v4542
        %4601 = vmatprep.subr.bf16.mxu0 0
        %4602 = vmatpush1.bf16.msra.mxu0 %v4543
        %4603 = vmatprep.subr.bf16.mxu0 0
        %4604 = vmatpush1.bf16.msra.mxu0 %v4544
        %4605 = vmatprep.subr.bf16.mxu0 0
        %4606 = vmatpush1.bf16.msra.mxu0 0
        %4607 = vmatprep.subr.bf16.mxu0 0
        %4608 = vmatpush1.bf16.msra.mxu0 0
        %4609 = vmatprep.subr.bf16.mxu0 0
        %4610 = vmatpush1.bf16.msra.mxu0 0
        %4611 = vmatprep.subr.bf16.mxu0 0
        %4612 = vmatpush1.bf16.msra.mxu0 0
        %4613 = vmatprep.subr.bf16.mxu0 0
        %4614 = vmatpush1.bf16.msra.mxu0 0
        %4615 = vmatprep.subr.bf16.mxu0 0
        %4616 = vmatpush1.bf16.msra.mxu0 0
        %4617 = vmatprep.subr.bf16.mxu0 0
        %4618 = vmatpush1.bf16.msra.mxu0 0
        %4619 = vmatprep.subr.bf16.mxu0 0
        %4620 = vmatpush1.bf16.msra.mxu0 0
        %4621 = vmatprep.subr.bf16.mxu0 0
        %4622 = vmatpush1.bf16.msra.mxu0 0
        %4623 = vmatprep.subr.bf16.mxu0 0
        %4624 = vmatpush1.bf16.msra.mxu0 0
        %4625 = vmatprep.subr.bf16.mxu0 0
        %4626 = vmatpush1.bf16.msra.mxu0 0
        %4627 = vmatprep.subr.bf16.mxu0 0
        %4628 = vmatpush1.bf16.msra.mxu0 0
        %4629 = vmatprep.mubr.bf16.mxu0 0
        %4630 = vmatmul.mubr.bf16.gmra.mrb[0].mxu0 %v4550
        %v4631 = vpop.f32.mrb[0].mxu0
        %v4632 = vadd.f32 0.0, %v4631
        %v4633 = vpop.f32.mrb[0].mxu0
        %v4634 = vpop.f32.mrb[0].mxu0
        %v4635 = vadd.f32 0.0, %v4634
        %v4636 = vpop.f32.mrb[0].mxu0
        %4637 = vmatprep.mubr.bf16.mxu0 0
        %4638 = vmatmul.mubr.bf16.gmra.mrb[0].mxu0 %v4553
        %v4639 = vpop.f32.mrb[0].mxu0
        %v4640 = vadd.f32 0.0, %v4639
        %v4641 = vpop.f32.mrb[0].mxu0
        %v4642 = vpop.f32.mrb[0].mxu0
        %v4643 = vadd.f32 0.0, %v4642
        %v4644 = vpop.f32.mrb[0].mxu0
        %4645 = vmatprep.mubr.bf16.mxu0 0
        %4646 = vmatmul.mubr.bf16.gmra.mrb[0].mxu0 %v4556
        %v4647 = vpop.f32.mrb[0].mxu0
        %v4648 = vadd.f32 0.0, %v4647
        %v4649 = vpop.f32.mrb[0].mxu0
        %v4650 = vpop.f32.mrb[0].mxu0
        %v4651 = vadd.f32 0.0, %v4650
        %v4652 = vpop.f32.mrb[0].mxu0
        %4653 = vmatprep.mubr.bf16.mxu0 0
        %4654 = vmatmul.mubr.bf16.gmra.mrb[0].mxu0 %v4559
        %v4655 = vpop.f32.mrb[0].mxu0
        %v4656 = vadd.f32 0.0, %v4655
        %v4657 = vpop.f32.mrb[0].mxu0
        %v4658 = vpop.f32.mrb[0].mxu0
        %v4659 = vadd.f32 0.0, %v4658
        %v4660 = vpop.f32.mrb[0].mxu0
        %4661 = vmatprep.mubr.bf16.mxu0 0
        %4662 = vmatmul.mubr.bf16.gmra.mrb[0].mxu0 %v4562
        %v4663 = vpop.f32.mrb[0].mxu0
        %v4664 = vadd.f32 0.0, %v4663
        %v4665 = vpop.f32.mrb[0].mxu0
        %v4666 = vpop.f32.mrb[0].mxu0
        %v4667 = vadd.f32 0.0, %v4666
        %v4668 = vpop.f32.mrb[0].mxu0
        %4669 = vmatprep.mubr.bf16.mxu0 0
        %4670 = vmatmul.mubr.bf16.gmra.mrb[0].mxu0 %v4565
        %v4671 = vpop.f32.mrb[0].mxu0
        %v4672 = vadd.f32 0.0, %v4671
        %v4673 = vpop.f32.mrb[0].mxu0
        %v4674 = vpop.f32.mrb[0].mxu0
        %v4675 = vadd.f32 0.0, %v4674
        %v4676 = vpop.f32.mrb[0].mxu0
        %4677 = vmatprep.mubr.bf16.mxu0 0
        %4678 = vmatmul.mubr.bf16.gmra.mrb[0].mxu0 %v4568
        %v4679 = vpop.f32.mrb[0].mxu0
        %v4680 = vadd.f32 0.0, %v4679
        %v4681 = vpop.f32.mrb[0].mxu0
        %v4682 = vpop.f32.mrb[0].mxu0
        %v4683 = vadd.f32 0.0, %v4682
        %v4684 = vpop.f32.mrb[0].mxu0
        %4685 = vmatprep.mubr.bf16.mxu0 0
        %4686 = vmatmul.mubr.bf16.gmra.mrb[0].mxu0 %v4571
        %v4687 = vpop.f32.mrb[0].mxu0
        %v4688 = vadd.f32 0.0, %v4687
        %v4689 = vpop.f32.mrb[0].mxu0
        %v4690 = vpop.f32.mrb[0].mxu0
        %v4691 = vadd.f32 0.0, %v4690
        %v4692 = vpop.f32.mrb[0].mxu0
        %4693 = vmatprep.mubr.bf16.mxu0 0
        %4694 = vmatmul.mubr.bf16.gmra.mrb[0].mxu0 %v4574
        %v4695 = vpop.f32.mrb[0].mxu0
        %v4696 = vadd.f32 0.0, %v4695
        %v4697 = vpop.f32.mrb[0].mxu0
        %v4698 = vpop.f32.mrb[0].mxu0
        %v4699 = vadd.f32 0.0, %v4698
        %v4700 = vpop.f32.mrb[0].mxu0
        %4701 = vmatprep.mubr.bf16.mxu0 0
        %4702 = vmatmul.mubr.bf16.gmra.mrb[0].mxu0 %v4577
        %v4703 = vpop.f32.mrb[0].mxu0
        %v4704 = vadd.f32 0.0, %v4703
        %v4705 = vpop.f32.mrb[0].mxu0
        %v4706 = vpop.f32.mrb[0].mxu0
        %v4707 = vadd.f32 0.0, %v4706
        %v4708 = vpop.f32.mrb[0].mxu0
        %4709 = vmatprep.mubr.bf16.mxu0 0
        %4710 = vmatmul.mubr.bf16.gmra.mrb[0].mxu0 %v4580
        %v4711 = vpop.f32.mrb[0].mxu0
        %v4712 = vadd.f32 0.0, %v4711
        %v4713 = vpop.f32.mrb[0].mxu0
        %v4714 = vpop.f32.mrb[0].mxu0
        %v4715 = vadd.f32 0.0, %v4714
        %v4716 = vpop.f32.mrb[0].mxu0
        %4717 = vmatprep.mubr.bf16.mxu0 0
        %4718 = vmatmul.mubr.bf16.gmra.mrb[0].mxu0 %v4583
        %v4719 = vpop.f32.mrb[0].mxu0
        %v4720 = vadd.f32 0.0, %v4719
        %v4721 = vpop.f32.mrb[0].mxu0
        %v4722 = vpop.f32.mrb[0].mxu0
        %v4723 = vadd.f32 0.0, %v4722
        %v4724 = vpop.f32.mrb[0].mxu0
        %4725 = vmatprep.mubr.bf16.mxu0 0
        %4726 = vmatmul.mubr.bf16.gmra.mrb[0].mxu0 %v4586
        %v4727 = vpop.f32.mrb[0].mxu0
        %v4728 = vadd.f32 0.0, %v4727
        %v4729 = vpop.f32.mrb[0].mxu0
        %v4730 = vpop.f32.mrb[0].mxu0
        %v4731 = vadd.f32 0.0, %v4730
        %v4732 = vpop.f32.mrb[0].mxu0
        %4733 = vmatprep.mubr.bf16.mxu0 0
        %4734 = vmatmul.mubr.bf16.gmra.mrb[0].mxu0 %v4589
        %v4735 = vpop.f32.mrb[0].mxu0
        %v4736 = vadd.f32 0.0, %v4735
        %v4737 = vpop.f32.mrb[0].mxu0
        %v4738 = vpop.f32.mrb[0].mxu0
        %v4739 = vadd.f32 0.0, %v4738
        %v4740 = vpop.f32.mrb[0].mxu0
        %4741 = vmatprep.mubr.bf16.mxu0 0
        %4742 = vmatmul.mubr.bf16.gmra.mrb[0].mxu0 %v4592
        %v4743 = vpop.f32.mrb[0].mxu0
        %v4744 = vadd.f32 0.0, %v4743
        %v4745 = vpop.f32.mrb[0].mxu0
        %v4746 = vpop.f32.mrb[0].mxu0
        %v4747 = vadd.f32 0.0, %v4746
        %v4748 = vpop.f32.mrb[0].mxu0
        %4749 = vmatprep.mubr.bf16.mxu0 0
        %4750 = vmatmul.mubr.bf16.gmra.mrb[0].mxu0 %v4595
        %v4751 = vpop.f32.mrb[0].mxu0
        %v4752 = vadd.f32 0.0, %v4751
        %v4753 = vpop.f32.mrb[0].mxu0
        %v4754 = vpop.f32.mrb[0].mxu0
        %v4755 = vadd.f32 0.0, %v4754
        %v4756 = vpop.f32.mrb[0].mxu0
        %4757 = vdwg.mxu0
        %v4758 = vadd.f32 %v4309, %v4632
        %v4759 = vadd.f32 %v4310, %v4635
        %v4760 = vadd.f32 %v4311, %v4640
        %v4761 = vadd.f32 %v4312, %v4643
        %v4762 = vadd.f32 %v4313, %v4648
        %v4763 = vadd.f32 %v4314, %v4651
        %v4764 = vadd.f32 %v4315, %v4656
        %v4765 = vadd.f32 %v4316, %v4659
        %v4766 = vadd.f32 %v4317, %v4664
        %v4767 = vadd.f32 %v4318, %v4667
        %v4768 = vadd.f32 %v4319, %v4672
        %v4769 = vadd.f32 %v4320, %v4675
        %v4770 = vadd.f32 %v4321, %v4680
        %v4771 = vadd.f32 %v4322, %v4683
        %v4772 = vadd.f32 %v4323, %v4688
        %v4773 = vadd.f32 %v4324, %v4691
        %v4774 = vadd.f32 %v4325, %v4696
        %v4775 = vadd.f32 %v4326, %v4699
        %v4776 = vadd.f32 %v4327, %v4704
        %v4777 = vadd.f32 %v4328, %v4707
        %v4778 = vadd.f32 %v4329, %v4712
        %v4779 = vadd.f32 %v4330, %v4715
        %v4780 = vadd.f32 %v4331, %v4720
        %v4781 = vadd.f32 %v4332, %v4723
        %v4782 = vadd.f32 %v4333, %v4728
        %v4783 = vadd.f32 %v4334, %v4731
        %v4784 = vadd.f32 %v4335, %v4736
        %v4785 = vadd.f32 %v4336, %v4739
        %v4786 = vadd.f32 %v4337, %v4744
        %v4787 = vadd.f32 %v4338, %v4747
        %v4788 = vadd.f32 %v4339, %v4752
        %v4789 = vadd.f32 %v4340, %v4755
        %v4790 = vmul.f32 %v4758, 0.2
        %v4791 = vmul.f32 %v4759, 0.2
        %v4792 = vmul.f32 %v4760, 0.2
        %v4793 = vmul.f32 %v4761, 0.2
        %v4794 = vmul.f32 %v4762, 0.2
        %v4795 = vmul.f32 %v4763, 0.2
        %v4796 = vmul.f32 %v4764, 0.2
        %v4797 = vmul.f32 %v4765, 0.2
        %v4798 = vmul.f32 %v4766, 0.2
        %v4799 = vmul.f32 %v4767, 0.2
        %v4800 = vmul.f32 %v4768, 0.2
        %v4801 = vmul.f32 %v4769, 0.2
        %v4802 = vmul.f32 %v4770, 0.2
        %v4803 = vmul.f32 %v4771, 0.2
        %v4804 = vmul.f32 %v4772, 0.2
        %v4805 = vmul.f32 %v4773, 0.2
        %v4806 = vmul.f32 %v4774, 0.2
        %v4807 = vmul.f32 %v4775, 0.2
        %v4808 = vmul.f32 %v4776, 0.2
        %v4809 = vmul.f32 %v4777, 0.2
        %v4810 = vmul.f32 %v4778, 0.2
        %v4811 = vmul.f32 %v4779, 0.2
        %v4812 = vmul.f32 %v4780, 0.2
        %v4813 = vmul.f32 %v4781, 0.2
        %v4814 = vmul.f32 %v4782, 0.2
        %v4815 = vmul.f32 %v4783, 0.2
        %v4816 = vmul.f32 %v4784, 0.2
        %v4817 = vmul.f32 %v4785, 0.2
        %v4818 = vmul.f32 %v4786, 0.2
        %v4819 = vmul.f32 %v4787, 0.2
        %v4820 = vmul.f32 %v4788, 0.2
        %v4821 = vmul.f32 %v4789, 0.2
        %v4822 = vmax.f32 %v4758, %v4790
        %v4823 = vmax.f32 %v4759, %v4791
        %v4824 = vmax.f32 %v4760, %v4792
        %v4825 = vmax.f32 %v4761, %v4793
        %v4826 = vmax.f32 %v4762, %v4794
        %v4827 = vmax.f32 %v4763, %v4795
        %v4828 = vmax.f32 %v4764, %v4796
        %v4829 = vmax.f32 %v4765, %v4797
        %v4830 = vmax.f32 %v4766, %v4798
        %v4831 = vmax.f32 %v4767, %v4799
        %v4832 = vmax.f32 %v4768, %v4800
        %v4833 = vmax.f32 %v4769, %v4801
        %v4834 = vmax.f32 %v4770, %v4802
        %v4835 = vmax.f32 %v4771, %v4803
        %v4836 = vmax.f32 %v4772, %v4804
        %v4837 = vmax.f32 %v4773, %v4805
        %v4838 = vmax.f32 %v4774, %v4806
        %v4839 = vmax.f32 %v4775, %v4807
        %v4840 = vmax.f32 %v4776, %v4808
        %v4841 = vmax.f32 %v4777, %v4809
        %v4842 = vmax.f32 %v4778, %v4810
        %v4843 = vmax.f32 %v4779, %v4811
        %v4844 = vmax.f32 %v4780, %v4812
        %v4845 = vmax.f32 %v4781, %v4813
        %v4846 = vmax.f32 %v4782, %v4814
        %v4847 = vmax.f32 %v4783, %v4815
        %v4848 = vmax.f32 %v4784, %v4816
        %v4849 = vmax.f32 %v4785, %v4817
        %v4850 = vmax.f32 %v4786, %v4818
        %v4851 = vmax.f32 %v4787, %v4819
        %v4852 = vmax.f32 %v4788, %v4820
        %v4853 = vmax.f32 %v4789, %v4821
        %v4854 = vld [vmem:[%s4 + $0x2] sm:$0x1]
        %v4855 = vlaneseq
        %v4856 = vshrl.u32 %v4855, 7
        %v4857 = vsub.s32 0, %v4856
        %v4858 = vrot.slane %v4854, %v4857
        %v4859 = vmul.f32 %v4822, %v4858
        %v4860 = vmul.f32 %v4823, %v4858
        %v4861 = vmul.f32 %v4824, %v4858
        %v4862 = vmul.f32 %v4825, %v4858
        %v4863 = vmul.f32 %v4826, %v4858
        %v4864 = vmul.f32 %v4827, %v4858
        %v4865 = vmul.f32 %v4828, %v4858
        %v4866 = vmul.f32 %v4829, %v4858
        %v4867 = vmul.f32 %v4830, %v4858
        %v4868 = vmul.f32 %v4831, %v4858
        %v4869 = vmul.f32 %v4832, %v4858
        %v4870 = vmul.f32 %v4833, %v4858
        %v4871 = vmul.f32 %v4834, %v4858
        %v4872 = vmul.f32 %v4835, %v4858
        %v4873 = vmul.f32 %v4836, %v4858
        %v4874 = vmul.f32 %v4837, %v4858
        %v4875 = vmul.f32 %v4838, %v4858
        %v4876 = vmul.f32 %v4839, %v4858
        %v4877 = vmul.f32 %v4840, %v4858
        %v4878 = vmul.f32 %v4841, %v4858
        %v4879 = vmul.f32 %v4842, %v4858
        %v4880 = vmul.f32 %v4843, %v4858
        %v4881 = vmul.f32 %v4844, %v4858
        %v4882 = vmul.f32 %v4845, %v4858
        %v4883 = vmul.f32 %v4846, %v4858
        %v4884 = vmul.f32 %v4847, %v4858
        %v4885 = vmul.f32 %v4848, %v4858
        %v4886 = vmul.f32 %v4849, %v4858
        %v4887 = vmul.f32 %v4850, %v4858
        %v4888 = vmul.f32 %v4851, %v4858
        %v4889 = vmul.f32 %v4852, %v4858
        %v4890 = vmul.f32 %v4853, %v4858
        %v4891 = vld [vmem:[%s4 + $0x3] sm:$0x1]
        %v4892 = vlaneseq
        %v4893 = vshrl.u32 %v4892, 7
        %v4894 = vsub.s32 0, %v4893
        %v4895 = vrot.slane %v4891, %v4894
        %v4896 = vadd.f32 %v4859, %v4895
        %v4897 = vadd.f32 %v4860, %v4895
        %v4898 = vadd.f32 %v4861, %v4895
        %v4899 = vadd.f32 %v4862, %v4895
        %v4900 = vadd.f32 %v4863, %v4895
        %v4901 = vadd.f32 %v4864, %v4895
        %v4902 = vadd.f32 %v4865, %v4895
        %v4903 = vadd.f32 %v4866, %v4895
        %v4904 = vadd.f32 %v4867, %v4895
        %v4905 = vadd.f32 %v4868, %v4895
        %v4906 = vadd.f32 %v4869, %v4895
        %v4907 = vadd.f32 %v4870, %v4895
        %v4908 = vadd.f32 %v4871, %v4895
        %v4909 = vadd.f32 %v4872, %v4895
        %v4910 = vadd.f32 %v4873, %v4895
        %v4911 = vadd.f32 %v4874, %v4895
        %v4912 = vadd.f32 %v4875, %v4895
        %v4913 = vadd.f32 %v4876, %v4895
        %v4914 = vadd.f32 %v4877, %v4895
        %v4915 = vadd.f32 %v4878, %v4895
        %v4916 = vadd.f32 %v4879, %v4895
        %v4917 = vadd.f32 %v4880, %v4895
        %v4918 = vadd.f32 %v4881, %v4895
        %v4919 = vadd.f32 %v4882, %v4895
        %v4920 = vadd.f32 %v4883, %v4895
        %v4921 = vadd.f32 %v4884, %v4895
        %v4922 = vadd.f32 %v4885, %v4895
        %v4923 = vadd.f32 %v4886, %v4895
        %v4924 = vadd.f32 %v4887, %v4895
        %v4925 = vadd.f32 %v4888, %v4895
        %v4926 = vadd.f32 %v4889, %v4895
        %v4927 = vadd.f32 %v4890, %v4895
        %v4928 = vld [vmem:[%s3] sm:$0xff]
        %v4929 = vld [vmem:[%s3 + $0x8] sm:$0xff]
        %v4930 = vld [vmem:[%s3 + $0x10] sm:$0xff]
        %v4931 = vld [vmem:[%s3 + $0x18] sm:$0xff]
        %v4932 = vld [vmem:[%s3 + $0x20] sm:$0xff]
        %v4933 = vld [vmem:[%s3 + $0x28] sm:$0xff]
        %v4934 = vld [vmem:[%s3 + $0x30] sm:$0xff]
        %v4935 = vld [vmem:[%s3 + $0x38] sm:$0xff]
        %v4937 = vsel %vm1299, %v4896, 0
        %v4940 = vsel %vm1299, %v4897, 0
        %v4943 = vsel %vm1299, %v4898, 0
        %v4946 = vsel %vm1299, %v4899, 0
        %v4949 = vsel %vm1299, %v4900, 0
        %v4952 = vsel %vm1299, %v4901, 0
        %v4955 = vsel %vm1299, %v4902, 0
        %v4958 = vsel %vm1299, %v4903, 0
        %v4961 = vsel %vm1299, %v4904, 0
        %v4964 = vsel %vm1299, %v4905, 0
        %v4967 = vsel %vm1299, %v4906, 0
        %v4970 = vsel %vm1299, %v4907, 0
        %v4973 = vsel %vm1299, %v4908, 0
        %v4976 = vsel %vm1299, %v4909, 0
        %v4979 = vsel %vm1299, %v4910, 0
        %v4982 = vsel %vm1299, %v4911, 0
        %v4985 = vsel %vm1299, %v4912, 0
        %v4988 = vsel %vm1299, %v4913, 0
        %v4991 = vsel %vm1299, %v4914, 0
        %v4994 = vsel %vm1299, %v4915, 0
        %v4997 = vsel %vm1299, %v4916, 0
        %v5000 = vsel %vm1299, %v4917, 0
        %v5003 = vsel %vm1299, %v4918, 0
        %v5006 = vsel %vm1299, %v4919, 0
        %v5009 = vsel %vm1299, %v4920, 0
        %v5012 = vsel %vm1299, %v4921, 0
        %v5015 = vsel %vm1299, %v4922, 0
        %v5018 = vsel %vm1299, %v4923, 0
        %v5021 = vsel %vm1299, %v4924, 0
        %v5024 = vsel %vm1299, %v4925, 0
        %v5027 = vsel %vm1299, %v4926, 0
        %v5030 = vsel %vm1299, %v4927, 0
        %5032 = vmatprep.subr.mxu0 0.0
        %5033 = vmatpush1.msra.mxu0 %v4928
        %5034 = vmatprep.subr.mxu0 0.0
        %5035 = vmatpush1.msra.mxu0 %v4929
        %5036 = vmatprep.subr.mxu0 0.0
        %5037 = vmatpush1.msra.mxu0 %v4930
        %5038 = vmatprep.subr.mxu0 0.0
        %5039 = vmatpush1.msra.mxu0 %v4931
        %5040 = vmatprep.subr.mxu0 0.0
        %5041 = vmatpush1.msra.mxu0 %v4932
        %5042 = vmatprep.subr.mxu0 0.0
        %5043 = vmatpush1.msra.mxu0 %v4933
        %5044 = vmatprep.subr.mxu0 0.0
        %5045 = vmatpush1.msra.mxu0 %v4934
        %5046 = vmatprep.subr.mxu0 0.0
        %5047 = vmatpush1.msra.mxu0 %v4935
        %5048 = vmatprep.subr.mxu0 0.0
        %5049 = vmatpush1.msra.mxu0 0.0
        %5050 = vmatprep.subr.mxu0 0.0
        %5051 = vmatpush1.msra.mxu0 0.0
        %5052 = vmatprep.subr.mxu0 0.0
        %5053 = vmatpush1.msra.mxu0 0.0
        %5054 = vmatprep.subr.mxu0 0.0
        %5055 = vmatpush1.msra.mxu0 0.0
        %5056 = vmatprep.subr.mxu0 0.0
        %5057 = vmatpush1.msra.mxu0 0.0
        %5058 = vmatprep.subr.mxu0 0.0
        %5059 = vmatpush1.msra.mxu0 0.0
        %5060 = vmatprep.subr.mxu0 0.0
        %5061 = vmatpush1.msra.mxu0 0.0
        %5062 = vmatprep.subr.mxu0 0.0
        %5063 = vmatpush1.msra.mxu0 0.0
        %5064 = vmatprep.subr.mxu0 0.0
        %5065 = vmatpush1.msra.mxu0 0.0
        %5066 = vmatprep.subr.mxu0 0.0
        %5067 = vmatpush1.msra.mxu0 0.0
        %5068 = vmatprep.subr.mxu0 0.0
        %5069 = vmatpush1.msra.mxu0 0.0
        %5070 = vmatprep.subr.mxu0 0.0
        %5071 = vmatpush1.msra.mxu0 0.0
        %5072 = vmatprep.subr.mxu0 0.0
        %5073 = vmatpush1.msra.mxu0 0.0
        %5074 = vmatprep.subr.mxu0 0.0
        %5075 = vmatpush1.msra.mxu0 0.0
        %5076 = vmatprep.subr.mxu0 0.0
        %5077 = vmatpush1.msra.mxu0 0.0
        %5078 = vmatprep.subr.mxu0 0.0
        %5079 = vmatpush1.msra.mxu0 0.0
        %5080 = vmatprep.subr.mxu0 0.0
        %5081 = vmatpush1.msra.mxu0 0.0
        %5082 = vmatprep.subr.mxu0 0.0
        %5083 = vmatpush1.msra.mxu0 0.0
        %5084 = vmatprep.subr.mxu0 0.0
        %5085 = vmatpush1.msra.mxu0 0.0
        %5086 = vmatprep.subr.mxu0 0.0
        %5087 = vmatpush1.msra.mxu0 0.0
        %5088 = vmatprep.subr.mxu0 0.0
        %5089 = vmatpush1.msra.mxu0 0.0
        %5090 = vmatprep.subr.mxu0 0.0
        %5091 = vmatpush1.msra.mxu0 0.0
        %5092 = vmatprep.subr.mxu0 0.0
        %5093 = vmatpush1.msra.mxu0 0.0
        %5094 = vmatprep.subr.mxu0 0.0
        %5095 = vmatpush1.msra.mxu0 0.0
        %5096 = vmatprep.mubr.f32.mxu0 0.0
        %5097 = vmatmul.mubr.f32.gmra.mrb[0].mxu0 %v4937
        %v5098 = vpop.f32.mrb[0].mxu0
        %v5099 = vadd.f32 0.0, %v5098
        %v5100 = vpop.f32.mrb[0].mxu0
        %5101 = vmatprep.mubr.f32.mxu0 0.0
        %5102 = vmatmul.mubr.f32.gmra.mrb[0].mxu0 %v4940
        %v5103 = vpop.f32.mrb[0].mxu0
        %v5104 = vadd.f32 0.0, %v5103
        %v5105 = vpop.f32.mrb[0].mxu0
        %5106 = vmatprep.mubr.f32.mxu0 0.0
        %5107 = vmatmul.mubr.f32.gmra.mrb[0].mxu0 %v4943
        %v5108 = vpop.f32.mrb[0].mxu0
        %v5109 = vadd.f32 0.0, %v5108
        %v5110 = vpop.f32.mrb[0].mxu0
        %5111 = vmatprep.mubr.f32.mxu0 0.0
        %5112 = vmatmul.mubr.f32.gmra.mrb[0].mxu0 %v4946
        %v5113 = vpop.f32.mrb[0].mxu0
        %v5114 = vadd.f32 0.0, %v5113
        %v5115 = vpop.f32.mrb[0].mxu0
        %5116 = vmatprep.mubr.f32.mxu0 0.0
        %5117 = vmatmul.mubr.f32.gmra.mrb[0].mxu0 %v4949
        %v5118 = vpop.f32.mrb[0].mxu0
        %v5119 = vadd.f32 0.0, %v5118
        %v5120 = vpop.f32.mrb[0].mxu0
        %5121 = vmatprep.mubr.f32.mxu0 0.0
        %5122 = vmatmul.mubr.f32.gmra.mrb[0].mxu0 %v4952
        %v5123 = vpop.f32.mrb[0].mxu0
        %v5124 = vadd.f32 0.0, %v5123
        %v5125 = vpop.f32.mrb[0].mxu0
        %5126 = vmatprep.mubr.f32.mxu0 0.0
        %5127 = vmatmul.mubr.f32.gmra.mrb[0].mxu0 %v4955
        %v5128 = vpop.f32.mrb[0].mxu0
        %v5129 = vadd.f32 0.0, %v5128
        %v5130 = vpop.f32.mrb[0].mxu0
        %5131 = vmatprep.mubr.f32.mxu0 0.0
        %5132 = vmatmul.mubr.f32.gmra.mrb[0].mxu0 %v4958
        %v5133 = vpop.f32.mrb[0].mxu0
        %v5134 = vadd.f32 0.0, %v5133
        %v5135 = vpop.f32.mrb[0].mxu0
        %5136 = vmatprep.mubr.f32.mxu0 0.0
        %5137 = vmatmul.mubr.f32.gmra.mrb[0].mxu0 %v4961
        %v5138 = vpop.f32.mrb[0].mxu0
        %v5139 = vadd.f32 0.0, %v5138
        %v5140 = vpop.f32.mrb[0].mxu0
        %5141 = vmatprep.mubr.f32.mxu0 0.0
        %5142 = vmatmul.mubr.f32.gmra.mrb[0].mxu0 %v4964
        %v5143 = vpop.f32.mrb[0].mxu0
        %v5144 = vadd.f32 0.0, %v5143
        %v5145 = vpop.f32.mrb[0].mxu0
        %5146 = vmatprep.mubr.f32.mxu0 0.0
        %5147 = vmatmul.mubr.f32.gmra.mrb[0].mxu0 %v4967
        %v5148 = vpop.f32.mrb[0].mxu0
        %v5149 = vadd.f32 0.0, %v5148
        %v5150 = vpop.f32.mrb[0].mxu0
        %5151 = vmatprep.mubr.f32.mxu0 0.0
        %5152 = vmatmul.mubr.f32.gmra.mrb[0].mxu0 %v4970
        %v5153 = vpop.f32.mrb[0].mxu0
        %v5154 = vadd.f32 0.0, %v5153
        %v5155 = vpop.f32.mrb[0].mxu0
        %5156 = vmatprep.mubr.f32.mxu0 0.0
        %5157 = vmatmul.mubr.f32.gmra.mrb[0].mxu0 %v4973
        %v5158 = vpop.f32.mrb[0].mxu0
        %v5159 = vadd.f32 0.0, %v5158
        %v5160 = vpop.f32.mrb[0].mxu0
        %5161 = vmatprep.mubr.f32.mxu0 0.0
        %5162 = vmatmul.mubr.f32.gmra.mrb[0].mxu0 %v4976
        %v5163 = vpop.f32.mrb[0].mxu0
        %v5164 = vadd.f32 0.0, %v5163
        %v5165 = vpop.f32.mrb[0].mxu0
        %5166 = vmatprep.mubr.f32.mxu0 0.0
        %5167 = vmatmul.mubr.f32.gmra.mrb[0].mxu0 %v4979
        %v5168 = vpop.f32.mrb[0].mxu0
        %v5169 = vadd.f32 0.0, %v5168
        %v5170 = vpop.f32.mrb[0].mxu0
        %5171 = vmatprep.mubr.f32.mxu0 0.0
        %5172 = vmatmul.mubr.f32.gmra.mrb[0].mxu0 %v4982
        %v5173 = vpop.f32.mrb[0].mxu0
        %v5174 = vadd.f32 0.0, %v5173
        %v5175 = vpop.f32.mrb[0].mxu0
        %5176 = vmatprep.mubr.f32.mxu0 0.0
        %5177 = vmatmul.mubr.f32.gmra.mrb[0].mxu0 %v4985
        %v5178 = vpop.f32.mrb[0].mxu0
        %v5179 = vadd.f32 0.0, %v5178
        %v5180 = vpop.f32.mrb[0].mxu0
        %5181 = vmatprep.mubr.f32.mxu0 0.0
        %5182 = vmatmul.mubr.f32.gmra.mrb[0].mxu0 %v4988
        %v5183 = vpop.f32.mrb[0].mxu0
        %v5184 = vadd.f32 0.0, %v5183
        %v5185 = vpop.f32.mrb[0].mxu0
        %5186 = vmatprep.mubr.f32.mxu0 0.0
        %5187 = vmatmul.mubr.f32.gmra.mrb[0].mxu0 %v4991
        %v5188 = vpop.f32.mrb[0].mxu0
        %v5189 = vadd.f32 0.0, %v5188
        %v5190 = vpop.f32.mrb[0].mxu0
        %5191 = vmatprep.mubr.f32.mxu0 0.0
        %5192 = vmatmul.mubr.f32.gmra.mrb[0].mxu0 %v4994
        %v5193 = vpop.f32.mrb[0].mxu0
        %v5194 = vadd.f32 0.0, %v5193
        %v5195 = vpop.f32.mrb[0].mxu0
        %5196 = vmatprep.mubr.f32.mxu0 0.0
        %5197 = vmatmul.mubr.f32.gmra.mrb[0].mxu0 %v4997
        %v5198 = vpop.f32.mrb[0].mxu0
        %v5199 = vadd.f32 0.0, %v5198
        %v5200 = vpop.f32.mrb[0].mxu0
        %5201 = vmatprep.mubr.f32.mxu0 0.0
        %5202 = vmatmul.mubr.f32.gmra.mrb[0].mxu0 %v5000
        %v5203 = vpop.f32.mrb[0].mxu0
        %v5204 = vadd.f32 0.0, %v5203
        %v5205 = vpop.f32.mrb[0].mxu0
        %5206 = vmatprep.mubr.f32.mxu0 0.0
        %5207 = vmatmul.mubr.f32.gmra.mrb[0].mxu0 %v5003
        %v5208 = vpop.f32.mrb[0].mxu0
        %v5209 = vadd.f32 0.0, %v5208
        %v5210 = vpop.f32.mrb[0].mxu0
        %5211 = vmatprep.mubr.f32.mxu0 0.0
        %5212 = vmatmul.mubr.f32.gmra.mrb[0].mxu0 %v5006
        %v5213 = vpop.f32.mrb[0].mxu0
        %v5214 = vadd.f32 0.0, %v5213
        %v5215 = vpop.f32.mrb[0].mxu0
        %5216 = vmatprep.mubr.f32.mxu0 0.0
        %5217 = vmatmul.mubr.f32.gmra.mrb[0].mxu0 %v5009
        %v5218 = vpop.f32.mrb[0].mxu0
        %v5219 = vadd.f32 0.0, %v5218
        %v5220 = vpop.f32.mrb[0].mxu0
        %5221 = vmatprep.mubr.f32.mxu0 0.0
        %5222 = vmatmul.mubr.f32.gmra.mrb[0].mxu0 %v5012
        %v5223 = vpop.f32.mrb[0].mxu0
        %v5224 = vadd.f32 0.0, %v5223
        %v5225 = vpop.f32.mrb[0].mxu0
        %5226 = vmatprep.mubr.f32.mxu0 0.0
        %5227 = vmatmul.mubr.f32.gmra.mrb[0].mxu0 %v5015
        %v5228 = vpop.f32.mrb[0].mxu0
        %v5229 = vadd.f32 0.0, %v5228
        %v5230 = vpop.f32.mrb[0].mxu0
        %5231 = vmatprep.mubr.f32.mxu0 0.0
        %5232 = vmatmul.mubr.f32.gmra.mrb[0].mxu0 %v5018
        %v5233 = vpop.f32.mrb[0].mxu0
        %v5234 = vadd.f32 0.0, %v5233
        %v5235 = vpop.f32.mrb[0].mxu0
        %5236 = vmatprep.mubr.f32.mxu0 0.0
        %5237 = vmatmul.mubr.f32.gmra.mrb[0].mxu0 %v5021
        %v5238 = vpop.f32.mrb[0].mxu0
        %v5239 = vadd.f32 0.0, %v5238
        %v5240 = vpop.f32.mrb[0].mxu0
        %5241 = vmatprep.mubr.f32.mxu0 0.0
        %5242 = vmatmul.mubr.f32.gmra.mrb[0].mxu0 %v5024
        %v5243 = vpop.f32.mrb[0].mxu0
        %v5244 = vadd.f32 0.0, %v5243
        %v5245 = vpop.f32.mrb[0].mxu0
        %5246 = vmatprep.mubr.f32.mxu0 0.0
        %5247 = vmatmul.mubr.f32.gmra.mrb[0].mxu0 %v5027
        %v5248 = vpop.f32.mrb[0].mxu0
        %v5249 = vadd.f32 0.0, %v5248
        %v5250 = vpop.f32.mrb[0].mxu0
        %5251 = vmatprep.mubr.f32.mxu0 0.0
        %5252 = vmatmul.mubr.f32.gmra.mrb[0].mxu0 %v5030
        %v5253 = vpop.f32.mrb[0].mxu0
        %v5254 = vadd.f32 0.0, %v5253
        %v5255 = vpop.f32.mrb[0].mxu0
        %5256 = vdwg.mxu0
        %v5257 = vmul.f32 %v5099, 0.2
        %v5258 = vmul.f32 %v5104, 0.2
        %v5259 = vmul.f32 %v5109, 0.2
        %v5260 = vmul.f32 %v5114, 0.2
        %v5261 = vmul.f32 %v5119, 0.2
        %v5262 = vmul.f32 %v5124, 0.2
        %v5263 = vmul.f32 %v5129, 0.2
        %v5264 = vmul.f32 %v5134, 0.2
        %v5265 = vmul.f32 %v5139, 0.2
        %v5266 = vmul.f32 %v5144, 0.2
        %v5267 = vmul.f32 %v5149, 0.2
        %v5268 = vmul.f32 %v5154, 0.2
        %v5269 = vmul.f32 %v5159, 0.2
        %v5270 = vmul.f32 %v5164, 0.2
        %v5271 = vmul.f32 %v5169, 0.2
        %v5272 = vmul.f32 %v5174, 0.2
        %v5273 = vmul.f32 %v5179, 0.2
        %v5274 = vmul.f32 %v5184, 0.2
        %v5275 = vmul.f32 %v5189, 0.2
        %v5276 = vmul.f32 %v5194, 0.2
        %v5277 = vmul.f32 %v5199, 0.2
        %v5278 = vmul.f32 %v5204, 0.2
        %v5279 = vmul.f32 %v5209, 0.2
        %v5280 = vmul.f32 %v5214, 0.2
        %v5281 = vmul.f32 %v5219, 0.2
        %v5282 = vmul.f32 %v5224, 0.2
        %v5283 = vmul.f32 %v5229, 0.2
        %v5284 = vmul.f32 %v5234, 0.2
        %v5285 = vmul.f32 %v5239, 0.2
        %v5286 = vmul.f32 %v5244, 0.2
        %v5287 = vmul.f32 %v5249, 0.2
        %v5288 = vmul.f32 %v5254, 0.2
        %v5289 = vmax.f32 %v5099, %v5257
        %v5290 = vmax.f32 %v5104, %v5258
        %v5291 = vmax.f32 %v5109, %v5259
        %v5292 = vmax.f32 %v5114, %v5260
        %v5293 = vmax.f32 %v5119, %v5261
        %v5294 = vmax.f32 %v5124, %v5262
        %v5295 = vmax.f32 %v5129, %v5263
        %v5296 = vmax.f32 %v5134, %v5264
        %v5297 = vmax.f32 %v5139, %v5265
        %v5298 = vmax.f32 %v5144, %v5266
        %v5299 = vmax.f32 %v5149, %v5267
        %v5300 = vmax.f32 %v5154, %v5268
        %v5301 = vmax.f32 %v5159, %v5269
        %v5302 = vmax.f32 %v5164, %v5270
        %v5303 = vmax.f32 %v5169, %v5271
        %v5304 = vmax.f32 %v5174, %v5272
        %v5305 = vmax.f32 %v5179, %v5273
        %v5306 = vmax.f32 %v5184, %v5274
        %v5307 = vmax.f32 %v5189, %v5275
        %v5308 = vmax.f32 %v5194, %v5276
        %v5309 = vmax.f32 %v5199, %v5277
        %v5310 = vmax.f32 %v5204, %v5278
        %v5311 = vmax.f32 %v5209, %v5279
        %v5312 = vmax.f32 %v5214, %v5280
        %v5313 = vmax.f32 %v5219, %v5281
        %v5314 = vmax.f32 %v5224, %v5282
        %v5315 = vmax.f32 %v5229, %v5283
        %v5316 = vmax.f32 %v5234, %v5284
        %v5317 = vmax.f32 %v5239, %v5285
        %v5318 = vmax.f32 %v5244, %v5286
        %v5319 = vmax.f32 %v5249, %v5287
        %v5320 = vmax.f32 %v5254, %v5288
        %vm5321 = vcmask 15360
        %v5322 = vsel %vm5321, %v5289, 0.0
        %v5323 = vsel %vm5321, %v5291, 0.0
        %v5324 = vadd.f32 %v5322, %v5323
        %v5325 = vsel %vm5321, %v5293, 0.0
        %v5326 = vadd.f32 %v5324, %v5325
        %v5327 = vsel %vm5321, %v5295, 0.0
        %v5328 = vadd.f32 %v5326, %v5327
        %v5329 = vsel %vm5321, %v5297, 0.0
        %v5330 = vadd.f32 %v5328, %v5329
        %v5331 = vsel %vm5321, %v5299, 0.0
        %v5332 = vadd.f32 %v5330, %v5331
        %v5333 = vsel %vm5321, %v5301, 0.0
        %v5334 = vadd.f32 %v5332, %v5333
        %v5335 = vsel %vm5321, %v5303, 0.0
        %v5336 = vadd.f32 %v5334, %v5335
        %v5337 = vsel %vm5321, %v5305, 0.0
        %v5338 = vadd.f32 %v5336, %v5337
        %v5339 = vsel %vm5321, %v5307, 0.0
        %v5340 = vadd.f32 %v5338, %v5339
        %v5341 = vsel %vm5321, %v5309, 0.0
        %v5342 = vadd.f32 %v5340, %v5341
        %v5343 = vsel %vm5321, %v5311, 0.0
        %v5344 = vadd.f32 %v5342, %v5343
        %v5345 = vsel %vm5321, %v5313, 0.0
        %v5346 = vadd.f32 %v5344, %v5345
        %v5347 = vsel %vm5321, %v5315, 0.0
        %v5348 = vadd.f32 %v5346, %v5347
        %v5349 = vsel %vm5321, %v5317, 0.0
        %v5350 = vadd.f32 %v5348, %v5349
        %v5351 = vsel %vm5321, %v5319, 0.0
        %v5352 = vadd.f32 %v5350, %v5351
        %v5353 = vsel %vm5321, %v5290, 0.0
        %v5354 = vsel %vm5321, %v5292, 0.0
        %v5355 = vadd.f32 %v5353, %v5354
        %v5356 = vsel %vm5321, %v5294, 0.0
        %v5357 = vadd.f32 %v5355, %v5356
        %v5358 = vsel %vm5321, %v5296, 0.0
        %v5359 = vadd.f32 %v5357, %v5358
        %v5360 = vsel %vm5321, %v5298, 0.0
        %v5361 = vadd.f32 %v5359, %v5360
        %v5362 = vsel %vm5321, %v5300, 0.0
        %v5363 = vadd.f32 %v5361, %v5362
        %v5364 = vsel %vm5321, %v5302, 0.0
        %v5365 = vadd.f32 %v5363, %v5364
        %v5366 = vsel %vm5321, %v5304, 0.0
        %v5367 = vadd.f32 %v5365, %v5366
        %v5368 = vsel %vm5321, %v5306, 0.0
        %v5369 = vadd.f32 %v5367, %v5368
        %v5370 = vsel %vm5321, %v5308, 0.0
        %v5371 = vadd.f32 %v5369, %v5370
        %v5372 = vsel %vm5321, %v5310, 0.0
        %v5373 = vadd.f32 %v5371, %v5372
        %v5374 = vsel %vm5321, %v5312, 0.0
        %v5375 = vadd.f32 %v5373, %v5374
        %v5376 = vsel %vm5321, %v5314, 0.0
        %v5377 = vadd.f32 %v5375, %v5376
        %v5378 = vsel %vm5321, %v5316, 0.0
        %v5379 = vadd.f32 %v5377, %v5378
        %v5380 = vsel %vm5321, %v5318, 0.0
        %v5381 = vadd.f32 %v5379, %v5380
        %v5382 = vsel %vm5321, %v5320, 0.0
        %v5383 = vadd.f32 %v5381, %v5382
        %v5384 = vrcp.pop 16.0
        %v5385 = vmul.f32 %v5352, %v5384
        %v5386 = vmul.f32 %v5383, %v5384
        %v5387 = vadd.f32 %v5322, %v5353
        %v5388 = vrot.slane %v5387, 4
        %v5389 = vadd.f32 %v5387, %v5388
        %v5390 = vrot.slane %v5389, 2
        %v5391 = vadd.f32 %v5389, %v5390
        %v5392 = vrot.slane %v5391, 1
        %v5393 = vadd.f32 %v5391, %v5392
        %v5394 = vadd.f32 %v5323, %v5354
        %v5395 = vrot.slane %v5394, 4
        %v5396 = vadd.f32 %v5394, %v5395
        %v5397 = vrot.slane %v5396, 2
        %v5398 = vadd.f32 %v5396, %v5397
        %v5399 = vrot.slane %v5398, 1
        %v5400 = vadd.f32 %v5398, %v5399
        %v5401 = vadd.f32 %v5325, %v5356
        %v5402 = vrot.slane %v5401, 4
        %v5403 = vadd.f32 %v5401, %v5402
        %v5404 = vrot.slane %v5403, 2
        %v5405 = vadd.f32 %v5403, %v5404
        %v5406 = vrot.slane %v5405, 1
        %v5407 = vadd.f32 %v5405, %v5406
        %v5408 = vadd.f32 %v5327, %v5358
        %v5409 = vrot.slane %v5408, 4
        %v5410 = vadd.f32 %v5408, %v5409
        %v5411 = vrot.slane %v5410, 2
        %v5412 = vadd.f32 %v5410, %v5411
        %v5413 = vrot.slane %v5412, 1
        %v5414 = vadd.f32 %v5412, %v5413
        %v5415 = vadd.f32 %v5329, %v5360
        %v5416 = vrot.slane %v5415, 4
        %v5417 = vadd.f32 %v5415, %v5416
        %v5418 = vrot.slane %v5417, 2
        %v5419 = vadd.f32 %v5417, %v5418
        %v5420 = vrot.slane %v5419, 1
        %v5421 = vadd.f32 %v5419, %v5420
        %v5422 = vadd.f32 %v5331, %v5362
        %v5423 = vrot.slane %v5422, 4
        %v5424 = vadd.f32 %v5422, %v5423
        %v5425 = vrot.slane %v5424, 2
        %v5426 = vadd.f32 %v5424, %v5425
        %v5427 = vrot.slane %v5426, 1
        %v5428 = vadd.f32 %v5426, %v5427
        %v5429 = vadd.f32 %v5333, %v5364
        %v5430 = vrot.slane %v5429, 4
        %v5431 = vadd.f32 %v5429, %v5430
        %v5432 = vrot.slane %v5431, 2
        %v5433 = vadd.f32 %v5431, %v5432
        %v5434 = vrot.slane %v5433, 1
        %v5435 = vadd.f32 %v5433, %v5434
        %v5436 = vadd.f32 %v5335, %v5366
        %v5437 = vrot.slane %v5436, 4
        %v5438 = vadd.f32 %v5436, %v5437
        %v5439 = vrot.slane %v5438, 2
        %v5440 = vadd.f32 %v5438, %v5439
        %v5441 = vrot.slane %v5440, 1
        %v5442 = vadd.f32 %v5440, %v5441
        %v5443 = vadd.f32 %v5337, %v5368
        %v5444 = vrot.slane %v5443, 4
        %v5445 = vadd.f32 %v5443, %v5444
        %v5446 = vrot.slane %v5445, 2
        %v5447 = vadd.f32 %v5445, %v5446
        %v5448 = vrot.slane %v5447, 1
        %v5449 = vadd.f32 %v5447, %v5448
        %v5450 = vadd.f32 %v5339, %v5370
        %v5451 = vrot.slane %v5450, 4
        %v5452 = vadd.f32 %v5450, %v5451
        %v5453 = vrot.slane %v5452, 2
        %v5454 = vadd.f32 %v5452, %v5453
        %v5455 = vrot.slane %v5454, 1
        %v5456 = vadd.f32 %v5454, %v5455
        %v5457 = vadd.f32 %v5341, %v5372
        %v5458 = vrot.slane %v5457, 4
        %v5459 = vadd.f32 %v5457, %v5458
        %v5460 = vrot.slane %v5459, 2
        %v5461 = vadd.f32 %v5459, %v5460
        %v5462 = vrot.slane %v5461, 1
        %v5463 = vadd.f32 %v5461, %v5462
        %v5464 = vadd.f32 %v5343, %v5374
        %v5465 = vrot.slane %v5464, 4
        %v5466 = vadd.f32 %v5464, %v5465
        %v5467 = vrot.slane %v5466, 2
        %v5468 = vadd.f32 %v5466, %v5467
        %v5469 = vrot.slane %v5468, 1
        %v5470 = vadd.f32 %v5468, %v5469
        %v5471 = vadd.f32 %v5345, %v5376
        %v5472 = vrot.slane %v5471, 4
        %v5473 = vadd.f32 %v5471, %v5472
        %v5474 = vrot.slane %v5473, 2
        %v5475 = vadd.f32 %v5473, %v5474
        %v5476 = vrot.slane %v5475, 1
        %v5477 = vadd.f32 %v5475, %v5476
        %v5478 = vadd.f32 %v5347, %v5378
        %v5479 = vrot.slane %v5478, 4
        %v5480 = vadd.f32 %v5478, %v5479
        %v5481 = vrot.slane %v5480, 2
        %v5482 = vadd.f32 %v5480, %v5481
        %v5483 = vrot.slane %v5482, 1
        %v5484 = vadd.f32 %v5482, %v5483
        %v5485 = vadd.f32 %v5349, %v5380
        %v5486 = vrot.slane %v5485, 4
        %v5487 = vadd.f32 %v5485, %v5486
        %v5488 = vrot.slane %v5487, 2
        %v5489 = vadd.f32 %v5487, %v5488
        %v5490 = vrot.slane %v5489, 1
        %v5491 = vadd.f32 %v5489, %v5490
        %v5492 = vadd.f32 %v5351, %v5382
        %v5493 = vrot.slane %v5492, 4
        %v5494 = vadd.f32 %v5492, %v5493
        %v5495 = vrot.slane %v5494, 2
        %v5496 = vadd.f32 %v5494, %v5495
        %v5497 = vrot.slane %v5496, 1
        %v5498 = vadd.f32 %v5496, %v5497
        %v5499 = vmul.f32 %v5393, %v5384
        %v5500 = vmul.f32 %v5400, %v5384
        %v5501 = vmul.f32 %v5407, %v5384
        %v5502 = vmul.f32 %v5414, %v5384
        %v5503 = vmul.f32 %v5421, %v5384
        %v5504 = vmul.f32 %v5428, %v5384
        %v5505 = vmul.f32 %v5435, %v5384
        %v5506 = vmul.f32 %v5442, %v5384
        %v5507 = vmul.f32 %v5449, %v5384
        %v5508 = vmul.f32 %v5456, %v5384
        %v5509 = vmul.f32 %v5463, %v5384
        %v5510 = vmul.f32 %v5470, %v5384
        %v5511 = vmul.f32 %v5477, %v5384
        %v5512 = vmul.f32 %v5484, %v5384
        %v5513 = vmul.f32 %v5491, %v5384
        %v5514 = vmul.f32 %v5498, %v5384
        %s5515 = sld [smem:[#allocation3]]
        %v5516 = vstv %s5515
        %v5517 = vmul.f32 %v5516, %v5385
        %v5518 = vmul.f32 %v5516, %v5386
        %s5519 = sld [smem:[#allocation3 + $0x1]]
        %v5520 = vstv %s5519
        %v5521 = vadd.f32 %v5517, %v5520
        %v5522 = vadd.f32 %v5518, %v5520
        %v5523 = vxor.u32 %v5521, 2147483648
        %v5524 = vxor.u32 %v5522, 2147483648
        %v5525 = vmul.f32 %v5523, 1.442695
        %v5526 = vpow.pop %v5525
        %v5527 = vmul.f32 %v5524, 1.442695
        %v5528 = vpow.pop %v5527
        %v5529 = vadd.f32 %v5526, 1.0
        %v5530 = vadd.f32 %v5528, 1.0
        %v5531 = vrcp.pop %v5529
        %v5532 = vmul.f32 1.0, %v5531
        %v5533 = vrcp.pop %v5530
        %v5534 = vmul.f32 1.0, %v5533
        %s5535 = sld [smem:[#allocation3 + $0x2]]
        %v5536 = vstv %s5535
        %v5537 = vmul.f32 %v5536, %v5499
        %v5538 = vmul.f32 %v5536, %v5500
        %v5539 = vmul.f32 %v5536, %v5501
        %v5540 = vmul.f32 %v5536, %v5502
        %v5541 = vmul.f32 %v5536, %v5503
        %v5542 = vmul.f32 %v5536, %v5504
        %v5543 = vmul.f32 %v5536, %v5505
        %v5544 = vmul.f32 %v5536, %v5506
        %v5545 = vmul.f32 %v5536, %v5507
        %v5546 = vmul.f32 %v5536, %v5508
        %v5547 = vmul.f32 %v5536, %v5509
        %v5548 = vmul.f32 %v5536, %v5510
        %v5549 = vmul.f32 %v5536, %v5511
        %v5550 = vmul.f32 %v5536, %v5512
        %v5551 = vmul.f32 %v5536, %v5513
        %v5552 = vmul.f32 %v5536, %v5514
        %s5553 = sld [smem:[#allocation3 + $0x3]]
        %v5554 = vstv %s5553
        %v5555 = vadd.f32 %v5537, %v5554
        %v5556 = vadd.f32 %v5538, %v5554
        %v5557 = vadd.f32 %v5539, %v5554
        %v5558 = vadd.f32 %v5540, %v5554
        %v5559 = vadd.f32 %v5541, %v5554
        %v5560 = vadd.f32 %v5542, %v5554
        %v5561 = vadd.f32 %v5543, %v5554
        %v5562 = vadd.f32 %v5544, %v5554
        %v5563 = vadd.f32 %v5545, %v5554
        %v5564 = vadd.f32 %v5546, %v5554
        %v5565 = vadd.f32 %v5547, %v5554
        %v5566 = vadd.f32 %v5548, %v5554
        %v5567 = vadd.f32 %v5549, %v5554
        %v5568 = vadd.f32 %v5550, %v5554
        %v5569 = vadd.f32 %v5551, %v5554
        %v5570 = vadd.f32 %v5552, %v5554
        %v5571 = vxor.u32 %v5555, 2147483648
        %v5572 = vxor.u32 %v5556, 2147483648
        %v5573 = vxor.u32 %v5557, 2147483648
        %v5574 = vxor.u32 %v5558, 2147483648
        %v5575 = vxor.u32 %v5559, 2147483648
        %v5576 = vxor.u32 %v5560, 2147483648
        %v5577 = vxor.u32 %v5561, 2147483648
        %v5578 = vxor.u32 %v5562, 2147483648
        %v5579 = vxor.u32 %v5563, 2147483648
        %v5580 = vxor.u32 %v5564, 2147483648
        %v5581 = vxor.u32 %v5565, 2147483648
        %v5582 = vxor.u32 %v5566, 2147483648
        %v5583 = vxor.u32 %v5567, 2147483648
        %v5584 = vxor.u32 %v5568, 2147483648
        %v5585 = vxor.u32 %v5569, 2147483648
        %v5586 = vxor.u32 %v5570, 2147483648
        %v5587 = vmul.f32 %v5571, 1.442695
        %v5588 = vpow.pop %v5587
        %v5589 = vmul.f32 %v5572, 1.442695
        %v5590 = vpow.pop %v5589
        %v5591 = vmul.f32 %v5573, 1.442695
        %v5592 = vpow.pop %v5591
        %v5593 = vmul.f32 %v5574, 1.442695
        %v5594 = vpow.pop %v5593
        %v5595 = vmul.f32 %v5575, 1.442695
        %v5596 = vpow.pop %v5595
        %v5597 = vmul.f32 %v5576, 1.442695
        %v5598 = vpow.pop %v5597
        %v5599 = vmul.f32 %v5577, 1.442695
        %v5600 = vpow.pop %v5599
        %v5601 = vmul.f32 %v5578, 1.442695
        %v5602 = vpow.pop %v5601
        %v5603 = vmul.f32 %v5579, 1.442695
        %v5604 = vpow.pop %v5603
        %v5605 = vmul.f32 %v5580, 1.442695
        %v5606 = vpow.pop %v5605
        %v5607 = vmul.f32 %v5581, 1.442695
        %v5608 = vpow.pop %v5607
        %v5609 = vmul.f32 %v5582, 1.442695
        %v5610 = vpow.pop %v5609
        %v5611 = vmul.f32 %v5583, 1.442695
        %v5612 = vpow.pop %v5611
        %v5613 = vmul.f32 %v5584, 1.442695
        %v5614 = vpow.pop %v5613
        %v5615 = vmul.f32 %v5585, 1.442695
        %v5616 = vpow.pop %v5615
        %v5617 = vmul.f32 %v5586, 1.442695
        %v5618 = vpow.pop %v5617
        %v5619 = vadd.f32 %v5588, 1.0
        %v5620 = vadd.f32 %v5590, 1.0
        %v5621 = vadd.f32 %v5592, 1.0
        %v5622 = vadd.f32 %v5594, 1.0
        %v5623 = vadd.f32 %v5596, 1.0
        %v5624 = vadd.f32 %v5598, 1.0
        %v5625 = vadd.f32 %v5600, 1.0
        %v5626 = vadd.f32 %v5602, 1.0
        %v5627 = vadd.f32 %v5604, 1.0
        %v5628 = vadd.f32 %v5606, 1.0
        %v5629 = vadd.f32 %v5608, 1.0
        %v5630 = vadd.f32 %v5610, 1.0
        %v5631 = vadd.f32 %v5612, 1.0
        %v5632 = vadd.f32 %v5614, 1.0
        %v5633 = vadd.f32 %v5616, 1.0
        %v5634 = vadd.f32 %v5618, 1.0
        %v5635 = vrcp.pop %v5619
        %v5636 = vmul.f32 1.0, %v5635
        %v5637 = vrcp.pop %v5620
        %v5638 = vmul.f32 1.0, %v5637
        %v5639 = vrcp.pop %v5621
        %v5640 = vmul.f32 1.0, %v5639
        %v5641 = vrcp.pop %v5622
        %v5642 = vmul.f32 1.0, %v5641
        %v5643 = vrcp.pop %v5623
        %v5644 = vmul.f32 1.0, %v5643
        %v5645 = vrcp.pop %v5624
        %v5646 = vmul.f32 1.0, %v5645
        %v5647 = vrcp.pop %v5625
        %v5648 = vmul.f32 1.0, %v5647
        %v5649 = vrcp.pop %v5626
        %v5650 = vmul.f32 1.0, %v5649
        %v5651 = vrcp.pop %v5627
        %v5652 = vmul.f32 1.0, %v5651
        %v5653 = vrcp.pop %v5628
        %v5654 = vmul.f32 1.0, %v5653
        %v5655 = vrcp.pop %v5629
        %v5656 = vmul.f32 1.0, %v5655
        %v5657 = vrcp.pop %v5630
        %v5658 = vmul.f32 1.0, %v5657
        %v5659 = vrcp.pop %v5631
        %v5660 = vmul.f32 1.0, %v5659
        %v5661 = vrcp.pop %v5632
        %v5662 = vmul.f32 1.0, %v5661
        %v5663 = vrcp.pop %v5633
        %v5664 = vmul.f32 1.0, %v5663
        %v5665 = vrcp.pop %v5634
        %v5666 = vmul.f32 1.0, %v5665
        %v5667 = vld [vmem:[%s4 + $0x4] sm:$0x1]
        %v5668 = vld [vmem:[%s4 + $0x5] sm:$0x1]
        %v5669 = vld [vmem:[%s4 + $0x6] sm:$0x1]
        %s5670 = sld [smem:[#allocation3 + $0x4]]
        %v5671 = vlaneseq
        %v5672 = vshrl.u32 %v5671, 7
        %v5673 = vsub.s32 0, %v5672
        %v5674 = vrot.slane %v5667, %v5673
        %5676 = vset.pattern.permute.xlu0 0
        %5677 = vperm.xlu0 %5676, %v5532
        %v5678 = vpop.permute.xlu0 %5677
        %5681 = vset.pattern.permute.xlu0 0
        %5682 = vperm.xlu0 %5681, %v5534
        %v5683 = vpop.permute.xlu0 %5682
        %v5685 = vmul.f32 %v5674, %v5678
        %v5686 = vmul.f32 %v5674, %v5683
        %v5687 = vstv %s5670
        %v5688 = vadd.f32 %v5687, %v5685
        %v5689 = vadd.f32 %v5687, %v5686
        %5691 = vset.pattern.permute.xlu0 1
        %5692 = vperm.xlu0 %5691, %v5636
        %v5693 = vpop.permute.xlu0 %5692
        %5696 = vset.pattern.permute.xlu0 1
        %5697 = vperm.xlu0 %5696, %v5638
        %v5698 = vpop.permute.xlu0 %5697
        %5701 = vset.pattern.permute.xlu0 1
        %5702 = vperm.xlu0 %5701, %v5640
        %v5703 = vpop.permute.xlu0 %5702
        %5706 = vset.pattern.permute.xlu0 1
        %5707 = vperm.xlu0 %5706, %v5642
        %v5708 = vpop.permute.xlu0 %5707
        %5711 = vset.pattern.permute.xlu0 1
        %5712 = vperm.xlu0 %5711, %v5644
        %v5713 = vpop.permute.xlu0 %5712
        %5716 = vset.pattern.permute.xlu0 1
        %5717 = vperm.xlu0 %5716, %v5646
        %v5718 = vpop.permute.xlu0 %5717
        %5721 = vset.pattern.permute.xlu0 1
        %5722 = vperm.xlu0 %5721, %v5648
        %v5723 = vpop.permute.xlu0 %5722
        %5726 = vset.pattern.permute.xlu0 1
        %5727 = vperm.xlu0 %5726, %v5650
        %v5728 = vpop.permute.xlu0 %5727
        %5731 = vset.pattern.permute.xlu0 1
        %5732 = vperm.xlu0 %5731, %v5652
        %v5733 = vpop.permute.xlu0 %5732
        %5736 = vset.pattern.permute.xlu0 1
        %5737 = vperm.xlu0 %5736, %v5654
        %v5738 = vpop.permute.xlu0 %5737
        %5741 = vset.pattern.permute.xlu0 1
        %5742 = vperm.xlu0 %5741, %v5656
        %v5743 = vpop.permute.xlu0 %5742
        %5746 = vset.pattern.permute.xlu0 1
        %5747 = vperm.xlu0 %5746, %v5658
        %v5748 = vpop.permute.xlu0 %5747
        %5751 = vset.pattern.permute.xlu0 1
        %5752 = vperm.xlu0 %5751, %v5660
        %v5753 = vpop.permute.xlu0 %5752
        %5756 = vset.pattern.permute.xlu0 1
        %5757 = vperm.xlu0 %5756, %v5662
        %v5758 = vpop.permute.xlu0 %5757
        %5761 = vset.pattern.permute.xlu0 1
        %5762 = vperm.xlu0 %5761, %v5664
        %v5763 = vpop.permute.xlu0 %5762
        %5766 = vset.pattern.permute.xlu0 1
        %5767 = vperm.xlu0 %5766, %v5666
        %v5768 = vpop.permute.xlu0 %5767
        %v5770 = vmul.f32 %v5668, %v5693
        %v5771 = vmul.f32 %v5668, %v5698
        %v5772 = vmul.f32 %v5668, %v5703
        %v5773 = vmul.f32 %v5668, %v5708
        %v5774 = vmul.f32 %v5668, %v5713
        %v5775 = vmul.f32 %v5668, %v5718
        %v5776 = vmul.f32 %v5668, %v5723
        %v5777 = vmul.f32 %v5668, %v5728
        %v5778 = vmul.f32 %v5668, %v5733
        %v5779 = vmul.f32 %v5668, %v5738
        %v5780 = vmul.f32 %v5668, %v5743
        %v5781 = vmul.f32 %v5668, %v5748
        %v5782 = vmul.f32 %v5668, %v5753
        %v5783 = vmul.f32 %v5668, %v5758
        %v5784 = vmul.f32 %v5668, %v5763
        %v5785 = vmul.f32 %v5668, %v5768
        %v5786 = vlaneseq
        %v5787 = vshrl.u32 %v5786, 7
        %v5788 = vsub.s32 0, %v5787
        %v5789 = vrot.slane %v5770, %v5788
        %v5790 = vlaneseq
        %v5791 = vshrl.u32 %v5790, 7
        %v5792 = vsub.s32 0, %v5791
        %v5793 = vrot.slane %v5771, %v5792
        %v5794 = vlaneseq
        %v5795 = vshrl.u32 %v5794, 7
        %v5796 = vsub.s32 0, %v5795
        %v5797 = vrot.slane %v5772, %v5796
        %v5798 = vlaneseq
        %v5799 = vshrl.u32 %v5798, 7
        %v5800 = vsub.s32 0, %v5799
        %v5801 = vrot.slane %v5773, %v5800
        %v5802 = vlaneseq
        %v5803 = vshrl.u32 %v5802, 7
        %v5804 = vsub.s32 0, %v5803
        %v5805 = vrot.slane %v5774, %v5804
        %v5806 = vlaneseq
        %v5807 = vshrl.u32 %v5806, 7
        %v5808 = vsub.s32 0, %v5807
        %v5809 = vrot.slane %v5775, %v5808
        %v5810 = vlaneseq
        %v5811 = vshrl.u32 %v5810, 7
        %v5812 = vsub.s32 0, %v5811
        %v5813 = vrot.slane %v5776, %v5812
        %v5814 = vlaneseq
        %v5815 = vshrl.u32 %v5814, 7
        %v5816 = vsub.s32 0, %v5815
        %v5817 = vrot.slane %v5777, %v5816
        %v5818 = vlaneseq
        %v5819 = vshrl.u32 %v5818, 7
        %v5820 = vsub.s32 0, %v5819
        %v5821 = vrot.slane %v5778, %v5820
        %v5822 = vlaneseq
        %v5823 = vshrl.u32 %v5822, 7
        %v5824 = vsub.s32 0, %v5823
        %v5825 = vrot.slane %v5779, %v5824
        %v5826 = vlaneseq
        %v5827 = vshrl.u32 %v5826, 7
        %v5828 = vsub.s32 0, %v5827
        %v5829 = vrot.slane %v5780, %v5828
        %v5830 = vlaneseq
        %v5831 = vshrl.u32 %v5830, 7
        %v5832 = vsub.s32 0, %v5831
        %v5833 = vrot.slane %v5781, %v5832
        %v5834 = vlaneseq
        %v5835 = vshrl.u32 %v5834, 7
        %v5836 = vsub.s32 0, %v5835
        %v5837 = vrot.slane %v5782, %v5836
        %v5838 = vlaneseq
        %v5839 = vshrl.u32 %v5838, 7
        %v5840 = vsub.s32 0, %v5839
        %v5841 = vrot.slane %v5783, %v5840
        %v5842 = vlaneseq
        %v5843 = vshrl.u32 %v5842, 7
        %v5844 = vsub.s32 0, %v5843
        %v5845 = vrot.slane %v5784, %v5844
        %v5846 = vlaneseq
        %v5847 = vshrl.u32 %v5846, 7
        %v5848 = vsub.s32 0, %v5847
        %v5849 = vrot.slane %v5785, %v5848
        %v5850 = vadd.f32 %v5688, %v5789
        %v5851 = vadd.f32 %v5689, %v5789
        %v5852 = vadd.f32 %v5688, %v5793
        %v5853 = vadd.f32 %v5689, %v5793
        %v5854 = vadd.f32 %v5688, %v5797
        %v5855 = vadd.f32 %v5689, %v5797
        %v5856 = vadd.f32 %v5688, %v5801
        %v5857 = vadd.f32 %v5689, %v5801
        %v5858 = vadd.f32 %v5688, %v5805
        %v5859 = vadd.f32 %v5689, %v5805
        %v5860 = vadd.f32 %v5688, %v5809
        %v5861 = vadd.f32 %v5689, %v5809
        %v5862 = vadd.f32 %v5688, %v5813
        %v5863 = vadd.f32 %v5689, %v5813
        %v5864 = vadd.f32 %v5688, %v5817
        %v5865 = vadd.f32 %v5689, %v5817
        %v5866 = vadd.f32 %v5688, %v5821
        %v5867 = vadd.f32 %v5689, %v5821
        %v5868 = vadd.f32 %v5688, %v5825
        %v5869 = vadd.f32 %v5689, %v5825
        %v5870 = vadd.f32 %v5688, %v5829
        %v5871 = vadd.f32 %v5689, %v5829
        %v5872 = vadd.f32 %v5688, %v5833
        %v5873 = vadd.f32 %v5689, %v5833
        %v5874 = vadd.f32 %v5688, %v5837
        %v5875 = vadd.f32 %v5689, %v5837
        %v5876 = vadd.f32 %v5688, %v5841
        %v5877 = vadd.f32 %v5689, %v5841
        %v5878 = vadd.f32 %v5688, %v5845
        %v5879 = vadd.f32 %v5689, %v5845
        %v5880 = vadd.f32 %v5688, %v5849
        %v5881 = vadd.f32 %v5689, %v5849
        %v5882 = vmul.f32 %v4896, %v5850
        %v5883 = vmul.f32 %v4897, %v5851
        %v5884 = vmul.f32 %v4898, %v5852
        %v5885 = vmul.f32 %v4899, %v5853
        %v5886 = vmul.f32 %v4900, %v5854
        %v5887 = vmul.f32 %v4901, %v5855
        %v5888 = vmul.f32 %v4902, %v5856
        %v5889 = vmul.f32 %v4903, %v5857
        %v5890 = vmul.f32 %v4904, %v5858
        %v5891 = vmul.f32 %v4905, %v5859
        %v5892 = vmul.f32 %v4906, %v5860
        %v5893 = vmul.f32 %v4907, %v5861
        %v5894 = vmul.f32 %v4908, %v5862
        %v5895 = vmul.f32 %v4909, %v5863
        %v5896 = vmul.f32 %v4910, %v5864
        %v5897 = vmul.f32 %v4911, %v5865
        %v5898 = vmul.f32 %v4912, %v5866
        %v5899 = vmul.f32 %v4913, %v5867
        %v5900 = vmul.f32 %v4914, %v5868
        %v5901 = vmul.f32 %v4915, %v5869
        %v5902 = vmul.f32 %v4916, %v5870
        %v5903 = vmul.f32 %v4917, %v5871
        %v5904 = vmul.f32 %v4918, %v5872
        %v5905 = vmul.f32 %v4919, %v5873
        %v5906 = vmul.f32 %v4920, %v5874
        %v5907 = vmul.f32 %v4921, %v5875
        %v5908 = vmul.f32 %v4922, %v5876
        %v5909 = vmul.f32 %v4923, %v5877
        %v5910 = vmul.f32 %v4924, %v5878
        %v5911 = vmul.f32 %v4925, %v5879
        %v5912 = vmul.f32 %v4926, %v5880
        %v5913 = vmul.f32 %v4927, %v5881
        %v5914 = vlaneseq
        %v5915 = vshrl.u32 %v5914, 7
        %v5916 = vsub.s32 0, %v5915
        %v5917 = vrot.slane %v5669, %v5916
        %v5918 = vadd.f32 %v5882, %v5917
        %v5919 = vadd.f32 %v5883, %v5917
        %v5920 = vadd.f32 %v5884, %v5917
        %v5921 = vadd.f32 %v5885, %v5917
        %v5922 = vadd.f32 %v5886, %v5917
        %v5923 = vadd.f32 %v5887, %v5917
        %v5924 = vadd.f32 %v5888, %v5917
        %v5925 = vadd.f32 %v5889, %v5917
        %v5926 = vadd.f32 %v5890, %v5917
        %v5927 = vadd.f32 %v5891, %v5917
        %v5928 = vadd.f32 %v5892, %v5917
        %v5929 = vadd.f32 %v5893, %v5917
        %v5930 = vadd.f32 %v5894, %v5917
        %v5931 = vadd.f32 %v5895, %v5917
        %v5932 = vadd.f32 %v5896, %v5917
        %v5933 = vadd.f32 %v5897, %v5917
        %v5934 = vadd.f32 %v5898, %v5917
        %v5935 = vadd.f32 %v5899, %v5917
        %v5936 = vadd.f32 %v5900, %v5917
        %v5937 = vadd.f32 %v5901, %v5917
        %v5938 = vadd.f32 %v5902, %v5917
        %v5939 = vadd.f32 %v5903, %v5917
        %v5940 = vadd.f32 %v5904, %v5917
        %v5941 = vadd.f32 %v5905, %v5917
        %v5942 = vadd.f32 %v5906, %v5917
        %v5943 = vadd.f32 %v5907, %v5917
        %v5944 = vadd.f32 %v5908, %v5917
        %v5945 = vadd.f32 %v5909, %v5917
        %v5946 = vadd.f32 %v5910, %v5917
        %v5947 = vadd.f32 %v5911, %v5917
        %v5948 = vadd.f32 %v5912, %v5917
        %v5949 = vadd.f32 %v5913, %v5917
        %v5950 = vmul.f32 %v5918, 0.2
        %v5951 = vmul.f32 %v5919, 0.2
        %v5952 = vmul.f32 %v5920, 0.2
        %v5953 = vmul.f32 %v5921, 0.2
        %v5954 = vmul.f32 %v5922, 0.2
        %v5955 = vmul.f32 %v5923, 0.2
        %v5956 = vmul.f32 %v5924, 0.2
        %v5957 = vmul.f32 %v5925, 0.2
        %v5958 = vmul.f32 %v5926, 0.2
        %v5959 = vmul.f32 %v5927, 0.2
        %v5960 = vmul.f32 %v5928, 0.2
        %v5961 = vmul.f32 %v5929, 0.2
        %v5962 = vmul.f32 %v5930, 0.2
        %v5963 = vmul.f32 %v5931, 0.2
        %v5964 = vmul.f32 %v5932, 0.2
        %v5965 = vmul.f32 %v5933, 0.2
        %v5966 = vmul.f32 %v5934, 0.2
        %v5967 = vmul.f32 %v5935, 0.2
        %v5968 = vmul.f32 %v5936, 0.2
        %v5969 = vmul.f32 %v5937, 0.2
        %v5970 = vmul.f32 %v5938, 0.2
        %v5971 = vmul.f32 %v5939, 0.2
        %v5972 = vmul.f32 %v5940, 0.2
        %v5973 = vmul.f32 %v5941, 0.2
        %v5974 = vmul.f32 %v5942, 0.2
        %v5975 = vmul.f32 %v5943, 0.2
        %v5976 = vmul.f32 %v5944, 0.2
        %v5977 = vmul.f32 %v5945, 0.2
        %v5978 = vmul.f32 %v5946, 0.2
        %v5979 = vmul.f32 %v5947, 0.2
        %v5980 = vmul.f32 %v5948, 0.2
        %v5981 = vmul.f32 %v5949, 0.2
        %v5982 = vmax.f32 %v5918, %v5950
        %v5983 = vmax.f32 %v5919, %v5951
        %v5984 = vmax.f32 %v5920, %v5952
        %v5985 = vmax.f32 %v5921, %v5953
        %v5986 = vmax.f32 %v5922, %v5954
        %v5987 = vmax.f32 %v5923, %v5955
        %v5988 = vmax.f32 %v5924, %v5956
        %v5989 = vmax.f32 %v5925, %v5957
        %v5990 = vmax.f32 %v5926, %v5958
        %v5991 = vmax.f32 %v5927, %v5959
        %v5992 = vmax.f32 %v5928, %v5960
        %v5993 = vmax.f32 %v5929, %v5961
        %v5994 = vmax.f32 %v5930, %v5962
        %v5995 = vmax.f32 %v5931, %v5963
        %v5996 = vmax.f32 %v5932, %v5964
        %v5997 = vmax.f32 %v5933, %v5965
        %v5998 = vmax.f32 %v5934, %v5966
        %v5999 = vmax.f32 %v5935, %v5967
        %v6000 = vmax.f32 %v5936, %v5968
        %v6001 = vmax.f32 %v5937, %v5969
        %v6002 = vmax.f32 %v5938, %v5970
        %v6003 = vmax.f32 %v5939, %v5971
        %v6004 = vmax.f32 %v5940, %v5972
        %v6005 = vmax.f32 %v5941, %v5973
        %v6006 = vmax.f32 %v5942, %v5974
        %v6007 = vmax.f32 %v5943, %v5975
        %v6008 = vmax.f32 %v5944, %v5976
        %v6009 = vmax.f32 %v5945, %v5977
        %v6010 = vmax.f32 %v5946, %v5978
        %v6011 = vmax.f32 %v5947, %v5979
        %v6012 = vmax.f32 %v5948, %v5980
        %v6013 = vmax.f32 %v5949, %v5981
        %v6014 = vadd.f32 %v5982, %v5984
        %v6015 = vadd.f32 %v5983, %v5985
        %v6016 = vadd.f32 %v5986, %v5988
        %v6017 = vadd.f32 %v5987, %v5989
        %v6018 = vadd.f32 %v5990, %v5992
        %v6019 = vadd.f32 %v5991, %v5993
        %v6020 = vadd.f32 %v5994, %v5996
        %v6021 = vadd.f32 %v5995, %v5997
        %v6022 = vadd.f32 %v5998, %v6000
        %v6023 = vadd.f32 %v5999, %v6001
        %v6024 = vadd.f32 %v6002, %v6004
        %v6025 = vadd.f32 %v6003, %v6005
        %v6026 = vadd.f32 %v6006, %v6008
        %v6027 = vadd.f32 %v6007, %v6009
        %v6028 = vadd.f32 %v6010, %v6012
        %v6029 = vadd.f32 %v6011, %v6013
        %v6030 = vrot.slane %v6014, 1
        %v6031 = vrot.slane %v6015, 1
        %v6032 = vrot.slane %v6016, 1
        %v6033 = vrot.slane %v6017, 1
        %v6034 = vrot.slane %v6018, 1
        %v6035 = vrot.slane %v6019, 1
        %v6036 = vrot.slane %v6020, 1
        %v6037 = vrot.slane %v6021, 1
        %v6038 = vrot.slane %v6022, 1
        %v6039 = vrot.slane %v6023, 1
        %v6040 = vrot.slane %v6024, 1
        %v6041 = vrot.slane %v6025, 1
        %v6042 = vrot.slane %v6026, 1
        %v6043 = vrot.slane %v6027, 1
        %v6044 = vrot.slane %v6028, 1
        %v6045 = vrot.slane %v6029, 1
        %v6046 = vsel %vm1774, %v6044, %v6045
        %v6047 = vsel %vm1774, %v6043, %v6044
        %v6048 = vsel %vm1774, %v6042, %v6043
        %v6049 = vsel %vm1774, %v6041, %v6042
        %v6050 = vsel %vm1774, %v6040, %v6041
        %v6051 = vsel %vm1774, %v6039, %v6040
        %v6052 = vsel %vm1774, %v6038, %v6039
        %v6053 = vsel %vm1774, %v6037, %v6038
        %v6054 = vsel %vm1774, %v6036, %v6037
        %v6055 = vsel %vm1774, %v6035, %v6036
        %v6056 = vsel %vm1774, %v6034, %v6035
        %v6057 = vsel %vm1774, %v6033, %v6034
        %v6058 = vsel %vm1774, %v6032, %v6033
        %v6059 = vsel %vm1774, %v6031, %v6032
        %v6060 = vsel %vm1774, %v6030, %v6031
        %v6061 = vsel %vm1774, %v6045, %v6030
        %v6062 = vadd.f32 %v6014, %v6060
        %v6063 = vadd.f32 %v6015, %v6059
        %v6064 = vadd.f32 %v6016, %v6058
        %v6065 = vadd.f32 %v6017, %v6057
        %v6066 = vadd.f32 %v6018, %v6056
        %v6067 = vadd.f32 %v6019, %v6055
        %v6068 = vadd.f32 %v6020, %v6054
        %v6069 = vadd.f32 %v6021, %v6053
        %v6070 = vadd.f32 %v6022, %v6052
        %v6071 = vadd.f32 %v6023, %v6051
        %v6072 = vadd.f32 %v6024, %v6050
        %v6073 = vadd.f32 %v6025, %v6049
        %v6074 = vadd.f32 %v6026, %v6048
        %v6075 = vadd.f32 %v6027, %v6047
        %v6076 = vadd.f32 %v6028, %v6046
        %v6077 = vadd.f32 %v6029, %v6061
        %v6078 = vmul.f32 %v6062, 0.25
        %v6079 = vmul.f32 %v6063, 0.25
        %v6080 = vmul.f32 %v6064, 0.25
        %v6081 = vmul.f32 %v6065, 0.25
        %v6082 = vmul.f32 %v6066, 0.25
        %v6083 = vmul.f32 %v6067, 0.25
        %v6084 = vmul.f32 %v6068, 0.25
        %v6085 = vmul.f32 %v6069, 0.25
        %v6086 = vmul.f32 %v6070, 0.25
        %v6087 = vmul.f32 %v6071, 0.25
        %v6088 = vmul.f32 %v6072, 0.25
        %v6089 = vmul.f32 %v6073, 0.25
        %v6090 = vmul.f32 %v6074, 0.25
        %v6091 = vmul.f32 %v6075, 0.25
        %v6092 = vmul.f32 %v6076, 0.25
        %v6093 = vmul.f32 %v6077, 0.25
        %6094 = vst.msk [vmem:[#allocation2] sm:$0xff] %vm1299, %v6078
        %6095 = vst.msk [vmem:[#allocation2 + $0x8] sm:$0xff] %vm1299, %v6079
        %6096 = vst.msk [vmem:[#allocation2 + $0x10] sm:$0xff] %vm1299, %v6080
        %6097 = vst.msk [vmem:[#allocation2 + $0x18] sm:$0xff] %vm1299, %v6081
        %6098 = vst.msk [vmem:[#allocation2 + $0x20] sm:$0xff] %vm1299, %v6082
        %6099 = vst.msk [vmem:[#allocation2 + $0x28] sm:$0xff] %vm1299, %v6083
        %6100 = vst.msk [vmem:[#allocation2 + $0x30] sm:$0xff] %vm1299, %v6084
        %6101 = vst.msk [vmem:[#allocation2 + $0x38] sm:$0xff] %vm1299, %v6085
        %6102 = vst.msk [vmem:[#allocation2 + $0x40] sm:$0xff] %vm1299, %v6086
        %6103 = vst.msk [vmem:[#allocation2 + $0x48] sm:$0xff] %vm1299, %v6087
        %6104 = vst.msk [vmem:[#allocation2 + $0x50] sm:$0xff] %vm1299, %v6088
        %6105 = vst.msk [vmem:[#allocation2 + $0x58] sm:$0xff] %vm1299, %v6089
        %6106 = vst.msk [vmem:[#allocation2 + $0x60] sm:$0xff] %vm1299, %v6090
        %6107 = vst.msk [vmem:[#allocation2 + $0x68] sm:$0xff] %vm1299, %v6091
        %6108 = vst.msk [vmem:[#allocation2 + $0x70] sm:$0xff] %vm1299, %v6092
        %6109 = vst.msk [vmem:[#allocation2 + $0x78] sm:$0xff] %vm1299, %v6093
        %v6110 = vld [vmem:[#allocation2] ss:$2 sm:$0xff]
        %s6111 = scalar_lea.vmem [#allocation2], 16
        %v6112 = vld [vmem:[%s6111] ss:$2 sm:$0xff]
        %s6113 = scalar_lea.vmem [#allocation2], 32
        %v6114 = vld [vmem:[%s6113] ss:$2 sm:$0xff]
        %s6115 = scalar_lea.vmem [#allocation2], 48
        %v6116 = vld [vmem:[%s6115] ss:$2 sm:$0xff]
        %s6117 = scalar_lea.vmem [#allocation2], 64
        %v6118 = vld [vmem:[%s6117] ss:$2 sm:$0xff]
        %s6119 = scalar_lea.vmem [#allocation2], 80
        %v6120 = vld [vmem:[%s6119] ss:$2 sm:$0xff]
        %s6121 = scalar_lea.vmem [#allocation2], 96
        %v6122 = vld [vmem:[%s6121] ss:$2 sm:$0xff]
        %s6123 = scalar_lea.vmem [#allocation2], 112
        %v6124 = vld [vmem:[%s6123] ss:$2 sm:$0xff]
        %6125 = vst.msk [vmem:[%s285] sm:$0xff] %vm1299, %v6110
        %6126 = vst.msk [vmem:[%s285 + $0x8] sm:$0xff] %vm1299, %v6112
        %6127 = vst.msk [vmem:[%s285 + $0x10] sm:$0xff] %vm1299, %v6114
        %6128 = vst.msk [vmem:[%s285 + $0x18] sm:$0xff] %vm1299, %v6116
        %6129 = vst.msk [vmem:[%s285 + $0x20] sm:$0xff] %vm1299, %v6118
        %6130 = vst.msk [vmem:[%s285 + $0x28] sm:$0xff] %vm1299, %v6120
        %6131 = vst.msk [vmem:[%s285 + $0x30] sm:$0xff] %vm1299, %v6122
        %6132 = vst.msk [vmem:[%s285 + $0x38] sm:$0xff] %vm1299, %v6124
        %s6133 = sand.u32 %s182, 1
        %s6134 = scalar_lea.sflag [#allocation4], %s6133
        %s6135 = sand.u32 %s182, 1
        %s6136 = smul.addr %s6135, 64
        %s6137 = scalar_lea.vmem [#allocation6], %s6136
        // Predicated region
        $region53: #{tfblock_forward.1} parent=47 // pred_check
          %p6138 = pneg %p192
        $region54: #{tfblock_forward.1} parent=47 // pred_check_branch
          %6140 = sbr.rel (%p6138) target = $region56
        $region55: #{tfblock_forward.1} parent=47 // pred_region
          %s6142 = ssub.s32 1024, 1024
          %6143 = vsyncadd %s6134, %s6142
          %s6144 = smul.addr %s22, 8
          %s6145 = smul.addr %s6144, 128
          %s6146 = scalar_lea.hbm %s7, %s6145
          %s6147 = sshll.u32 %s6137, 4
          %s6148 = int_to_ptr.vmem [resolvable:$true] %s6147
          %6153 = dma.vmem_to_hbm [thread:$0]  %s6148, 1024, %s6146, %s6134, 128, 128, 8
        $region56: #{tfblock_forward.1} parent=47 // pred_fallthru
          _
      $region48: #{tfblock_forward.1} parent=5 // pred_fallthru
        _
      %p6154 = scmp.le.s32.totalorder 2, %s17
      // Predicated region
      $region57: #{tfblock_forward.1} parent=5 // pred_check
        %p6155 = pneg %p6154
      $region58: #{tfblock_forward.1} parent=5 // pred_check_branch
        %6157 = sbr.rel (%p6155) target = $region60
      $region59: #{tfblock_forward.1} parent=5 // pred_region
        %s6158 = ssub.s32 %s17, 2
        // Predicated region
        $region61: #{tfblock_forward.1} parent=59 // pred_check
          %p6159 = pneg %p198
        $region62: #{tfblock_forward.1} parent=59 // pred_check_branch
          %6161 = sbr.rel (%p6159) target = $region64
        $region63: #{tfblock_forward.1} parent=59 // pred_region
          %s6162 = sand.u32 %s183, 1
          %s6163 = scalar_lea.sflag [#allocation4], %s6162
          %s6164 = sand.u32 %s183, 1
          %s6165 = smul.addr %s6164, 64
          %s6166 = scalar_lea.vmem [#allocation6], %s6165
          %6167 = dma.done %s6163, 1024
        $region64: #{tfblock_forward.1} parent=59 // pred_fallthru
          _
      $region60: #{tfblock_forward.1} parent=5 // pred_fallthru
        _
    $region6: #{tfblock_forward.1} parent=1 // loop_footer
      %s21 = sadd.s32 1, %s17
    $region7: #{tfblock_forward.1} parent=1 // loop_footer_branch
      %16 = sbr.rel target = $region3
    $region8: #{tfblock_forward.1} parent=1 // loop_exit
      _
    %6168 = vsyncpa [#allocation4], 1
    %s6169 = scalar_lea.sflag [#allocation4], 1
    %6170 = vsyncpa %s6169, 1
    %6171 = vsyncpa [#allocation5], 1
    %s6172 = scalar_lea.sflag [#allocation5], 1
    %6173 = vsyncpa %s6172, 1

</llo_original>
